<compile_context>
chip_gen: v6e
topology: v6e:2x2x1
jax: 0.10.0
libtpu: 0.0.40
codegen_flags: <defaults>
</compile_context>

<pallas_src>
import math

import jax
import jax.numpy as jnp
from jax.experimental import pallas as pl
from jax.experimental.pallas import tpu as pltpu  # noqa: F401  (not needed at this size)

# ---- model hyper-parameters (small, BERT-like) ------------------------------
B = 2          # batch
S = 8          # sequence length
H = 32         # hidden size
NUM_HEADS = 4
HEAD_DIM = H // NUM_HEADS
FFN = 64       # intermediate size
VOCAB = 100
N_LAYERS = 2
EPS = 1e-12    # BERT LayerNorm eps
NEG_INF = -1e9


def _gelu(x):
    # tanh approximation of GELU (EUP-friendly). HF BERT default is the exact
    # erf GELU; the difference is ~1e-3 and irrelevant for synthetic weights.
    c = math.sqrt(2.0 / math.pi)
    return 0.5 * x * (1.0 + jnp.tanh(c * (x + 0.044715 * x * x * x)))


def _layernorm(x, g, b):
    mu = jnp.mean(x, axis=-1, keepdims=True)
    var = jnp.mean((x - mu) ** 2, axis=-1, keepdims=True)
    return (x - mu) * jax.lax.rsqrt(var + EPS) * g + b


# ---------------------------------------------------------------------------
# Single fused kernel: embedding LayerNorm -> N encoder layers -> pooler.
# All activations live as (B*S, H) slabs; attention uses a block-diagonal
# additive bias so batches never attend to each other.
# ---------------------------------------------------------------------------
def text_encoder_kernel(emb_ref, bias_ref, hmask_ref, eg_ref, eb_ref,
                        wq_ref, bq_ref, wk_ref, bk_ref, wv_ref, bv_ref,
                        wo_ref, bo_ref, ln1g_ref, ln1b_ref,
                        w1_ref, b1_ref, w2_ref, b2_ref,
                        ln2g_ref, ln2b_ref,
                        wp_ref, bp_ref, out_ref):
    x = _layernorm(emb_ref[...], eg_ref[...], eb_ref[...])    # (B*S, H)
    bias = bias_ref[...]                                      # (B*S, B*S)
    scale = 1.0 / math.sqrt(HEAD_DIM)

    for l in range(N_LAYERS):          # static unroll (all weights VMEM-resident)
        q = jnp.dot(x, wq_ref[l], preferred_element_type=jnp.float32) + bq_ref[l]
        k = jnp.dot(x, wk_ref[l], preferred_element_type=jnp.float32) + bk_ref[l]
        v = jnp.dot(x, wv_ref[l], preferred_element_type=jnp.float32) + bv_ref[l]

        ctx = jnp.zeros_like(x)                               # concat-equivalent acc
        for h in range(NUM_HEADS):     # static; head select via leading-axis mask
            m = hmask_ref[h]                                  # (1, H) 0/1 mask
            s = jnp.dot(q * m, k.T,
                        preferred_element_type=jnp.float32) * scale + bias
            s = s - jnp.max(s, axis=-1, keepdims=True)
            p = jnp.exp(s)
            p = p * pl.reciprocal(jnp.sum(p, axis=-1, keepdims=True), approx=True)
            ctx = ctx + jnp.dot(p, v * m, preferred_element_type=jnp.float32)

        attn = jnp.dot(ctx, wo_ref[l],
                       preferred_element_type=jnp.float32) + bo_ref[l]
        x = _layernorm(x + attn, ln1g_ref[l], ln1b_ref[l])

        f = jnp.dot(x, w1_ref[l], preferred_element_type=jnp.float32) + b1_ref[l]
        f = _gelu(f)
        f = jnp.dot(f, w2_ref[l], preferred_element_type=jnp.float32) + b2_ref[l]
        x = _layernorm(x + f, ln2g_ref[l], ln2b_ref[l])

    # pooler: tanh(cls @ Wp + bp) on the [CLS] row of each batch element.
    wp = wp_ref[...]
    bp = bp_ref[...]
    for b in range(B):
        cls = x[b * S:b * S + 1, :]                           # (1, H) static slice
        pooled = jnp.tanh(jnp.dot(cls, wp,
                                  preferred_element_type=jnp.float32) + bp)
        out_ref[b:b + 1, :] = pooled.astype(out_ref.dtype)


# ---------------------------------------------------------------------------
# Parameter construction (deterministic, synthetic "pretrained" weights).
# Per-layer weights are stacked on a leading layer axis so the fused kernel
# indexes them with free leading-axis reads.
# ---------------------------------------------------------------------------
def init_params(key):
    def nrm(k, shape, scale=0.02):
        return (scale * jax.random.normal(k, shape)).astype(jnp.float32)

    keys = iter(jax.random.split(key, 64))
    params = {
        "word_emb": nrm(next(keys), (VOCAB, H)),
        "pos_emb": nrm(next(keys), (S, H)),
        "tok_emb": nrm(next(keys), (2, H)),
        "emb_ln_g": jnp.ones((1, H), jnp.float32),
        "emb_ln_b": jnp.zeros((1, H), jnp.float32),
        "pool_w": nrm(next(keys), (H, H)),
        "pool_b": jnp.zeros((1, H), jnp.float32),
    }

    wq, wk, wv, wo, w1, w2 = [], [], [], [], [], []
    for _ in range(N_LAYERS):
        wq.append(nrm(next(keys), (H, H)))
        wk.append(nrm(next(keys), (H, H)))
        wv.append(nrm(next(keys), (H, H)))
        wo.append(nrm(next(keys), (H, H)))
        w1.append(nrm(next(keys), (H, FFN)))
        w2.append(nrm(next(keys), (FFN, H)))

    params.update({
        "wq": jnp.stack(wq), "wk": jnp.stack(wk), "wv": jnp.stack(wv),
        "wo": jnp.stack(wo), "w1": jnp.stack(w1), "w2": jnp.stack(w2),
        "bq": jnp.zeros((N_LAYERS, 1, H), jnp.float32),
        "bk": jnp.zeros((N_LAYERS, 1, H), jnp.float32),
        "bv": jnp.zeros((N_LAYERS, 1, H), jnp.float32),
        "bo": jnp.zeros((N_LAYERS, 1, H), jnp.float32),
        "b1": jnp.zeros((N_LAYERS, 1, FFN), jnp.float32),
        "b2": jnp.zeros((N_LAYERS, 1, H), jnp.float32),
        "ln1_g": jnp.ones((N_LAYERS, 1, H), jnp.float32),
        "ln1_b": jnp.zeros((N_LAYERS, 1, H), jnp.float32),
        "ln2_g": jnp.ones((N_LAYERS, 1, H), jnp.float32),
        "ln2_b": jnp.zeros((N_LAYERS, 1, H), jnp.float32),
    })
    return params


# ---------------------------------------------------------------------------
# Forward pass: TextEncoder.forward(text) -> pooler_output
# ---------------------------------------------------------------------------
def text_encoder_forward(params, text):
    input_ids = text["input_ids"]            # (B, S) int32
    attention_mask = text["attention_mask"]  # (B, S) int32
    token_type_ids = text["token_type_ids"]  # (B, S) int32

    # Embedding gathers are glue (plain JAX); everything else is one kernel.
    emb = (params["word_emb"][input_ids]
           + params["pos_emb"][None, :, :]
           + params["tok_emb"][token_type_ids])
    emb2d = emb.reshape(B * S, H)

    # Block-diagonal additive attention bias over the folded batch:
    # 0 where (same batch element AND key not padded), else -1e9.
    keep = attention_mask.astype(jnp.float32).reshape(B * S)       # (BS,)
    row_b = jnp.arange(B * S) // S
    same = (row_b[:, None] == row_b[None, :]).astype(jnp.float32)  # (BS, BS)
    bias2d = (1.0 - same * keep[None, :]) * NEG_INF

    # Per-head 0/1 column selectors, indexed on the leading axis in-kernel.
    cols = jnp.arange(H)
    head_mask = jnp.stack(
        [((cols >= h * HEAD_DIM) & (cols < (h + 1) * HEAD_DIM)).astype(jnp.float32)
         for h in range(NUM_HEADS)], axis=0)[:, None, :]           # (NH, 1, H)

    pooled = pl.pallas_call(
        text_encoder_kernel,
        out_shape=jax.ShapeDtypeStruct((B, H), jnp.float32),
    )(emb2d, bias2d, head_mask,
      params["emb_ln_g"], params["emb_ln_b"],
      params["wq"], params["bq"], params["wk"], params["bk"],
      params["wv"], params["bv"], params["wo"], params["bo"],
      params["ln1_g"], params["ln1_b"],
      params["w1"], params["b1"], params["w2"], params["b2"],
      params["ln2_g"], params["ln2_b"],
      params["pool_w"], params["pool_b"])
    return pooled                            # pooler_output: (B, H)


if __name__ == "__main__":
    key = jax.random.PRNGKey(0)
    k_param, k_ids = jax.random.split(key)

    params = init_params(k_param)

    input_ids = jax.random.randint(k_ids, (B, S), 0, VOCAB, dtype=jnp.int32)
    attention_mask = jnp.ones((B, S), dtype=jnp.int32)
    # make batch element 1 have two padding tokens to exercise masking
    attention_mask = attention_mask.at[1, -2:].set(0)
    token_type_ids = jnp.zeros((B, S), dtype=jnp.int32)

    text = {
        "input_ids": input_ids,
        "attention_mask": attention_mask,
        "token_type_ids": token_type_ids,
    }

    pooled = text_encoder_forward(params, text)
    pooled = jax.block_until_ready(pooled)
    assert pooled.shape == (B, H) and pooled.dtype == jnp.float32
    print("KERNEL_OK")
</pallas_src>

<mosaic_0001>
module attributes {stable_mosaic.version = 11 : i64} {
  func.func @text_encoder_kernel(%arg0: memref<16x32xf32, #tpu.memory_space<vmem>>, %arg1: memref<16x16xf32, #tpu.memory_space<vmem>>, %arg2: memref<4x1x32xf32, #tpu.memory_space<vmem>>, %arg3: memref<1x32xf32, #tpu.memory_space<vmem>>, %arg4: memref<1x32xf32, #tpu.memory_space<vmem>>, %arg5: memref<2x32x32xf32, #tpu.memory_space<vmem>>, %arg6: memref<2x1x32xf32, #tpu.memory_space<vmem>>, %arg7: memref<2x32x32xf32, #tpu.memory_space<vmem>>, %arg8: memref<2x1x32xf32, #tpu.memory_space<vmem>>, %arg9: memref<2x32x32xf32, #tpu.memory_space<vmem>>, %arg10: memref<2x1x32xf32, #tpu.memory_space<vmem>>, %arg11: memref<2x32x32xf32, #tpu.memory_space<vmem>>, %arg12: memref<2x1x32xf32, #tpu.memory_space<vmem>>, %arg13: memref<2x1x32xf32, #tpu.memory_space<vmem>>, %arg14: memref<2x1x32xf32, #tpu.memory_space<vmem>>, %arg15: memref<2x32x64xf32, #tpu.memory_space<vmem>>, %arg16: memref<2x1x64xf32, #tpu.memory_space<vmem>>, %arg17: memref<2x64x32xf32, #tpu.memory_space<vmem>>, %arg18: memref<2x1x32xf32, #tpu.memory_space<vmem>>, %arg19: memref<2x1x32xf32, #tpu.memory_space<vmem>>, %arg20: memref<2x1x32xf32, #tpu.memory_space<vmem>>, %arg21: memref<32x32xf32, #tpu.memory_space<vmem>>, %arg22: memref<1x32xf32, #tpu.memory_space<vmem>>, %arg23: memref<2x32xf32, #tpu.memory_space<vmem>>) attributes {dimension_semantics = [], scalar_prefetch = 0 : i64, scratch_operands = 0 : i64, tpu.core_type = #tpu.core_type<tc>} {
    %c0 = arith.constant 0 : index
    %c0_0 = arith.constant 0 : index
    %0 = vector.load %arg0[%c0, %c0_0] : memref<16x32xf32, #tpu.memory_space<vmem>>, vector<16x32xf32>
    %c0_1 = arith.constant 0 : index
    %c0_2 = arith.constant 0 : index
    %1 = vector.load %arg3[%c0_1, %c0_2] : memref<1x32xf32, #tpu.memory_space<vmem>>, vector<1x32xf32>
    %c0_3 = arith.constant 0 : index
    %c0_4 = arith.constant 0 : index
    %2 = vector.load %arg4[%c0_3, %c0_4] : memref<1x32xf32, #tpu.memory_space<vmem>>, vector<1x32xf32>
    %cst = arith.constant dense<0.000000e+00> : vector<16xf32>
    %3 = vector.multi_reduction <add>, %0, %cst [1] : vector<16x32xf32> to vector<16xf32>
    %4 = vector.shape_cast %3 : vector<16xf32> to vector<16x1xf32>
    %cst_5 = arith.constant 3.200000e+01 : f32
    %5 = vector.broadcast %cst_5 : f32 to vector<16x1xf32>
    %6 = arith.divf %4, %5 : vector<16x1xf32>
    %7 = vector.broadcast %6 : vector<16x1xf32> to vector<16x32xf32>
    %8 = arith.subf %0, %7 : vector<16x32xf32>
    %9 = arith.mulf %8, %8 : vector<16x32xf32>
    %cst_6 = arith.constant dense<0.000000e+00> : vector<16xf32>
    %10 = vector.multi_reduction <add>, %9, %cst_6 [1] : vector<16x32xf32> to vector<16xf32>
    %11 = vector.shape_cast %10 : vector<16xf32> to vector<16x1xf32>
    %cst_7 = arith.constant 3.200000e+01 : f32
    %12 = vector.broadcast %cst_7 : f32 to vector<16x1xf32>
    %13 = arith.divf %11, %12 : vector<16x1xf32>
    %14 = vector.broadcast %6 : vector<16x1xf32> to vector<16x32xf32>
    %15 = arith.subf %0, %14 : vector<16x32xf32>
    %cst_8 = arith.constant 9.99999996E-13 : f32
    %16 = vector.broadcast %cst_8 : f32 to vector<16x1xf32>
    %17 = arith.addf %13, %16 : vector<16x1xf32>
    %18 = math.rsqrt %17 : vector<16x1xf32>
    %19 = vector.broadcast %18 : vector<16x1xf32> to vector<16x32xf32>
    %20 = arith.mulf %15, %19 : vector<16x32xf32>
    %21 = vector.broadcast %1 : vector<1x32xf32> to vector<16x32xf32>
    %22 = arith.mulf %20, %21 : vector<16x32xf32>
    %23 = vector.broadcast %2 : vector<1x32xf32> to vector<16x32xf32>
    %24 = arith.addf %22, %23 : vector<16x32xf32>
    %c0_9 = arith.constant 0 : index
    %c0_10 = arith.constant 0 : index
    %25 = vector.load %arg1[%c0_9, %c0_10] : memref<16x16xf32, #tpu.memory_space<vmem>>, vector<16x16xf32>
    %c0_11 = arith.constant 0 : index
    %c0_12 = arith.constant 0 : index
    %c0_13 = arith.constant 0 : index
    %26 = vector.load %arg5[%c0_11, %c0_12, %c0_13] : memref<2x32x32xf32, #tpu.memory_space<vmem>>, vector<1x32x32xf32>
    %27 = vector.shape_cast %26 : vector<1x32x32xf32> to vector<32x32xf32>
    %cst_14 = arith.constant dense<0.000000e+00> : vector<16x32xf32>
    %28 = tpu.matmul %24, %27, %cst_14 {dimension_numbers = #tpu.dot_dimension_numbers<[1], [0], [0], [1], [0, 0, 1, 1], [], []>} : vector<16x32xf32>, vector<32x32xf32>, vector<16x32xf32> -> vector<16x32xf32>
    %c0_15 = arith.constant 0 : index
    %c0_16 = arith.constant 0 : index
    %c0_17 = arith.constant 0 : index
    %29 = vector.load %arg6[%c0_15, %c0_16, %c0_17] : memref<2x1x32xf32, #tpu.memory_space<vmem>>, vector<1x1x32xf32>
    %30 = vector.shape_cast %29 : vector<1x1x32xf32> to vector<1x32xf32>
    %31 = vector.broadcast %30 : vector<1x32xf32> to vector<16x32xf32>
    %32 = arith.addf %28, %31 : vector<16x32xf32>
    %c0_18 = arith.constant 0 : index
    %c0_19 = arith.constant 0 : index
    %c0_20 = arith.constant 0 : index
    %33 = vector.load %arg7[%c0_18, %c0_19, %c0_20] : memref<2x32x32xf32, #tpu.memory_space<vmem>>, vector<1x32x32xf32>
    %34 = vector.shape_cast %33 : vector<1x32x32xf32> to vector<32x32xf32>
    %cst_21 = arith.constant dense<0.000000e+00> : vector<16x32xf32>
    %35 = tpu.matmul %24, %34, %cst_21 {dimension_numbers = #tpu.dot_dimension_numbers<[1], [0], [0], [1], [0, 0, 1, 1], [], []>} : vector<16x32xf32>, vector<32x32xf32>, vector<16x32xf32> -> vector<16x32xf32>
    %c0_22 = arith.constant 0 : index
    %c0_23 = arith.constant 0 : index
    %c0_24 = arith.constant 0 : index
    %36 = vector.load %arg8[%c0_22, %c0_23, %c0_24] : memref<2x1x32xf32, #tpu.memory_space<vmem>>, vector<1x1x32xf32>
    %37 = vector.shape_cast %36 : vector<1x1x32xf32> to vector<1x32xf32>
    %38 = vector.broadcast %37 : vector<1x32xf32> to vector<16x32xf32>
    %39 = arith.addf %35, %38 : vector<16x32xf32>
    %c0_25 = arith.constant 0 : index
    %c0_26 = arith.constant 0 : index
    %c0_27 = arith.constant 0 : index
    %40 = vector.load %arg9[%c0_25, %c0_26, %c0_27] : memref<2x32x32xf32, #tpu.memory_space<vmem>>, vector<1x32x32xf32>
    %41 = vector.shape_cast %40 : vector<1x32x32xf32> to vector<32x32xf32>
    %cst_28 = arith.constant dense<0.000000e+00> : vector<16x32xf32>
    %42 = tpu.matmul %24, %41, %cst_28 {dimension_numbers = #tpu.dot_dimension_numbers<[1], [0], [0], [1], [0, 0, 1, 1], [], []>} : vector<16x32xf32>, vector<32x32xf32>, vector<16x32xf32> -> vector<16x32xf32>
    %c0_29 = arith.constant 0 : index
    %c0_30 = arith.constant 0 : index
    %c0_31 = arith.constant 0 : index
    %43 = vector.load %arg10[%c0_29, %c0_30, %c0_31] : memref<2x1x32xf32, #tpu.memory_space<vmem>>, vector<1x1x32xf32>
    %44 = vector.shape_cast %43 : vector<1x1x32xf32> to vector<1x32xf32>
    %45 = vector.broadcast %44 : vector<1x32xf32> to vector<16x32xf32>
    %46 = arith.addf %42, %45 : vector<16x32xf32>
    %cst_32 = arith.constant 0.000000e+00 : f32
    %47 = vector.broadcast %cst_32 : f32 to vector<16x32xf32>
    %c0_33 = arith.constant 0 : index
    %c0_34 = arith.constant 0 : index
    %c0_35 = arith.constant 0 : index
    %48 = vector.load %arg2[%c0_33, %c0_34, %c0_35] : memref<4x1x32xf32, #tpu.memory_space<vmem>>, vector<1x1x32xf32>
    %49 = vector.shape_cast %48 : vector<1x1x32xf32> to vector<1x32xf32>
    %50 = vector.broadcast %49 : vector<1x32xf32> to vector<16x32xf32>
    %51 = arith.mulf %32, %50 : vector<16x32xf32>
    %52 = tpu.transpose %39, [1, 0] : vector<16x32xf32> -> vector<32x16xf32>
    %cst_36 = arith.constant dense<0.000000e+00> : vector<16x16xf32>
    %53 = tpu.matmul %51, %52, %cst_36 {dimension_numbers = #tpu.dot_dimension_numbers<[1], [0], [0], [1], [0, 0, 1, 1], [], []>} : vector<16x32xf32>, vector<32x16xf32>, vector<16x16xf32> -> vector<16x16xf32>
    %cst_37 = arith.constant 0.353553385 : f32
    %54 = vector.broadcast %cst_37 : f32 to vector<16x16xf32>
    %55 = arith.mulf %53, %54 : vector<16x16xf32>
    %56 = arith.addf %55, %25 : vector<16x16xf32>
    %cst_38 = arith.constant dense<0xFF800000> : vector<16xf32>
    %57 = vector.multi_reduction <maximumf>, %56, %cst_38 [1] : vector<16x16xf32> to vector<16xf32>
    %58 = vector.shape_cast %57 : vector<16xf32> to vector<16x1xf32>
    %59 = vector.broadcast %58 : vector<16x1xf32> to vector<16x16xf32>
    %60 = arith.subf %56, %59 : vector<16x16xf32>
    %61 = math.exp %60 : vector<16x16xf32>
    %cst_39 = arith.constant dense<0.000000e+00> : vector<16xf32>
    %62 = vector.multi_reduction <add>, %61, %cst_39 [1] : vector<16x16xf32> to vector<16xf32>
    %63 = vector.shape_cast %62 : vector<16xf32> to vector<16x1xf32>
    %64 = tpu.reciprocal %63 {approx = true} : vector<16x1xf32> -> vector<16x1xf32>
    %65 = vector.broadcast %64 : vector<16x1xf32> to vector<16x16xf32>
    %66 = arith.mulf %61, %65 : vector<16x16xf32>
    %67 = vector.broadcast %49 : vector<1x32xf32> to vector<16x32xf32>
    %68 = arith.mulf %46, %67 : vector<16x32xf32>
    %cst_40 = arith.constant dense<0.000000e+00> : vector<16x32xf32>
    %69 = tpu.matmul %66, %68, %cst_40 {dimension_numbers = #tpu.dot_dimension_numbers<[1], [0], [0], [1], [0, 0, 1, 1], [], []>} : vector<16x16xf32>, vector<16x32xf32>, vector<16x32xf32> -> vector<16x32xf32>
    %70 = arith.addf %47, %69 : vector<16x32xf32>
    %c1 = arith.constant 1 : index
    %c0_41 = arith.constant 0 : index
    %c0_42 = arith.constant 0 : index
    %71 = vector.load %arg2[%c1, %c0_41, %c0_42] : memref<4x1x32xf32, #tpu.memory_space<vmem>>, vector<1x1x32xf32>
    %72 = vector.shape_cast %71 : vector<1x1x32xf32> to vector<1x32xf32>
    %73 = vector.broadcast %72 : vector<1x32xf32> to vector<16x32xf32>
    %74 = arith.mulf %32, %73 : vector<16x32xf32>
    %75 = tpu.transpose %39, [1, 0] : vector<16x32xf32> -> vector<32x16xf32>
    %cst_43 = arith.constant dense<0.000000e+00> : vector<16x16xf32>
    %76 = tpu.matmul %74, %75, %cst_43 {dimension_numbers = #tpu.dot_dimension_numbers<[1], [0], [0], [1], [0, 0, 1, 1], [], []>} : vector<16x32xf32>, vector<32x16xf32>, vector<16x16xf32> -> vector<16x16xf32>
    %cst_44 = arith.constant 0.353553385 : f32
    %77 = vector.broadcast %cst_44 : f32 to vector<16x16xf32>
    %78 = arith.mulf %76, %77 : vector<16x16xf32>
    %79 = arith.addf %78, %25 : vector<16x16xf32>
    %cst_45 = arith.constant dense<0xFF800000> : vector<16xf32>
    %80 = vector.multi_reduction <maximumf>, %79, %cst_45 [1] : vector<16x16xf32> to vector<16xf32>
    %81 = vector.shape_cast %80 : vector<16xf32> to vector<16x1xf32>
    %82 = vector.broadcast %81 : vector<16x1xf32> to vector<16x16xf32>
    %83 = arith.subf %79, %82 : vector<16x16xf32>
    %84 = math.exp %83 : vector<16x16xf32>
    %cst_46 = arith.constant dense<0.000000e+00> : vector<16xf32>
    %85 = vector.multi_reduction <add>, %84, %cst_46 [1] : vector<16x16xf32> to vector<16xf32>
    %86 = vector.shape_cast %85 : vector<16xf32> to vector<16x1xf32>
    %87 = tpu.reciprocal %86 {approx = true} : vector<16x1xf32> -> vector<16x1xf32>
    %88 = vector.broadcast %87 : vector<16x1xf32> to vector<16x16xf32>
    %89 = arith.mulf %84, %88 : vector<16x16xf32>
    %90 = vector.broadcast %72 : vector<1x32xf32> to vector<16x32xf32>
    %91 = arith.mulf %46, %90 : vector<16x32xf32>
    %cst_47 = arith.constant dense<0.000000e+00> : vector<16x32xf32>
    %92 = tpu.matmul %89, %91, %cst_47 {dimension_numbers = #tpu.dot_dimension_numbers<[1], [0], [0], [1], [0, 0, 1, 1], [], []>} : vector<16x16xf32>, vector<16x32xf32>, vector<16x32xf32> -> vector<16x32xf32>
    %93 = arith.addf %70, %92 : vector<16x32xf32>
    %c2 = arith.constant 2 : index
    %c0_48 = arith.constant 0 : index
    %c0_49 = arith.constant 0 : index
    %94 = vector.load %arg2[%c2, %c0_48, %c0_49] : memref<4x1x32xf32, #tpu.memory_space<vmem>>, vector<1x1x32xf32>
    %95 = vector.shape_cast %94 : vector<1x1x32xf32> to vector<1x32xf32>
    %96 = vector.broadcast %95 : vector<1x32xf32> to vector<16x32xf32>
    %97 = arith.mulf %32, %96 : vector<16x32xf32>
    %98 = tpu.transpose %39, [1, 0] : vector<16x32xf32> -> vector<32x16xf32>
    %cst_50 = arith.constant dense<0.000000e+00> : vector<16x16xf32>
    %99 = tpu.matmul %97, %98, %cst_50 {dimension_numbers = #tpu.dot_dimension_numbers<[1], [0], [0], [1], [0, 0, 1, 1], [], []>} : vector<16x32xf32>, vector<32x16xf32>, vector<16x16xf32> -> vector<16x16xf32>
    %cst_51 = arith.constant 0.353553385 : f32
    %100 = vector.broadcast %cst_51 : f32 to vector<16x16xf32>
    %101 = arith.mulf %99, %100 : vector<16x16xf32>
    %102 = arith.addf %101, %25 : vector<16x16xf32>
    %cst_52 = arith.constant dense<0xFF800000> : vector<16xf32>
    %103 = vector.multi_reduction <maximumf>, %102, %cst_52 [1] : vector<16x16xf32> to vector<16xf32>
    %104 = vector.shape_cast %103 : vector<16xf32> to vector<16x1xf32>
    %105 = vector.broadcast %104 : vector<16x1xf32> to vector<16x16xf32>
    %106 = arith.subf %102, %105 : vector<16x16xf32>
    %107 = math.exp %106 : vector<16x16xf32>
    %cst_53 = arith.constant dense<0.000000e+00> : vector<16xf32>
    %108 = vector.multi_reduction <add>, %107, %cst_53 [1] : vector<16x16xf32> to vector<16xf32>
    %109 = vector.shape_cast %108 : vector<16xf32> to vector<16x1xf32>
    %110 = tpu.reciprocal %109 {approx = true} : vector<16x1xf32> -> vector<16x1xf32>
    %111 = vector.broadcast %110 : vector<16x1xf32> to vector<16x16xf32>
    %112 = arith.mulf %107, %111 : vector<16x16xf32>
    %113 = vector.broadcast %95 : vector<1x32xf32> to vector<16x32xf32>
    %114 = arith.mulf %46, %113 : vector<16x32xf32>
    %cst_54 = arith.constant dense<0.000000e+00> : vector<16x32xf32>
    %115 = tpu.matmul %112, %114, %cst_54 {dimension_numbers = #tpu.dot_dimension_numbers<[1], [0], [0], [1], [0, 0, 1, 1], [], []>} : vector<16x16xf32>, vector<16x32xf32>, vector<16x32xf32> -> vector<16x32xf32>
    %116 = arith.addf %93, %115 : vector<16x32xf32>
    %c3 = arith.constant 3 : index
    %c0_55 = arith.constant 0 : index
    %c0_56 = arith.constant 0 : index
    %117 = vector.load %arg2[%c3, %c0_55, %c0_56] : memref<4x1x32xf32, #tpu.memory_space<vmem>>, vector<1x1x32xf32>
    %118 = vector.shape_cast %117 : vector<1x1x32xf32> to vector<1x32xf32>
    %119 = vector.broadcast %118 : vector<1x32xf32> to vector<16x32xf32>
    %120 = arith.mulf %32, %119 : vector<16x32xf32>
    %121 = tpu.transpose %39, [1, 0] : vector<16x32xf32> -> vector<32x16xf32>
    %cst_57 = arith.constant dense<0.000000e+00> : vector<16x16xf32>
    %122 = tpu.matmul %120, %121, %cst_57 {dimension_numbers = #tpu.dot_dimension_numbers<[1], [0], [0], [1], [0, 0, 1, 1], [], []>} : vector<16x32xf32>, vector<32x16xf32>, vector<16x16xf32> -> vector<16x16xf32>
    %cst_58 = arith.constant 0.353553385 : f32
    %123 = vector.broadcast %cst_58 : f32 to vector<16x16xf32>
    %124 = arith.mulf %122, %123 : vector<16x16xf32>
    %125 = arith.addf %124, %25 : vector<16x16xf32>
    %cst_59 = arith.constant dense<0xFF800000> : vector<16xf32>
    %126 = vector.multi_reduction <maximumf>, %125, %cst_59 [1] : vector<16x16xf32> to vector<16xf32>
    %127 = vector.shape_cast %126 : vector<16xf32> to vector<16x1xf32>
    %128 = vector.broadcast %127 : vector<16x1xf32> to vector<16x16xf32>
    %129 = arith.subf %125, %128 : vector<16x16xf32>
    %130 = math.exp %129 : vector<16x16xf32>
    %cst_60 = arith.constant dense<0.000000e+00> : vector<16xf32>
    %131 = vector.multi_reduction <add>, %130, %cst_60 [1] : vector<16x16xf32> to vector<16xf32>
    %132 = vector.shape_cast %131 : vector<16xf32> to vector<16x1xf32>
    %133 = tpu.reciprocal %132 {approx = true} : vector<16x1xf32> -> vector<16x1xf32>
    %134 = vector.broadcast %133 : vector<16x1xf32> to vector<16x16xf32>
    %135 = arith.mulf %130, %134 : vector<16x16xf32>
    %136 = vector.broadcast %118 : vector<1x32xf32> to vector<16x32xf32>
    %137 = arith.mulf %46, %136 : vector<16x32xf32>
    %cst_61 = arith.constant dense<0.000000e+00> : vector<16x32xf32>
    %138 = tpu.matmul %135, %137, %cst_61 {dimension_numbers = #tpu.dot_dimension_numbers<[1], [0], [0], [1], [0, 0, 1, 1], [], []>} : vector<16x16xf32>, vector<16x32xf32>, vector<16x32xf32> -> vector<16x32xf32>
    %139 = arith.addf %116, %138 : vector<16x32xf32>
    %c0_62 = arith.constant 0 : index
    %c0_63 = arith.constant 0 : index
    %c0_64 = arith.constant 0 : index
    %140 = vector.load %arg11[%c0_62, %c0_63, %c0_64] : memref<2x32x32xf32, #tpu.memory_space<vmem>>, vector<1x32x32xf32>
    %141 = vector.shape_cast %140 : vector<1x32x32xf32> to vector<32x32xf32>
    %cst_65 = arith.constant dense<0.000000e+00> : vector<16x32xf32>
    %142 = tpu.matmul %139, %141, %cst_65 {dimension_numbers = #tpu.dot_dimension_numbers<[1], [0], [0], [1], [0, 0, 1, 1], [], []>} : vector<16x32xf32>, vector<32x32xf32>, vector<16x32xf32> -> vector<16x32xf32>
    %c0_66 = arith.constant 0 : index
    %c0_67 = arith.constant 0 : index
    %c0_68 = arith.constant 0 : index
    %143 = vector.load %arg12[%c0_66, %c0_67, %c0_68] : memref<2x1x32xf32, #tpu.memory_space<vmem>>, vector<1x1x32xf32>
    %144 = vector.shape_cast %143 : vector<1x1x32xf32> to vector<1x32xf32>
    %145 = vector.broadcast %144 : vector<1x32xf32> to vector<16x32xf32>
    %146 = arith.addf %142, %145 : vector<16x32xf32>
    %147 = arith.addf %24, %146 : vector<16x32xf32>
    %c0_69 = arith.constant 0 : index
    %c0_70 = arith.constant 0 : index
    %c0_71 = arith.constant 0 : index
    %148 = vector.load %arg13[%c0_69, %c0_70, %c0_71] : memref<2x1x32xf32, #tpu.memory_space<vmem>>, vector<1x1x32xf32>
    %149 = vector.shape_cast %148 : vector<1x1x32xf32> to vector<1x32xf32>
    %c0_72 = arith.constant 0 : index
    %c0_73 = arith.constant 0 : index
    %c0_74 = arith.constant 0 : index
    %150 = vector.load %arg14[%c0_72, %c0_73, %c0_74] : memref<2x1x32xf32, #tpu.memory_space<vmem>>, vector<1x1x32xf32>
    %151 = vector.shape_cast %150 : vector<1x1x32xf32> to vector<1x32xf32>
    %cst_75 = arith.constant dense<0.000000e+00> : vector<16xf32>
    %152 = vector.multi_reduction <add>, %147, %cst_75 [1] : vector<16x32xf32> to vector<16xf32>
    %153 = vector.shape_cast %152 : vector<16xf32> to vector<16x1xf32>
    %cst_76 = arith.constant 3.200000e+01 : f32
    %154 = vector.broadcast %cst_76 : f32 to vector<16x1xf32>
    %155 = arith.divf %153, %154 : vector<16x1xf32>
    %156 = vector.broadcast %155 : vector<16x1xf32> to vector<16x32xf32>
    %157 = arith.subf %147, %156 : vector<16x32xf32>
    %158 = arith.mulf %157, %157 : vector<16x32xf32>
    %cst_77 = arith.constant dense<0.000000e+00> : vector<16xf32>
    %159 = vector.multi_reduction <add>, %158, %cst_77 [1] : vector<16x32xf32> to vector<16xf32>
    %160 = vector.shape_cast %159 : vector<16xf32> to vector<16x1xf32>
    %cst_78 = arith.constant 3.200000e+01 : f32
    %161 = vector.broadcast %cst_78 : f32 to vector<16x1xf32>
    %162 = arith.divf %160, %161 : vector<16x1xf32>
    %163 = vector.broadcast %155 : vector<16x1xf32> to vector<16x32xf32>
    %164 = arith.subf %147, %163 : vector<16x32xf32>
    %cst_79 = arith.constant 9.99999996E-13 : f32
    %165 = vector.broadcast %cst_79 : f32 to vector<16x1xf32>
    %166 = arith.addf %162, %165 : vector<16x1xf32>
    %167 = math.rsqrt %166 : vector<16x1xf32>
    %168 = vector.broadcast %167 : vector<16x1xf32> to vector<16x32xf32>
    %169 = arith.mulf %164, %168 : vector<16x32xf32>
    %170 = vector.broadcast %149 : vector<1x32xf32> to vector<16x32xf32>
    %171 = arith.mulf %169, %170 : vector<16x32xf32>
    %172 = vector.broadcast %151 : vector<1x32xf32> to vector<16x32xf32>
    %173 = arith.addf %171, %172 : vector<16x32xf32>
    %c0_80 = arith.constant 0 : index
    %c0_81 = arith.constant 0 : index
    %c0_82 = arith.constant 0 : index
    %174 = vector.load %arg15[%c0_80, %c0_81, %c0_82] : memref<2x32x64xf32, #tpu.memory_space<vmem>>, vector<1x32x64xf32>
    %175 = vector.shape_cast %174 : vector<1x32x64xf32> to vector<32x64xf32>
    %cst_83 = arith.constant dense<0.000000e+00> : vector<16x64xf32>
    %176 = tpu.matmul %173, %175, %cst_83 {dimension_numbers = #tpu.dot_dimension_numbers<[1], [0], [0], [1], [0, 0, 1, 1], [], []>} : vector<16x32xf32>, vector<32x64xf32>, vector<16x64xf32> -> vector<16x64xf32>
    %c0_84 = arith.constant 0 : index
    %c0_85 = arith.constant 0 : index
    %c0_86 = arith.constant 0 : index
    %177 = vector.load %arg16[%c0_84, %c0_85, %c0_86] : memref<2x1x64xf32, #tpu.memory_space<vmem>>, vector<1x1x64xf32>
    %178 = vector.shape_cast %177 : vector<1x1x64xf32> to vector<1x64xf32>
    %179 = vector.broadcast %178 : vector<1x64xf32> to vector<16x64xf32>
    %180 = arith.addf %176, %179 : vector<16x64xf32>
    %cst_87 = arith.constant 5.000000e-01 : f32
    %181 = vector.broadcast %cst_87 : f32 to vector<16x64xf32>
    %182 = arith.mulf %181, %180 : vector<16x64xf32>
    %cst_88 = arith.constant 4.471500e-02 : f32
    %183 = vector.broadcast %cst_88 : f32 to vector<16x64xf32>
    %184 = arith.mulf %183, %180 : vector<16x64xf32>
    %185 = arith.mulf %184, %180 : vector<16x64xf32>
    %186 = arith.mulf %185, %180 : vector<16x64xf32>
    %187 = arith.addf %180, %186 : vector<16x64xf32>
    %cst_89 = arith.constant 0.797884583 : f32
    %188 = vector.broadcast %cst_89 : f32 to vector<16x64xf32>
    %189 = arith.mulf %188, %187 : vector<16x64xf32>
    %190 = math.tanh %189 : vector<16x64xf32>
    %cst_90 = arith.constant 1.000000e+00 : f32
    %191 = vector.broadcast %cst_90 : f32 to vector<16x64xf32>
    %192 = arith.addf %191, %190 : vector<16x64xf32>
    %193 = arith.mulf %182, %192 : vector<16x64xf32>
    %c0_91 = arith.constant 0 : index
    %c0_92 = arith.constant 0 : index
    %c0_93 = arith.constant 0 : index
    %194 = vector.load %arg17[%c0_91, %c0_92, %c0_93] : memref<2x64x32xf32, #tpu.memory_space<vmem>>, vector<1x64x32xf32>
    %195 = vector.shape_cast %194 : vector<1x64x32xf32> to vector<64x32xf32>
    %cst_94 = arith.constant dense<0.000000e+00> : vector<16x32xf32>
    %196 = tpu.matmul %193, %195, %cst_94 {dimension_numbers = #tpu.dot_dimension_numbers<[1], [0], [0], [1], [0, 0, 1, 1], [], []>} : vector<16x64xf32>, vector<64x32xf32>, vector<16x32xf32> -> vector<16x32xf32>
    %c0_95 = arith.constant 0 : index
    %c0_96 = arith.constant 0 : index
    %c0_97 = arith.constant 0 : index
    %197 = vector.load %arg18[%c0_95, %c0_96, %c0_97] : memref<2x1x32xf32, #tpu.memory_space<vmem>>, vector<1x1x32xf32>
    %198 = vector.shape_cast %197 : vector<1x1x32xf32> to vector<1x32xf32>
    %199 = vector.broadcast %198 : vector<1x32xf32> to vector<16x32xf32>
    %200 = arith.addf %196, %199 : vector<16x32xf32>
    %201 = arith.addf %173, %200 : vector<16x32xf32>
    %c0_98 = arith.constant 0 : index
    %c0_99 = arith.constant 0 : index
    %c0_100 = arith.constant 0 : index
    %202 = vector.load %arg19[%c0_98, %c0_99, %c0_100] : memref<2x1x32xf32, #tpu.memory_space<vmem>>, vector<1x1x32xf32>
    %203 = vector.shape_cast %202 : vector<1x1x32xf32> to vector<1x32xf32>
    %c0_101 = arith.constant 0 : index
    %c0_102 = arith.constant 0 : index
    %c0_103 = arith.constant 0 : index
    %204 = vector.load %arg20[%c0_101, %c0_102, %c0_103] : memref<2x1x32xf32, #tpu.memory_space<vmem>>, vector<1x1x32xf32>
    %205 = vector.shape_cast %204 : vector<1x1x32xf32> to vector<1x32xf32>
    %cst_104 = arith.constant dense<0.000000e+00> : vector<16xf32>
    %206 = vector.multi_reduction <add>, %201, %cst_104 [1] : vector<16x32xf32> to vector<16xf32>
    %207 = vector.shape_cast %206 : vector<16xf32> to vector<16x1xf32>
    %cst_105 = arith.constant 3.200000e+01 : f32
    %208 = vector.broadcast %cst_105 : f32 to vector<16x1xf32>
    %209 = arith.divf %207, %208 : vector<16x1xf32>
    %210 = vector.broadcast %209 : vector<16x1xf32> to vector<16x32xf32>
    %211 = arith.subf %201, %210 : vector<16x32xf32>
    %212 = arith.mulf %211, %211 : vector<16x32xf32>
    %cst_106 = arith.constant dense<0.000000e+00> : vector<16xf32>
    %213 = vector.multi_reduction <add>, %212, %cst_106 [1] : vector<16x32xf32> to vector<16xf32>
    %214 = vector.shape_cast %213 : vector<16xf32> to vector<16x1xf32>
    %cst_107 = arith.constant 3.200000e+01 : f32
    %215 = vector.broadcast %cst_107 : f32 to vector<16x1xf32>
    %216 = arith.divf %214, %215 : vector<16x1xf32>
    %217 = vector.broadcast %209 : vector<16x1xf32> to vector<16x32xf32>
    %218 = arith.subf %201, %217 : vector<16x32xf32>
    %cst_108 = arith.constant 9.99999996E-13 : f32
    %219 = vector.broadcast %cst_108 : f32 to vector<16x1xf32>
    %220 = arith.addf %216, %219 : vector<16x1xf32>
    %221 = math.rsqrt %220 : vector<16x1xf32>
    %222 = vector.broadcast %221 : vector<16x1xf32> to vector<16x32xf32>
    %223 = arith.mulf %218, %222 : vector<16x32xf32>
    %224 = vector.broadcast %203 : vector<1x32xf32> to vector<16x32xf32>
    %225 = arith.mulf %223, %224 : vector<16x32xf32>
    %226 = vector.broadcast %205 : vector<1x32xf32> to vector<16x32xf32>
    %227 = arith.addf %225, %226 : vector<16x32xf32>
    %c1_109 = arith.constant 1 : index
    %c0_110 = arith.constant 0 : index
    %c0_111 = arith.constant 0 : index
    %228 = vector.load %arg5[%c1_109, %c0_110, %c0_111] : memref<2x32x32xf32, #tpu.memory_space<vmem>>, vector<1x32x32xf32>
    %229 = vector.shape_cast %228 : vector<1x32x32xf32> to vector<32x32xf32>
    %cst_112 = arith.constant dense<0.000000e+00> : vector<16x32xf32>
    %230 = tpu.matmul %227, %229, %cst_112 {dimension_numbers = #tpu.dot_dimension_numbers<[1], [0], [0], [1], [0, 0, 1, 1], [], []>} : vector<16x32xf32>, vector<32x32xf32>, vector<16x32xf32> -> vector<16x32xf32>
    %c1_113 = arith.constant 1 : index
    %c0_114 = arith.constant 0 : index
    %c0_115 = arith.constant 0 : index
    %231 = vector.load %arg6[%c1_113, %c0_114, %c0_115] : memref<2x1x32xf32, #tpu.memory_space<vmem>>, vector<1x1x32xf32>
    %232 = vector.shape_cast %231 : vector<1x1x32xf32> to vector<1x32xf32>
    %233 = vector.broadcast %232 : vector<1x32xf32> to vector<16x32xf32>
    %234 = arith.addf %230, %233 : vector<16x32xf32>
    %c1_116 = arith.constant 1 : index
    %c0_117 = arith.constant 0 : index
    %c0_118 = arith.constant 0 : index
    %235 = vector.load %arg7[%c1_116, %c0_117, %c0_118] : memref<2x32x32xf32, #tpu.memory_space<vmem>>, vector<1x32x32xf32>
    %236 = vector.shape_cast %235 : vector<1x32x32xf32> to vector<32x32xf32>
    %cst_119 = arith.constant dense<0.000000e+00> : vector<16x32xf32>
    %237 = tpu.matmul %227, %236, %cst_119 {dimension_numbers = #tpu.dot_dimension_numbers<[1], [0], [0], [1], [0, 0, 1, 1], [], []>} : vector<16x32xf32>, vector<32x32xf32>, vector<16x32xf32> -> vector<16x32xf32>
    %c1_120 = arith.constant 1 : index
    %c0_121 = arith.constant 0 : index
    %c0_122 = arith.constant 0 : index
    %238 = vector.load %arg8[%c1_120, %c0_121, %c0_122] : memref<2x1x32xf32, #tpu.memory_space<vmem>>, vector<1x1x32xf32>
    %239 = vector.shape_cast %238 : vector<1x1x32xf32> to vector<1x32xf32>
    %240 = vector.broadcast %239 : vector<1x32xf32> to vector<16x32xf32>
    %241 = arith.addf %237, %240 : vector<16x32xf32>
    %c1_123 = arith.constant 1 : index
    %c0_124 = arith.constant 0 : index
    %c0_125 = arith.constant 0 : index
    %242 = vector.load %arg9[%c1_123, %c0_124, %c0_125] : memref<2x32x32xf32, #tpu.memory_space<vmem>>, vector<1x32x32xf32>
    %243 = vector.shape_cast %242 : vector<1x32x32xf32> to vector<32x32xf32>
    %cst_126 = arith.constant dense<0.000000e+00> : vector<16x32xf32>
    %244 = tpu.matmul %227, %243, %cst_126 {dimension_numbers = #tpu.dot_dimension_numbers<[1], [0], [0], [1], [0, 0, 1, 1], [], []>} : vector<16x32xf32>, vector<32x32xf32>, vector<16x32xf32> -> vector<16x32xf32>
    %c1_127 = arith.constant 1 : index
    %c0_128 = arith.constant 0 : index
    %c0_129 = arith.constant 0 : index
    %245 = vector.load %arg10[%c1_127, %c0_128, %c0_129] : memref<2x1x32xf32, #tpu.memory_space<vmem>>, vector<1x1x32xf32>
    %246 = vector.shape_cast %245 : vector<1x1x32xf32> to vector<1x32xf32>
    %247 = vector.broadcast %246 : vector<1x32xf32> to vector<16x32xf32>
    %248 = arith.addf %244, %247 : vector<16x32xf32>
    %cst_130 = arith.constant 0.000000e+00 : f32
    %249 = vector.broadcast %cst_130 : f32 to vector<16x32xf32>
    %c0_131 = arith.constant 0 : index
    %c0_132 = arith.constant 0 : index
    %c0_133 = arith.constant 0 : index
    %250 = vector.load %arg2[%c0_131, %c0_132, %c0_133] : memref<4x1x32xf32, #tpu.memory_space<vmem>>, vector<1x1x32xf32>
    %251 = vector.shape_cast %250 : vector<1x1x32xf32> to vector<1x32xf32>
    %252 = vector.broadcast %251 : vector<1x32xf32> to vector<16x32xf32>
    %253 = arith.mulf %234, %252 : vector<16x32xf32>
    %254 = tpu.transpose %241, [1, 0] : vector<16x32xf32> -> vector<32x16xf32>
    %cst_134 = arith.constant dense<0.000000e+00> : vector<16x16xf32>
    %255 = tpu.matmul %253, %254, %cst_134 {dimension_numbers = #tpu.dot_dimension_numbers<[1], [0], [0], [1], [0, 0, 1, 1], [], []>} : vector<16x32xf32>, vector<32x16xf32>, vector<16x16xf32> -> vector<16x16xf32>
    %cst_135 = arith.constant 0.353553385 : f32
    %256 = vector.broadcast %cst_135 : f32 to vector<16x16xf32>
    %257 = arith.mulf %255, %256 : vector<16x16xf32>
    %258 = arith.addf %257, %25 : vector<16x16xf32>
    %cst_136 = arith.constant dense<0xFF800000> : vector<16xf32>
    %259 = vector.multi_reduction <maximumf>, %258, %cst_136 [1] : vector<16x16xf32> to vector<16xf32>
    %260 = vector.shape_cast %259 : vector<16xf32> to vector<16x1xf32>
    %261 = vector.broadcast %260 : vector<16x1xf32> to vector<16x16xf32>
    %262 = arith.subf %258, %261 : vector<16x16xf32>
    %263 = math.exp %262 : vector<16x16xf32>
    %cst_137 = arith.constant dense<0.000000e+00> : vector<16xf32>
    %264 = vector.multi_reduction <add>, %263, %cst_137 [1] : vector<16x16xf32> to vector<16xf32>
    %265 = vector.shape_cast %264 : vector<16xf32> to vector<16x1xf32>
    %266 = tpu.reciprocal %265 {approx = true} : vector<16x1xf32> -> vector<16x1xf32>
    %267 = vector.broadcast %266 : vector<16x1xf32> to vector<16x16xf32>
    %268 = arith.mulf %263, %267 : vector<16x16xf32>
    %269 = vector.broadcast %251 : vector<1x32xf32> to vector<16x32xf32>
    %270 = arith.mulf %248, %269 : vector<16x32xf32>
    %cst_138 = arith.constant dense<0.000000e+00> : vector<16x32xf32>
    %271 = tpu.matmul %268, %270, %cst_138 {dimension_numbers = #tpu.dot_dimension_numbers<[1], [0], [0], [1], [0, 0, 1, 1], [], []>} : vector<16x16xf32>, vector<16x32xf32>, vector<16x32xf32> -> vector<16x32xf32>
    %272 = arith.addf %249, %271 : vector<16x32xf32>
    %c1_139 = arith.constant 1 : index
    %c0_140 = arith.constant 0 : index
    %c0_141 = arith.constant 0 : index
    %273 = vector.load %arg2[%c1_139, %c0_140, %c0_141] : memref<4x1x32xf32, #tpu.memory_space<vmem>>, vector<1x1x32xf32>
    %274 = vector.shape_cast %273 : vector<1x1x32xf32> to vector<1x32xf32>
    %275 = vector.broadcast %274 : vector<1x32xf32> to vector<16x32xf32>
    %276 = arith.mulf %234, %275 : vector<16x32xf32>
    %277 = tpu.transpose %241, [1, 0] : vector<16x32xf32> -> vector<32x16xf32>
    %cst_142 = arith.constant dense<0.000000e+00> : vector<16x16xf32>
    %278 = tpu.matmul %276, %277, %cst_142 {dimension_numbers = #tpu.dot_dimension_numbers<[1], [0], [0], [1], [0, 0, 1, 1], [], []>} : vector<16x32xf32>, vector<32x16xf32>, vector<16x16xf32> -> vector<16x16xf32>
    %cst_143 = arith.constant 0.353553385 : f32
    %279 = vector.broadcast %cst_143 : f32 to vector<16x16xf32>
    %280 = arith.mulf %278, %279 : vector<16x16xf32>
    %281 = arith.addf %280, %25 : vector<16x16xf32>
    %cst_144 = arith.constant dense<0xFF800000> : vector<16xf32>
    %282 = vector.multi_reduction <maximumf>, %281, %cst_144 [1] : vector<16x16xf32> to vector<16xf32>
    %283 = vector.shape_cast %282 : vector<16xf32> to vector<16x1xf32>
    %284 = vector.broadcast %283 : vector<16x1xf32> to vector<16x16xf32>
    %285 = arith.subf %281, %284 : vector<16x16xf32>
    %286 = math.exp %285 : vector<16x16xf32>
    %cst_145 = arith.constant dense<0.000000e+00> : vector<16xf32>
    %287 = vector.multi_reduction <add>, %286, %cst_145 [1] : vector<16x16xf32> to vector<16xf32>
    %288 = vector.shape_cast %287 : vector<16xf32> to vector<16x1xf32>
    %289 = tpu.reciprocal %288 {approx = true} : vector<16x1xf32> -> vector<16x1xf32>
    %290 = vector.broadcast %289 : vector<16x1xf32> to vector<16x16xf32>
    %291 = arith.mulf %286, %290 : vector<16x16xf32>
    %292 = vector.broadcast %274 : vector<1x32xf32> to vector<16x32xf32>
    %293 = arith.mulf %248, %292 : vector<16x32xf32>
    %cst_146 = arith.constant dense<0.000000e+00> : vector<16x32xf32>
    %294 = tpu.matmul %291, %293, %cst_146 {dimension_numbers = #tpu.dot_dimension_numbers<[1], [0], [0], [1], [0, 0, 1, 1], [], []>} : vector<16x16xf32>, vector<16x32xf32>, vector<16x32xf32> -> vector<16x32xf32>
    %295 = arith.addf %272, %294 : vector<16x32xf32>
    %c2_147 = arith.constant 2 : index
    %c0_148 = arith.constant 0 : index
    %c0_149 = arith.constant 0 : index
    %296 = vector.load %arg2[%c2_147, %c0_148, %c0_149] : memref<4x1x32xf32, #tpu.memory_space<vmem>>, vector<1x1x32xf32>
    %297 = vector.shape_cast %296 : vector<1x1x32xf32> to vector<1x32xf32>
    %298 = vector.broadcast %297 : vector<1x32xf32> to vector<16x32xf32>
    %299 = arith.mulf %234, %298 : vector<16x32xf32>
    %300 = tpu.transpose %241, [1, 0] : vector<16x32xf32> -> vector<32x16xf32>
    %cst_150 = arith.constant dense<0.000000e+00> : vector<16x16xf32>
    %301 = tpu.matmul %299, %300, %cst_150 {dimension_numbers = #tpu.dot_dimension_numbers<[1], [0], [0], [1], [0, 0, 1, 1], [], []>} : vector<16x32xf32>, vector<32x16xf32>, vector<16x16xf32> -> vector<16x16xf32>
    %cst_151 = arith.constant 0.353553385 : f32
    %302 = vector.broadcast %cst_151 : f32 to vector<16x16xf32>
    %303 = arith.mulf %301, %302 : vector<16x16xf32>
    %304 = arith.addf %303, %25 : vector<16x16xf32>
    %cst_152 = arith.constant dense<0xFF800000> : vector<16xf32>
    %305 = vector.multi_reduction <maximumf>, %304, %cst_152 [1] : vector<16x16xf32> to vector<16xf32>
    %306 = vector.shape_cast %305 : vector<16xf32> to vector<16x1xf32>
    %307 = vector.broadcast %306 : vector<16x1xf32> to vector<16x16xf32>
    %308 = arith.subf %304, %307 : vector<16x16xf32>
    %309 = math.exp %308 : vector<16x16xf32>
    %cst_153 = arith.constant dense<0.000000e+00> : vector<16xf32>
    %310 = vector.multi_reduction <add>, %309, %cst_153 [1] : vector<16x16xf32> to vector<16xf32>
    %311 = vector.shape_cast %310 : vector<16xf32> to vector<16x1xf32>
    %312 = tpu.reciprocal %311 {approx = true} : vector<16x1xf32> -> vector<16x1xf32>
    %313 = vector.broadcast %312 : vector<16x1xf32> to vector<16x16xf32>
    %314 = arith.mulf %309, %313 : vector<16x16xf32>
    %315 = vector.broadcast %297 : vector<1x32xf32> to vector<16x32xf32>
    %316 = arith.mulf %248, %315 : vector<16x32xf32>
    %cst_154 = arith.constant dense<0.000000e+00> : vector<16x32xf32>
    %317 = tpu.matmul %314, %316, %cst_154 {dimension_numbers = #tpu.dot_dimension_numbers<[1], [0], [0], [1], [0, 0, 1, 1], [], []>} : vector<16x16xf32>, vector<16x32xf32>, vector<16x32xf32> -> vector<16x32xf32>
    %318 = arith.addf %295, %317 : vector<16x32xf32>
    %c3_155 = arith.constant 3 : index
    %c0_156 = arith.constant 0 : index
    %c0_157 = arith.constant 0 : index
    %319 = vector.load %arg2[%c3_155, %c0_156, %c0_157] : memref<4x1x32xf32, #tpu.memory_space<vmem>>, vector<1x1x32xf32>
    %320 = vector.shape_cast %319 : vector<1x1x32xf32> to vector<1x32xf32>
    %321 = vector.broadcast %320 : vector<1x32xf32> to vector<16x32xf32>
    %322 = arith.mulf %234, %321 : vector<16x32xf32>
    %323 = tpu.transpose %241, [1, 0] : vector<16x32xf32> -> vector<32x16xf32>
    %cst_158 = arith.constant dense<0.000000e+00> : vector<16x16xf32>
    %324 = tpu.matmul %322, %323, %cst_158 {dimension_numbers = #tpu.dot_dimension_numbers<[1], [0], [0], [1], [0, 0, 1, 1], [], []>} : vector<16x32xf32>, vector<32x16xf32>, vector<16x16xf32> -> vector<16x16xf32>
    %cst_159 = arith.constant 0.353553385 : f32
    %325 = vector.broadcast %cst_159 : f32 to vector<16x16xf32>
    %326 = arith.mulf %324, %325 : vector<16x16xf32>
    %327 = arith.addf %326, %25 : vector<16x16xf32>
    %cst_160 = arith.constant dense<0xFF800000> : vector<16xf32>
    %328 = vector.multi_reduction <maximumf>, %327, %cst_160 [1] : vector<16x16xf32> to vector<16xf32>
    %329 = vector.shape_cast %328 : vector<16xf32> to vector<16x1xf32>
    %330 = vector.broadcast %329 : vector<16x1xf32> to vector<16x16xf32>
    %331 = arith.subf %327, %330 : vector<16x16xf32>
    %332 = math.exp %331 : vector<16x16xf32>
    %cst_161 = arith.constant dense<0.000000e+00> : vector<16xf32>
    %333 = vector.multi_reduction <add>, %332, %cst_161 [1] : vector<16x16xf32> to vector<16xf32>
    %334 = vector.shape_cast %333 : vector<16xf32> to vector<16x1xf32>
    %335 = tpu.reciprocal %334 {approx = true} : vector<16x1xf32> -> vector<16x1xf32>
    %336 = vector.broadcast %335 : vector<16x1xf32> to vector<16x16xf32>
    %337 = arith.mulf %332, %336 : vector<16x16xf32>
    %338 = vector.broadcast %320 : vector<1x32xf32> to vector<16x32xf32>
    %339 = arith.mulf %248, %338 : vector<16x32xf32>
    %cst_162 = arith.constant dense<0.000000e+00> : vector<16x32xf32>
    %340 = tpu.matmul %337, %339, %cst_162 {dimension_numbers = #tpu.dot_dimension_numbers<[1], [0], [0], [1], [0, 0, 1, 1], [], []>} : vector<16x16xf32>, vector<16x32xf32>, vector<16x32xf32> -> vector<16x32xf32>
    %341 = arith.addf %318, %340 : vector<16x32xf32>
    %c1_163 = arith.constant 1 : index
    %c0_164 = arith.constant 0 : index
    %c0_165 = arith.constant 0 : index
    %342 = vector.load %arg11[%c1_163, %c0_164, %c0_165] : memref<2x32x32xf32, #tpu.memory_space<vmem>>, vector<1x32x32xf32>
    %343 = vector.shape_cast %342 : vector<1x32x32xf32> to vector<32x32xf32>
    %cst_166 = arith.constant dense<0.000000e+00> : vector<16x32xf32>
    %344 = tpu.matmul %341, %343, %cst_166 {dimension_numbers = #tpu.dot_dimension_numbers<[1], [0], [0], [1], [0, 0, 1, 1], [], []>} : vector<16x32xf32>, vector<32x32xf32>, vector<16x32xf32> -> vector<16x32xf32>
    %c1_167 = arith.constant 1 : index
    %c0_168 = arith.constant 0 : index
    %c0_169 = arith.constant 0 : index
    %345 = vector.load %arg12[%c1_167, %c0_168, %c0_169] : memref<2x1x32xf32, #tpu.memory_space<vmem>>, vector<1x1x32xf32>
    %346 = vector.shape_cast %345 : vector<1x1x32xf32> to vector<1x32xf32>
    %347 = vector.broadcast %346 : vector<1x32xf32> to vector<16x32xf32>
    %348 = arith.addf %344, %347 : vector<16x32xf32>
    %349 = arith.addf %227, %348 : vector<16x32xf32>
    %c1_170 = arith.constant 1 : index
    %c0_171 = arith.constant 0 : index
    %c0_172 = arith.constant 0 : index
    %350 = vector.load %arg13[%c1_170, %c0_171, %c0_172] : memref<2x1x32xf32, #tpu.memory_space<vmem>>, vector<1x1x32xf32>
    %351 = vector.shape_cast %350 : vector<1x1x32xf32> to vector<1x32xf32>
    %c1_173 = arith.constant 1 : index
    %c0_174 = arith.constant 0 : index
    %c0_175 = arith.constant 0 : index
    %352 = vector.load %arg14[%c1_173, %c0_174, %c0_175] : memref<2x1x32xf32, #tpu.memory_space<vmem>>, vector<1x1x32xf32>
    %353 = vector.shape_cast %352 : vector<1x1x32xf32> to vector<1x32xf32>
    %cst_176 = arith.constant dense<0.000000e+00> : vector<16xf32>
    %354 = vector.multi_reduction <add>, %349, %cst_176 [1] : vector<16x32xf32> to vector<16xf32>
    %355 = vector.shape_cast %354 : vector<16xf32> to vector<16x1xf32>
    %cst_177 = arith.constant 3.200000e+01 : f32
    %356 = vector.broadcast %cst_177 : f32 to vector<16x1xf32>
    %357 = arith.divf %355, %356 : vector<16x1xf32>
    %358 = vector.broadcast %357 : vector<16x1xf32> to vector<16x32xf32>
    %359 = arith.subf %349, %358 : vector<16x32xf32>
    %360 = arith.mulf %359, %359 : vector<16x32xf32>
    %cst_178 = arith.constant dense<0.000000e+00> : vector<16xf32>
    %361 = vector.multi_reduction <add>, %360, %cst_178 [1] : vector<16x32xf32> to vector<16xf32>
    %362 = vector.shape_cast %361 : vector<16xf32> to vector<16x1xf32>
    %cst_179 = arith.constant 3.200000e+01 : f32
    %363 = vector.broadcast %cst_179 : f32 to vector<16x1xf32>
    %364 = arith.divf %362, %363 : vector<16x1xf32>
    %365 = vector.broadcast %357 : vector<16x1xf32> to vector<16x32xf32>
    %366 = arith.subf %349, %365 : vector<16x32xf32>
    %cst_180 = arith.constant 9.99999996E-13 : f32
    %367 = vector.broadcast %cst_180 : f32 to vector<16x1xf32>
    %368 = arith.addf %364, %367 : vector<16x1xf32>
    %369 = math.rsqrt %368 : vector<16x1xf32>
    %370 = vector.broadcast %369 : vector<16x1xf32> to vector<16x32xf32>
    %371 = arith.mulf %366, %370 : vector<16x32xf32>
    %372 = vector.broadcast %351 : vector<1x32xf32> to vector<16x32xf32>
    %373 = arith.mulf %371, %372 : vector<16x32xf32>
    %374 = vector.broadcast %353 : vector<1x32xf32> to vector<16x32xf32>
    %375 = arith.addf %373, %374 : vector<16x32xf32>
    %c1_181 = arith.constant 1 : index
    %c0_182 = arith.constant 0 : index
    %c0_183 = arith.constant 0 : index
    %376 = vector.load %arg15[%c1_181, %c0_182, %c0_183] : memref<2x32x64xf32, #tpu.memory_space<vmem>>, vector<1x32x64xf32>
    %377 = vector.shape_cast %376 : vector<1x32x64xf32> to vector<32x64xf32>
    %cst_184 = arith.constant dense<0.000000e+00> : vector<16x64xf32>
    %378 = tpu.matmul %375, %377, %cst_184 {dimension_numbers = #tpu.dot_dimension_numbers<[1], [0], [0], [1], [0, 0, 1, 1], [], []>} : vector<16x32xf32>, vector<32x64xf32>, vector<16x64xf32> -> vector<16x64xf32>
    %c1_185 = arith.constant 1 : index
    %c0_186 = arith.constant 0 : index
    %c0_187 = arith.constant 0 : index
    %379 = vector.load %arg16[%c1_185, %c0_186, %c0_187] : memref<2x1x64xf32, #tpu.memory_space<vmem>>, vector<1x1x64xf32>
    %380 = vector.shape_cast %379 : vector<1x1x64xf32> to vector<1x64xf32>
    %381 = vector.broadcast %380 : vector<1x64xf32> to vector<16x64xf32>
    %382 = arith.addf %378, %381 : vector<16x64xf32>
    %cst_188 = arith.constant 5.000000e-01 : f32
    %383 = vector.broadcast %cst_188 : f32 to vector<16x64xf32>
    %384 = arith.mulf %383, %382 : vector<16x64xf32>
    %cst_189 = arith.constant 4.471500e-02 : f32
    %385 = vector.broadcast %cst_189 : f32 to vector<16x64xf32>
    %386 = arith.mulf %385, %382 : vector<16x64xf32>
    %387 = arith.mulf %386, %382 : vector<16x64xf32>
    %388 = arith.mulf %387, %382 : vector<16x64xf32>
    %389 = arith.addf %382, %388 : vector<16x64xf32>
    %cst_190 = arith.constant 0.797884583 : f32
    %390 = vector.broadcast %cst_190 : f32 to vector<16x64xf32>
    %391 = arith.mulf %390, %389 : vector<16x64xf32>
    %392 = math.tanh %391 : vector<16x64xf32>
    %cst_191 = arith.constant 1.000000e+00 : f32
    %393 = vector.broadcast %cst_191 : f32 to vector<16x64xf32>
    %394 = arith.addf %393, %392 : vector<16x64xf32>
    %395 = arith.mulf %384, %394 : vector<16x64xf32>
    %c1_192 = arith.constant 1 : index
    %c0_193 = arith.constant 0 : index
    %c0_194 = arith.constant 0 : index
    %396 = vector.load %arg17[%c1_192, %c0_193, %c0_194] : memref<2x64x32xf32, #tpu.memory_space<vmem>>, vector<1x64x32xf32>
    %397 = vector.shape_cast %396 : vector<1x64x32xf32> to vector<64x32xf32>
    %cst_195 = arith.constant dense<0.000000e+00> : vector<16x32xf32>
    %398 = tpu.matmul %395, %397, %cst_195 {dimension_numbers = #tpu.dot_dimension_numbers<[1], [0], [0], [1], [0, 0, 1, 1], [], []>} : vector<16x64xf32>, vector<64x32xf32>, vector<16x32xf32> -> vector<16x32xf32>
    %c1_196 = arith.constant 1 : index
    %c0_197 = arith.constant 0 : index
    %c0_198 = arith.constant 0 : index
    %399 = vector.load %arg18[%c1_196, %c0_197, %c0_198] : memref<2x1x32xf32, #tpu.memory_space<vmem>>, vector<1x1x32xf32>
    %400 = vector.shape_cast %399 : vector<1x1x32xf32> to vector<1x32xf32>
    %401 = vector.broadcast %400 : vector<1x32xf32> to vector<16x32xf32>
    %402 = arith.addf %398, %401 : vector<16x32xf32>
    %403 = arith.addf %375, %402 : vector<16x32xf32>
    %c1_199 = arith.constant 1 : index
    %c0_200 = arith.constant 0 : index
    %c0_201 = arith.constant 0 : index
    %404 = vector.load %arg19[%c1_199, %c0_200, %c0_201] : memref<2x1x32xf32, #tpu.memory_space<vmem>>, vector<1x1x32xf32>
    %405 = vector.shape_cast %404 : vector<1x1x32xf32> to vector<1x32xf32>
    %c1_202 = arith.constant 1 : index
    %c0_203 = arith.constant 0 : index
    %c0_204 = arith.constant 0 : index
    %406 = vector.load %arg20[%c1_202, %c0_203, %c0_204] : memref<2x1x32xf32, #tpu.memory_space<vmem>>, vector<1x1x32xf32>
    %407 = vector.shape_cast %406 : vector<1x1x32xf32> to vector<1x32xf32>
    %cst_205 = arith.constant dense<0.000000e+00> : vector<16xf32>
    %408 = vector.multi_reduction <add>, %403, %cst_205 [1] : vector<16x32xf32> to vector<16xf32>
    %409 = vector.shape_cast %408 : vector<16xf32> to vector<16x1xf32>
    %cst_206 = arith.constant 3.200000e+01 : f32
    %410 = vector.broadcast %cst_206 : f32 to vector<16x1xf32>
    %411 = arith.divf %409, %410 : vector<16x1xf32>
    %412 = vector.broadcast %411 : vector<16x1xf32> to vector<16x32xf32>
    %413 = arith.subf %403, %412 : vector<16x32xf32>
    %414 = arith.mulf %413, %413 : vector<16x32xf32>
    %cst_207 = arith.constant dense<0.000000e+00> : vector<16xf32>
    %415 = vector.multi_reduction <add>, %414, %cst_207 [1] : vector<16x32xf32> to vector<16xf32>
    %416 = vector.shape_cast %415 : vector<16xf32> to vector<16x1xf32>
    %cst_208 = arith.constant 3.200000e+01 : f32
    %417 = vector.broadcast %cst_208 : f32 to vector<16x1xf32>
    %418 = arith.divf %416, %417 : vector<16x1xf32>
    %419 = vector.broadcast %411 : vector<16x1xf32> to vector<16x32xf32>
    %420 = arith.subf %403, %419 : vector<16x32xf32>
    %cst_209 = arith.constant 9.99999996E-13 : f32
    %421 = vector.broadcast %cst_209 : f32 to vector<16x1xf32>
    %422 = arith.addf %418, %421 : vector<16x1xf32>
    %423 = math.rsqrt %422 : vector<16x1xf32>
    %424 = vector.broadcast %423 : vector<16x1xf32> to vector<16x32xf32>
    %425 = arith.mulf %420, %424 : vector<16x32xf32>
    %426 = vector.broadcast %405 : vector<1x32xf32> to vector<16x32xf32>
    %427 = arith.mulf %425, %426 : vector<16x32xf32>
    %428 = vector.broadcast %407 : vector<1x32xf32> to vector<16x32xf32>
    %429 = arith.addf %427, %428 : vector<16x32xf32>
    %c0_210 = arith.constant 0 : index
    %c0_211 = arith.constant 0 : index
    %430 = vector.load %arg21[%c0_210, %c0_211] : memref<32x32xf32, #tpu.memory_space<vmem>>, vector<32x32xf32>
    %c0_212 = arith.constant 0 : index
    %c0_213 = arith.constant 0 : index
    %431 = vector.load %arg22[%c0_212, %c0_213] : memref<1x32xf32, #tpu.memory_space<vmem>>, vector<1x32xf32>
    %432 = vector.extract_strided_slice %429 {offsets = [0, 0], sizes = [1, 32], strides = [1, 1]} : vector<16x32xf32> to vector<1x32xf32>
    %cst_214 = arith.constant dense<0.000000e+00> : vector<1x32xf32>
    %433 = tpu.matmul %432, %430, %cst_214 {dimension_numbers = #tpu.dot_dimension_numbers<[1], [0], [0], [1], [0, 0, 1, 1], [], []>} : vector<1x32xf32>, vector<32x32xf32>, vector<1x32xf32> -> vector<1x32xf32>
    %434 = arith.addf %433, %431 : vector<1x32xf32>
    %435 = math.tanh %434 : vector<1x32xf32>
    %c0_215 = arith.constant 0 : index
    %c0_216 = arith.constant 0 : index
    %436 = vector.load %arg23[%c0_215, %c0_216] : memref<2x32xf32, #tpu.memory_space<vmem>>, vector<1x32xf32>
    tpu.vector_store %arg23[%c0_215, %c0_216], %435 {strides = array<i32>} : memref<2x32xf32, #tpu.memory_space<vmem>>, vector<1x32xf32>,
    %437 = vector.extract_strided_slice %429 {offsets = [8, 0], sizes = [1, 32], strides = [1, 1]} : vector<16x32xf32> to vector<1x32xf32>
    %cst_217 = arith.constant dense<0.000000e+00> : vector<1x32xf32>
    %438 = tpu.matmul %437, %430, %cst_217 {dimension_numbers = #tpu.dot_dimension_numbers<[1], [0], [0], [1], [0, 0, 1, 1], [], []>} : vector<1x32xf32>, vector<32x32xf32>, vector<1x32xf32> -> vector<1x32xf32>
    %439 = arith.addf %438, %431 : vector<1x32xf32>
    %440 = math.tanh %439 : vector<1x32xf32>
    %c1_218 = arith.constant 1 : index
    %c0_219 = arith.constant 0 : index
    %441 = vector.load %arg23[%c1_218, %c0_219] : memref<2x32xf32, #tpu.memory_space<vmem>>, vector<1x32xf32>
    tpu.vector_store %arg23[%c1_218, %c0_219], %440 {strides = array<i32>} : memref<2x32xf32, #tpu.memory_space<vmem>>, vector<1x32xf32>,
    return
  }
}

</mosaic_0001>

<llo_original>
// kernel: tpu_custom_call.1
$region0: #{tpu_custom_call.1}
  #allocation0 [shape = 'u32[]', space=smem, size = 0x4, offset = 0x4, fixed_abs, tag = 'smem constant byte address 0x4 - core index']
  #allocation1 [shape = 'u32[144,128]{1,0:T(1,128)}', space=vmem, size = 0x12000, scoped, tag = 'internal scratch']
  %s0 = inlined_call_operand.hbm [shape: f32[16,32], index: 0, kind: input, shape index: {}]
  %s1 = inlined_call_operand.hbm [shape: f32[16,16], index: 1, kind: input, shape index: {}]
  %s2 = inlined_call_operand.hbm [shape: f32[4,1,32], index: 2, kind: input, shape index: {}]
  %s3 = inlined_call_operand.hbm [shape: f32[1,32], index: 3, kind: input, shape index: {}]
  %s4 = inlined_call_operand.hbm [shape: f32[1,32], index: 4, kind: input, shape index: {}]
  %s5 = inlined_call_operand.vmem [shape: f32[2,32,32], index: 5, kind: input, shape index: {}]
  %s6 = inlined_call_operand.hbm [shape: f32[2,1,32], index: 6, kind: input, shape index: {}]
  %s7 = inlined_call_operand.vmem [shape: f32[2,32,32], index: 7, kind: input, shape index: {}]
  %s8 = inlined_call_operand.hbm [shape: f32[2,1,32], index: 8, kind: input, shape index: {}]
  %s9 = inlined_call_operand.vmem [shape: f32[2,32,32], index: 9, kind: input, shape index: {}]
  %s10 = inlined_call_operand.hbm [shape: f32[2,1,32], index: 10, kind: input, shape index: {}]
  %s11 = inlined_call_operand.hbm [shape: f32[2,32,32], index: 11, kind: input, shape index: {}]
  %s12 = inlined_call_operand.hbm [shape: f32[2,1,32], index: 12, kind: input, shape index: {}]
  %s13 = inlined_call_operand.hbm [shape: f32[2,1,32], index: 13, kind: input, shape index: {}]
  %s14 = inlined_call_operand.hbm [shape: f32[2,1,32], index: 14, kind: input, shape index: {}]
  %s15 = inlined_call_operand.hbm [shape: f32[2,32,64], index: 15, kind: input, shape index: {}]
  %s16 = inlined_call_operand.hbm [shape: f32[2,1,64], index: 16, kind: input, shape index: {}]
  %s17 = inlined_call_operand.vmem [shape: f32[2,64,32], index: 17, kind: input, shape index: {}]
  %s18 = inlined_call_operand.hbm [shape: f32[2,1,32], index: 18, kind: input, shape index: {}]
  %s19 = inlined_call_operand.hbm [shape: f32[2,1,32], index: 19, kind: input, shape index: {}]
  %s20 = inlined_call_operand.vmem [shape: f32[2,1,32], index: 20, kind: input, shape index: {}]
  %s21 = inlined_call_operand.vmem [shape: f32[32,32], index: 21, kind: input, shape index: {}]
  %s22 = inlined_call_operand.vmem [shape: f32[1,32], index: 22, kind: input, shape index: {}]
  %s23 = inlined_call_operand.hbm [shape: f32[2,32], index: 23, kind: output, shape index: {}]
  %s24 = sld [smem:[#allocation0]]
  $region166: #{tpu_custom_call.1} parent=0
    _
  %s26 = ssub.s32 1, %s24
  %s27 = scalar_select 0, %s26, %s24
  $region1: #{tpu_custom_call.1} parent=0
    #allocation2 [shape = 'u8[8192]{0}', space=vmem, size = 0x2000, scoped, tag = 'input window, operand 0, single buffered']
    #allocation3 [shape = 's32[1]{0}', space=sflag, size = 0x4, scoped, tag = 'scoped memory for tpu_custom_call.1']
    #allocation4 [shape = 's32[1]{0}', space=sflag, size = 0x4, scoped, tag = 'scoped memory for tpu_custom_call.1']
    #allocation5 [shape = 'u8[8192]{0}', space=vmem, size = 0x2000, scoped, tag = 'input window, operand 1, single buffered']
    #allocation6 [shape = 's32[1]{0}', space=sflag, size = 0x4, scoped, tag = 'scoped memory for tpu_custom_call.1']
    #allocation7 [shape = 'u8[2048]{0}', space=vmem, size = 0x800, scoped, tag = 'input window, operand 2, single buffered']
    #allocation8 [shape = 'u8[512]{0}', space=vmem, size = 0x400, scoped, tag = 'input window, operand 3, single buffered']
    #allocation9 [shape = 's32[1]{0}', space=sflag, size = 0x4, scoped, tag = 'scoped memory for tpu_custom_call.1']
    #allocation10 [shape = 'u8[512]{0}', space=vmem, size = 0x400, scoped, tag = 'input window, operand 4, single buffered']
    #allocation11 [shape = 'u8[1024]{0}', space=vmem, size = 0x400, scoped, tag = 'input window, operand 6, single buffered']
    #allocation12 [shape = 's32[1]{0}', space=sflag, size = 0x4, scoped, tag = 'scoped memory for tpu_custom_call.1']
    #allocation13 [shape = 'u8[1024]{0}', space=vmem, size = 0x400, scoped, tag = 'input window, operand 8, single buffered']
    #allocation14 [shape = 'u8[1024]{0}', space=vmem, size = 0x400, scoped, tag = 'input window, operand 10, single buffered']
    #allocation15 [shape = 's32[1]{0}', space=sflag, size = 0x4, scoped, tag = 'scoped memory for tpu_custom_call.1']
    #allocation16 [shape = 'u8[32768]{0}', space=vmem, size = 0x8000, scoped, tag = 'input window, operand 11, single buffered']
    #allocation17 [shape = 'u8[1024]{0}', space=vmem, size = 0x400, scoped, tag = 'input window, operand 12, single buffered']
    #allocation18 [shape = 's32[1]{0}', space=sflag, size = 0x4, scoped, tag = 'scoped memory for tpu_custom_call.1']
    #allocation19 [shape = 'u8[1024]{0}', space=vmem, size = 0x400, scoped, tag = 'input window, operand 13, single buffered']
    #allocation20 [shape = 'u8[1024]{0}', space=vmem, size = 0x400, scoped, tag = 'input window, operand 14, single buffered']
    #allocation21 [shape = 's32[1]{0}', space=sflag, size = 0x4, scoped, tag = 'scoped memory for tpu_custom_call.1']
    #allocation22 [shape = 'u8[32768]{0}', space=vmem, size = 0x8000, scoped, tag = 'input window, operand 15, single buffered']
    #allocation23 [shape = 'u8[1024]{0}', space=vmem, size = 0x400, scoped, tag = 'input window, operand 16, single buffered']
    #allocation24 [shape = 's32[1]{0}', space=sflag, size = 0x4, scoped, tag = 'scoped memory for tpu_custom_call.1']
    #allocation25 [shape = 'u8[1024]{0}', space=vmem, size = 0x400, scoped, tag = 'input window, operand 18, single buffered']
    #allocation26 [shape = 'u8[1024]{0}', space=vmem, size = 0x400, scoped, tag = 'input window, operand 19, single buffered']
    #allocation27 [shape = 's32[1]{0}', space=sflag, size = 0x4, scoped, tag = 'scoped memory for tpu_custom_call.1']
    #allocation28 [shape = 'u8[1024]{0}', space=vmem, size = 0x400, scoped, tag = 'output window, operand 0, single buffered']
    %28 = vsyncpa [#allocation3], 0
    %29 = vsyncpa [#allocation6], 0
    %30 = vsyncpa [#allocation9], 0
    %31 = vsyncpa [#allocation12], 0
    %32 = vsyncpa [#allocation15], 0
    %33 = vsyncpa [#allocation18], 0
    %34 = vsyncpa [#allocation21], 0
    %35 = vsyncpa [#allocation24], 0
    %36 = vsyncpa [#allocation27], 0
    %37 = vsyncpa [#allocation4], 0
    // Predicated region
    $region2: #{tpu_custom_call.1} parent=1 // pred_check
      _
    $region3: #{tpu_custom_call.1} parent=1 // pred_check_branch
      %39 = sbr.rel (0) target = $region5
    $region4: #{tpu_custom_call.1} parent=1 // pred_region
      %s41 = ssub.s32 256, 256
      %42 = vsyncadd [#allocation3], %s41
      %s43 = sshll.u32 [#allocation2], 4
      %s44 = int_to_ptr.vmem [resolvable:$true] %s43
      %49 = dma.hbm_to_vmem [thread:$0]  %s0, 256, %s44, [#allocation3], 128, 128, 8
    $region5: #{tpu_custom_call.1} parent=1 // pred_fallthru
      _
    // Predicated region
    $region6: #{tpu_custom_call.1} parent=1 // pred_check
      _
    $region7: #{tpu_custom_call.1} parent=1 // pred_check_branch
      %51 = sbr.rel (0) target = $region9
    $region8: #{tpu_custom_call.1} parent=1 // pred_region
      %s53 = ssub.s32 256, 256
      %54 = vsyncadd [#allocation6], %s53
      %s55 = sshll.u32 [#allocation5], 4
      %s56 = int_to_ptr.vmem [resolvable:$true] %s55
      %61 = dma.hbm_to_vmem [thread:$0]  %s1, 256, %s56, [#allocation6], 128, 128, 8
    $region9: #{tpu_custom_call.1} parent=1 // pred_fallthru
      _
    // Predicated region
    $region10: #{tpu_custom_call.1} parent=1 // pred_check
      _
    $region11: #{tpu_custom_call.1} parent=1 // pred_check_branch
      %63 = sbr.rel (0) target = $region13
    $region12: #{tpu_custom_call.1} parent=1 // pred_region
      %s65 = ssub.s32 64, 64
      %66 = vsyncadd [#allocation6], %s65
      %s67 = sshll.u32 [#allocation7], 4
      %s68 = int_to_ptr.vmem [resolvable:$true] %s67
      %73 = dma.hbm_to_vmem [thread:$0]  %s2, 64, %s68, [#allocation6], 16, 16, 1
    $region13: #{tpu_custom_call.1} parent=1 // pred_fallthru
      _
    // Predicated region
    $region14: #{tpu_custom_call.1} parent=1 // pred_check
      _
    $region15: #{tpu_custom_call.1} parent=1 // pred_check_branch
      %75 = sbr.rel (0) target = $region17
    $region16: #{tpu_custom_call.1} parent=1 // pred_region
      %s77 = ssub.s32 16, 16
      %78 = vsyncadd [#allocation9], %s77
      %s80 = sshll.u32 [#allocation8], 4
      %s81 = int_to_ptr.vmem [resolvable:$true] %s80
      %83 = dma.hbm_to_vmem [thread:$0]  %s3, 16, %s81, [#allocation9]
    $region17: #{tpu_custom_call.1} parent=1 // pred_fallthru
      _
    // Predicated region
    $region18: #{tpu_custom_call.1} parent=1 // pred_check
      _
    $region19: #{tpu_custom_call.1} parent=1 // pred_check_branch
      %85 = sbr.rel (0) target = $region21
    $region20: #{tpu_custom_call.1} parent=1 // pred_region
      %s87 = ssub.s32 16, 16
      %88 = vsyncadd [#allocation9], %s87
      %s90 = sshll.u32 [#allocation10], 4
      %s91 = int_to_ptr.vmem [resolvable:$true] %s90
      %93 = dma.hbm_to_vmem [thread:$0]  %s4, 16, %s91, [#allocation9]
    $region21: #{tpu_custom_call.1} parent=1 // pred_fallthru
      _
    // Predicated region
    $region22: #{tpu_custom_call.1} parent=1 // pred_check
      _
    $region23: #{tpu_custom_call.1} parent=1 // pred_check_branch
      %95 = sbr.rel (0) target = $region25
    $region24: #{tpu_custom_call.1} parent=1 // pred_region
      _
    $region25: #{tpu_custom_call.1} parent=1 // pred_fallthru
      _
    // Predicated region
    $region26: #{tpu_custom_call.1} parent=1 // pred_check
      _
    $region27: #{tpu_custom_call.1} parent=1 // pred_check_branch
      %97 = sbr.rel (0) target = $region29
    $region28: #{tpu_custom_call.1} parent=1 // pred_region
      %s99 = ssub.s32 32, 32
      %100 = vsyncadd [#allocation12], %s99
      %s101 = sshll.u32 [#allocation11], 4
      %s102 = int_to_ptr.vmem [resolvable:$true] %s101
      %107 = dma.hbm_to_vmem [thread:$0]  %s6, 32, %s102, [#allocation12], 16, 16, 1
    $region29: #{tpu_custom_call.1} parent=1 // pred_fallthru
      _
    // Predicated region
    $region30: #{tpu_custom_call.1} parent=1 // pred_check
      _
    $region31: #{tpu_custom_call.1} parent=1 // pred_check_branch
      %109 = sbr.rel (0) target = $region33
    $region32: #{tpu_custom_call.1} parent=1 // pred_region
      _
    $region33: #{tpu_custom_call.1} parent=1 // pred_fallthru
      _
    // Predicated region
    $region34: #{tpu_custom_call.1} parent=1 // pred_check
      _
    $region35: #{tpu_custom_call.1} parent=1 // pred_check_branch
      %111 = sbr.rel (0) target = $region37
    $region36: #{tpu_custom_call.1} parent=1 // pred_region
      %s113 = ssub.s32 32, 32
      %114 = vsyncadd [#allocation12], %s113
      %s115 = sshll.u32 [#allocation13], 4
      %s116 = int_to_ptr.vmem [resolvable:$true] %s115
      %121 = dma.hbm_to_vmem [thread:$0]  %s8, 32, %s116, [#allocation12], 16, 16, 1
    $region37: #{tpu_custom_call.1} parent=1 // pred_fallthru
      _
    // Predicated region
    $region38: #{tpu_custom_call.1} parent=1 // pred_check
      _
    $region39: #{tpu_custom_call.1} parent=1 // pred_check_branch
      %123 = sbr.rel (0) target = $region41
    $region40: #{tpu_custom_call.1} parent=1 // pred_region
      _
    $region41: #{tpu_custom_call.1} parent=1 // pred_fallthru
      _
    // Predicated region
    $region42: #{tpu_custom_call.1} parent=1 // pred_check
      _
    $region43: #{tpu_custom_call.1} parent=1 // pred_check_branch
      %125 = sbr.rel (0) target = $region45
    $region44: #{tpu_custom_call.1} parent=1 // pred_region
      %s127 = ssub.s32 32, 32
      %128 = vsyncadd [#allocation15], %s127
      %s129 = sshll.u32 [#allocation14], 4
      %s130 = int_to_ptr.vmem [resolvable:$true] %s129
      %135 = dma.hbm_to_vmem [thread:$0]  %s10, 32, %s130, [#allocation15], 16, 16, 1
    $region45: #{tpu_custom_call.1} parent=1 // pred_fallthru
      _
    // Predicated region
    $region46: #{tpu_custom_call.1} parent=1 // pred_check
      _
    $region47: #{tpu_custom_call.1} parent=1 // pred_check_branch
      %137 = sbr.rel (0) target = $region49
    $region48: #{tpu_custom_call.1} parent=1 // pred_region
      %s139 = ssub.s32 1024, 1024
      %140 = vsyncadd [#allocation15], %s139
      %s141 = sshll.u32 [#allocation16], 4
      %s142 = int_to_ptr.vmem [resolvable:$true] %s141
      %147 = dma.hbm_to_vmem [thread:$0]  %s11, 1024, %s142, [#allocation15], 128, 128, 8
    $region49: #{tpu_custom_call.1} parent=1 // pred_fallthru
      _
    // Predicated region
    $region50: #{tpu_custom_call.1} parent=1 // pred_check
      _
    $region51: #{tpu_custom_call.1} parent=1 // pred_check_branch
      %149 = sbr.rel (0) target = $region53
    $region52: #{tpu_custom_call.1} parent=1 // pred_region
      %s151 = ssub.s32 32, 32
      %152 = vsyncadd [#allocation18], %s151
      %s153 = sshll.u32 [#allocation17], 4
      %s154 = int_to_ptr.vmem [resolvable:$true] %s153
      %159 = dma.hbm_to_vmem [thread:$0]  %s12, 32, %s154, [#allocation18], 16, 16, 1
    $region53: #{tpu_custom_call.1} parent=1 // pred_fallthru
      _
    // Predicated region
    $region54: #{tpu_custom_call.1} parent=1 // pred_check
      _
    $region55: #{tpu_custom_call.1} parent=1 // pred_check_branch
      %161 = sbr.rel (0) target = $region57
    $region56: #{tpu_custom_call.1} parent=1 // pred_region
      %s163 = ssub.s32 32, 32
      %164 = vsyncadd [#allocation18], %s163
      %s165 = sshll.u32 [#allocation19], 4
      %s166 = int_to_ptr.vmem [resolvable:$true] %s165
      %171 = dma.hbm_to_vmem [thread:$0]  %s13, 32, %s166, [#allocation18], 16, 16, 1
    $region57: #{tpu_custom_call.1} parent=1 // pred_fallthru
      _
    // Predicated region
    $region58: #{tpu_custom_call.1} parent=1 // pred_check
      _
    $region59: #{tpu_custom_call.1} parent=1 // pred_check_branch
      %173 = sbr.rel (0) target = $region61
    $region60: #{tpu_custom_call.1} parent=1 // pred_region
      %s175 = ssub.s32 32, 32
      %176 = vsyncadd [#allocation21], %s175
      %s177 = sshll.u32 [#allocation20], 4
      %s178 = int_to_ptr.vmem [resolvable:$true] %s177
      %183 = dma.hbm_to_vmem [thread:$0]  %s14, 32, %s178, [#allocation21], 16, 16, 1
    $region61: #{tpu_custom_call.1} parent=1 // pred_fallthru
      _
    // Predicated region
    $region62: #{tpu_custom_call.1} parent=1 // pred_check
      _
    $region63: #{tpu_custom_call.1} parent=1 // pred_check_branch
      %185 = sbr.rel (0) target = $region65
    $region64: #{tpu_custom_call.1} parent=1 // pred_region
      %s187 = ssub.s32 1024, 1024
      %188 = vsyncadd [#allocation21], %s187
      %s189 = sshll.u32 [#allocation22], 4
      %s190 = int_to_ptr.vmem [resolvable:$true] %s189
      %195 = dma.hbm_to_vmem [thread:$0]  %s15, 1024, %s190, [#allocation21], 128, 128, 8
    $region65: #{tpu_custom_call.1} parent=1 // pred_fallthru
      _
    // Predicated region
    $region66: #{tpu_custom_call.1} parent=1 // pred_check
      _
    $region67: #{tpu_custom_call.1} parent=1 // pred_check_branch
      %197 = sbr.rel (0) target = $region69
    $region68: #{tpu_custom_call.1} parent=1 // pred_region
      %s199 = ssub.s32 32, 32
      %200 = vsyncadd [#allocation24], %s199
      %s201 = sshll.u32 [#allocation23], 4
      %s202 = int_to_ptr.vmem [resolvable:$true] %s201
      %207 = dma.hbm_to_vmem [thread:$0]  %s16, 32, %s202, [#allocation24], 16, 16, 1
    $region69: #{tpu_custom_call.1} parent=1 // pred_fallthru
      _
    // Predicated region
    $region70: #{tpu_custom_call.1} parent=1 // pred_check
      _
    $region71: #{tpu_custom_call.1} parent=1 // pred_check_branch
      %209 = sbr.rel (0) target = $region73
    $region72: #{tpu_custom_call.1} parent=1 // pred_region
      _
    $region73: #{tpu_custom_call.1} parent=1 // pred_fallthru
      _
    // Predicated region
    $region74: #{tpu_custom_call.1} parent=1 // pred_check
      _
    $region75: #{tpu_custom_call.1} parent=1 // pred_check_branch
      %211 = sbr.rel (0) target = $region77
    $region76: #{tpu_custom_call.1} parent=1 // pred_region
      %s213 = ssub.s32 32, 32
      %214 = vsyncadd [#allocation24], %s213
      %s215 = sshll.u32 [#allocation25], 4
      %s216 = int_to_ptr.vmem [resolvable:$true] %s215
      %221 = dma.hbm_to_vmem [thread:$0]  %s18, 32, %s216, [#allocation24], 16, 16, 1
    $region77: #{tpu_custom_call.1} parent=1 // pred_fallthru
      _
    // Predicated region
    $region78: #{tpu_custom_call.1} parent=1 // pred_check
      _
    $region79: #{tpu_custom_call.1} parent=1 // pred_check_branch
      %223 = sbr.rel (0) target = $region81
    $region80: #{tpu_custom_call.1} parent=1 // pred_region
      %s225 = ssub.s32 32, 32
      %226 = vsyncadd [#allocation27], %s225
      %s227 = sshll.u32 [#allocation26], 4
      %s228 = int_to_ptr.vmem [resolvable:$true] %s227
      %233 = dma.hbm_to_vmem [thread:$0]  %s19, 32, %s228, [#allocation27], 16, 16, 1
    $region81: #{tpu_custom_call.1} parent=1 // pred_fallthru
      _
    // Predicated region
    $region82: #{tpu_custom_call.1} parent=1 // pred_check
      _
    $region83: #{tpu_custom_call.1} parent=1 // pred_check_branch
      %235 = sbr.rel (0) target = $region85
    $region84: #{tpu_custom_call.1} parent=1 // pred_region
      _
    $region85: #{tpu_custom_call.1} parent=1 // pred_fallthru
      _
    // Predicated region
    $region86: #{tpu_custom_call.1} parent=1 // pred_check
      _
    $region87: #{tpu_custom_call.1} parent=1 // pred_check_branch
      %237 = sbr.rel (0) target = $region89
    $region88: #{tpu_custom_call.1} parent=1 // pred_region
      _
    $region89: #{tpu_custom_call.1} parent=1 // pred_fallthru
      _
    // Predicated region
    $region90: #{tpu_custom_call.1} parent=1 // pred_check
      _
    $region91: #{tpu_custom_call.1} parent=1 // pred_check_branch
      %239 = sbr.rel (0) target = $region93
    $region92: #{tpu_custom_call.1} parent=1 // pred_region
      _
    $region93: #{tpu_custom_call.1} parent=1 // pred_fallthru
      _
    // Predicated region
    $region94: #{tpu_custom_call.1} parent=1 // pred_check
      _
    $region95: #{tpu_custom_call.1} parent=1 // pred_check_branch
      %241 = sbr.rel (0) target = $region97
    $region96: #{tpu_custom_call.1} parent=1 // pred_region
      %242 = dma.done [#allocation3], 256
    $region97: #{tpu_custom_call.1} parent=1 // pred_fallthru
      _
    // Predicated region
    $region98: #{tpu_custom_call.1} parent=1 // pred_check
      _
    $region99: #{tpu_custom_call.1} parent=1 // pred_check_branch
      %244 = sbr.rel (0) target = $region101
    $region100: #{tpu_custom_call.1} parent=1 // pred_region
      %245 = dma.done [#allocation6], 256
    $region101: #{tpu_custom_call.1} parent=1 // pred_fallthru
      _
    // Predicated region
    $region102: #{tpu_custom_call.1} parent=1 // pred_check
      _
    $region103: #{tpu_custom_call.1} parent=1 // pred_check_branch
      %247 = sbr.rel (0) target = $region105
    $region104: #{tpu_custom_call.1} parent=1 // pred_region
      %248 = dma.done [#allocation6], 64
    $region105: #{tpu_custom_call.1} parent=1 // pred_fallthru
      _
    // Predicated region
    $region106: #{tpu_custom_call.1} parent=1 // pred_check
      _
    $region107: #{tpu_custom_call.1} parent=1 // pred_check_branch
      %250 = sbr.rel (0) target = $region109
    $region108: #{tpu_custom_call.1} parent=1 // pred_region
      %251 = dma.done [#allocation9], 16
    $region109: #{tpu_custom_call.1} parent=1 // pred_fallthru
      _
    // Predicated region
    $region110: #{tpu_custom_call.1} parent=1 // pred_check
      _
    $region111: #{tpu_custom_call.1} parent=1 // pred_check_branch
      %253 = sbr.rel (0) target = $region113
    $region112: #{tpu_custom_call.1} parent=1 // pred_region
      %254 = dma.done [#allocation9], 16
    $region113: #{tpu_custom_call.1} parent=1 // pred_fallthru
      _
    // Predicated region
    $region114: #{tpu_custom_call.1} parent=1 // pred_check
      _
    $region115: #{tpu_custom_call.1} parent=1 // pred_check_branch
      %256 = sbr.rel (0) target = $region117
    $region116: #{tpu_custom_call.1} parent=1 // pred_region
      %257 = dma.done [#allocation12], 32
    $region117: #{tpu_custom_call.1} parent=1 // pred_fallthru
      _
    // Predicated region
    $region118: #{tpu_custom_call.1} parent=1 // pred_check
      _
    $region119: #{tpu_custom_call.1} parent=1 // pred_check_branch
      %259 = sbr.rel (0) target = $region121
    $region120: #{tpu_custom_call.1} parent=1 // pred_region
      %260 = dma.done [#allocation12], 32
    $region121: #{tpu_custom_call.1} parent=1 // pred_fallthru
      _
    // Predicated region
    $region122: #{tpu_custom_call.1} parent=1 // pred_check
      _
    $region123: #{tpu_custom_call.1} parent=1 // pred_check_branch
      %262 = sbr.rel (0) target = $region125
    $region124: #{tpu_custom_call.1} parent=1 // pred_region
      %263 = dma.done [#allocation15], 32
    $region125: #{tpu_custom_call.1} parent=1 // pred_fallthru
      _
    // Predicated region
    $region126: #{tpu_custom_call.1} parent=1 // pred_check
      _
    $region127: #{tpu_custom_call.1} parent=1 // pred_check_branch
      %265 = sbr.rel (0) target = $region129
    $region128: #{tpu_custom_call.1} parent=1 // pred_region
      %266 = dma.done [#allocation15], 1024
    $region129: #{tpu_custom_call.1} parent=1 // pred_fallthru
      _
    // Predicated region
    $region130: #{tpu_custom_call.1} parent=1 // pred_check
      _
    $region131: #{tpu_custom_call.1} parent=1 // pred_check_branch
      %268 = sbr.rel (0) target = $region133
    $region132: #{tpu_custom_call.1} parent=1 // pred_region
      %269 = dma.done [#allocation18], 32
    $region133: #{tpu_custom_call.1} parent=1 // pred_fallthru
      _
    // Predicated region
    $region134: #{tpu_custom_call.1} parent=1 // pred_check
      _
    $region135: #{tpu_custom_call.1} parent=1 // pred_check_branch
      %271 = sbr.rel (0) target = $region137
    $region136: #{tpu_custom_call.1} parent=1 // pred_region
      %272 = dma.done [#allocation18], 32
    $region137: #{tpu_custom_call.1} parent=1 // pred_fallthru
      _
    // Predicated region
    $region138: #{tpu_custom_call.1} parent=1 // pred_check
      _
    $region139: #{tpu_custom_call.1} parent=1 // pred_check_branch
      %274 = sbr.rel (0) target = $region141
    $region140: #{tpu_custom_call.1} parent=1 // pred_region
      %275 = dma.done [#allocation21], 32
    $region141: #{tpu_custom_call.1} parent=1 // pred_fallthru
      _
    // Predicated region
    $region142: #{tpu_custom_call.1} parent=1 // pred_check
      _
    $region143: #{tpu_custom_call.1} parent=1 // pred_check_branch
      %277 = sbr.rel (0) target = $region145
    $region144: #{tpu_custom_call.1} parent=1 // pred_region
      %278 = dma.done [#allocation21], 1024
    $region145: #{tpu_custom_call.1} parent=1 // pred_fallthru
      _
    // Predicated region
    $region146: #{tpu_custom_call.1} parent=1 // pred_check
      _
    $region147: #{tpu_custom_call.1} parent=1 // pred_check_branch
      %280 = sbr.rel (0) target = $region149
    $region148: #{tpu_custom_call.1} parent=1 // pred_region
      %281 = dma.done [#allocation24], 32
    $region149: #{tpu_custom_call.1} parent=1 // pred_fallthru
      _
    // Predicated region
    $region150: #{tpu_custom_call.1} parent=1 // pred_check
      _
    $region151: #{tpu_custom_call.1} parent=1 // pred_check_branch
      %283 = sbr.rel (0) target = $region153
    $region152: #{tpu_custom_call.1} parent=1 // pred_region
      %284 = dma.done [#allocation24], 32
    $region153: #{tpu_custom_call.1} parent=1 // pred_fallthru
      _
    // Predicated region
    $region154: #{tpu_custom_call.1} parent=1 // pred_check
      _
    $region155: #{tpu_custom_call.1} parent=1 // pred_check_branch
      %286 = sbr.rel (0) target = $region157
    $region156: #{tpu_custom_call.1} parent=1 // pred_region
      %287 = dma.done [#allocation27], 32
    $region157: #{tpu_custom_call.1} parent=1 // pred_fallthru
      _
    %v288 = vld [vmem:[#allocation2] sm:$0xff]
    %v289 = vld [vmem:[#allocation2 + $0x8] sm:$0xff]
    %v290 = vld [vmem:[#allocation8] sm:$0x1]
    %v291 = vld [vmem:[#allocation10] sm:$0x1]
    %vm292 = vcmask 261120
    %v293 = vsel %vm292, %v288, 0.0
    %294 = vadd.xlane.f32.xlu0 %v293
    %v295 = vpop.xlane.xlu0 %294
    %v296 = vsel %vm292, %v289, 0.0
    %297 = vadd.xlane.f32.xlu0 %v296
    %v298 = vpop.xlane.xlu0 %297
    %v299 = vrcp.pop 32.0
    %v300 = vmul.f32 %v295, %v299
    %v301 = vmul.f32 %v298, %v299
    %v302 = vsub.f32 %v288, %v300
    %v303 = vsub.f32 %v289, %v301
    %v304 = vmul.f32 %v302, %v302
    %v305 = vmul.f32 %v303, %v303
    %v306 = vsel %vm292, %v304, 0.0
    %307 = vadd.xlane.f32.xlu0 %v306
    %v308 = vpop.xlane.xlu0 %307
    %v309 = vsel %vm292, %v305, 0.0
    %310 = vadd.xlane.f32.xlu0 %v309
    %v311 = vpop.xlane.xlu0 %310
    %v312 = vmul.f32 %v308, %v299
    %v313 = vmul.f32 %v311, %v299
    %v314 = vadd.f32 %v312, 1e-12
    %v315 = vadd.f32 %v313, 1e-12
    %v316 = vrsqrt.pop %v314
    %v317 = vrsqrt.pop %v315
    %v318 = vmul.f32 %v302, %v316
    %v319 = vmul.f32 %v303, %v317
    %v321 = vlaneseq
    %v322 = vshrl.u32 %v321, 7
    %v323 = vsub.s32 0, %v322
    %v324 = vrot.slane %v290, %v323
    %v326 = vmul.f32 %v318, %v324
    %v327 = vmul.f32 %v319, %v324
    %v329 = vlaneseq
    %v330 = vshrl.u32 %v329, 7
    %v331 = vsub.s32 0, %v330
    %v332 = vrot.slane %v291, %v331
    %v334 = vadd.f32 %v326, %v332
    %v335 = vadd.f32 %v327, %v332
    %v336 = vld [vmem:[#allocation5] sm:$0xff]
    %v337 = vld [vmem:[#allocation5 + $0x8] sm:$0xff]
    %v338 = vld [vmem:[%s5] sm:$0xff]
    %v339 = vld [vmem:[%s5 + $0x8] sm:$0xff]
    %v340 = vld [vmem:[%s5 + $0x10] sm:$0xff]
    %v341 = vld [vmem:[%s5 + $0x18] sm:$0xff]
    %v342 = vld [vmem:[#allocation11] sm:$0x1]
    %v344 = vlaneseq
    %v345 = vshrl.u32 %v344, 7
    %v346 = vsub.s32 0, %v345
    %v347 = vrot.slane %v342, %v346
    %v350 = vsel %vm292, %v334, 0
    %v353 = vsel %vm292, %v335, 0
    %355 = vmatprep.subr.mxu0 0.0
    %356 = vmatpush1.msra.mxu0 0.0
    %357 = vmatprep.subr.mxu0 0.0
    %358 = vmatpush1.msra.mxu0 0.0
    %359 = vmatprep.subr.mxu0 0.0
    %360 = vmatpush1.msra.mxu0 0.0
    %361 = vmatprep.subr.mxu0 0.0
    %362 = vmatpush1.msra.mxu0 0.0
    %363 = vmatprep.subr.mxu0 0.0
    %364 = vmatpush1.msra.mxu0 0.0
    %365 = vmatprep.subr.mxu0 0.0
    %366 = vmatpush1.msra.mxu0 0.0
    %367 = vmatprep.subr.mxu0 0.0
    %368 = vmatpush1.msra.mxu0 0.0
    %369 = vmatprep.subr.mxu0 0.0
    %370 = vmatpush1.msra.mxu0 0.0
    %371 = vmatprep.subr.mxu0 0.0
    %372 = vmatpush1.msra.mxu0 0.0
    %373 = vmatprep.subr.mxu0 0.0
    %374 = vmatpush1.msra.mxu0 0.0
    %375 = vmatprep.subr.mxu0 0.0
    %376 = vmatpush1.msra.mxu0 0.0
    %377 = vmatprep.subr.mxu0 0.0
    %378 = vmatpush1.msra.mxu0 0.0
    %379 = vmatprep.subr.mxu0 0.0
    %380 = vmatpush1.msra.mxu0 %v341
    %381 = vmatprep.subr.mxu0 0.0
    %382 = vmatpush1.msra.mxu0 %v340
    %383 = vmatprep.subr.mxu0 0.0
    %384 = vmatpush1.msra.mxu0 %v339
    %385 = vmatprep.subr.mxu0 0.0
    %386 = vmatpush1.msra.mxu0 %v338
    %387 = vmatprep.subr.mxu0 0.0
    %388 = vmatpush2.msra.mxu0 0.0
    %389 = vmatprep.subr.mxu0 0.0
    %390 = vmatpush2.msra.mxu0 0.0
    %391 = vmatprep.subr.mxu0 0.0
    %392 = vmatpush2.msra.mxu0 0.0
    %393 = vmatprep.subr.mxu0 0.0
    %394 = vmatpush2.msra.mxu0 0.0
    %395 = vmatprep.subr.mxu0 0.0
    %396 = vmatpush2.msra.mxu0 0.0
    %397 = vmatprep.subr.mxu0 0.0
    %398 = vmatpush2.msra.mxu0 0.0
    %399 = vmatprep.subr.mxu0 0.0
    %400 = vmatpush2.msra.mxu0 0.0
    %401 = vmatprep.subr.mxu0 0.0
    %402 = vmatpush2.msra.mxu0 0.0
    %403 = vmatprep.subr.mxu0 0.0
    %404 = vmatpush2.msra.mxu0 0.0
    %405 = vmatprep.subr.mxu0 0.0
    %406 = vmatpush2.msra.mxu0 0.0
    %407 = vmatprep.subr.mxu0 0.0
    %408 = vmatpush2.msra.mxu0 0.0
    %409 = vmatprep.subr.mxu0 0.0
    %410 = vmatpush2.msra.mxu0 0.0
    %411 = vmatprep.subr.mxu0 0.0
    %412 = vmatpush2.msra.mxu0 0.0
    %413 = vmatprep.subr.mxu0 0.0
    %414 = vmatpush2.msra.mxu0 0.0
    %415 = vmatprep.subr.mxu0 0.0
    %416 = vmatpush2.msra.mxu0 0.0
    %417 = vmatprep.subr.mxu0 0.0
    %418 = vmatpush2.msra.mxu0 0.0
    %419 = vmatprep.mubr.f32.mxu0 0.0
    %420 = vmatmul.mubr.f32.gmra.mxu0 %v350
    %v421 = vpop.f32.mrf.mxu0
    %v422 = vadd.f32 %v347, %v421
    %v423 = vpop.f32.mrf.mxu0
    %424 = vmatprep.mubr.f32.mxu0 0.0
    %425 = vmatmul.mubr.f32.gmra.mxu0 %v353
    %v426 = vpop.f32.mrf.mxu0
    %v427 = vadd.f32 %v347, %v426
    %v428 = vpop.f32.mrf.mxu0
    %429 = vdwg.mxu0
    %v430 = vld [vmem:[%s7] sm:$0xff]
    %v431 = vld [vmem:[%s7 + $0x8] sm:$0xff]
    %v432 = vld [vmem:[%s7 + $0x10] sm:$0xff]
    %v433 = vld [vmem:[%s7 + $0x18] sm:$0xff]
    %v434 = vld [vmem:[#allocation13] sm:$0x1]
    %v436 = vlaneseq
    %v437 = vshrl.u32 %v436, 7
    %v438 = vsub.s32 0, %v437
    %v439 = vrot.slane %v434, %v438
    %441 = vmatprep.subr.mxu0 0.0
    %442 = vmatpush1.msra.mxu0 0.0
    %443 = vmatprep.subr.mxu0 0.0
    %444 = vmatpush1.msra.mxu0 0.0
    %445 = vmatprep.subr.mxu0 0.0
    %446 = vmatpush1.msra.mxu0 0.0
    %447 = vmatprep.subr.mxu0 0.0
    %448 = vmatpush1.msra.mxu0 0.0
    %449 = vmatprep.subr.mxu0 0.0
    %450 = vmatpush1.msra.mxu0 0.0
    %451 = vmatprep.subr.mxu0 0.0
    %452 = vmatpush1.msra.mxu0 0.0
    %453 = vmatprep.subr.mxu0 0.0
    %454 = vmatpush1.msra.mxu0 0.0
    %455 = vmatprep.subr.mxu0 0.0
    %456 = vmatpush1.msra.mxu0 0.0
    %457 = vmatprep.subr.mxu0 0.0
    %458 = vmatpush1.msra.mxu0 0.0
    %459 = vmatprep.subr.mxu0 0.0
    %460 = vmatpush1.msra.mxu0 0.0
    %461 = vmatprep.subr.mxu0 0.0
    %462 = vmatpush1.msra.mxu0 0.0
    %463 = vmatprep.subr.mxu0 0.0
    %464 = vmatpush1.msra.mxu0 0.0
    %465 = vmatprep.subr.mxu0 0.0
    %466 = vmatpush1.msra.mxu0 %v433
    %467 = vmatprep.subr.mxu0 0.0
    %468 = vmatpush1.msra.mxu0 %v432
    %469 = vmatprep.subr.mxu0 0.0
    %470 = vmatpush1.msra.mxu0 %v431
    %471 = vmatprep.subr.mxu0 0.0
    %472 = vmatpush1.msra.mxu0 %v430
    %473 = vmatprep.subr.mxu0 0.0
    %474 = vmatpush2.msra.mxu0 0.0
    %475 = vmatprep.subr.mxu0 0.0
    %476 = vmatpush2.msra.mxu0 0.0
    %477 = vmatprep.subr.mxu0 0.0
    %478 = vmatpush2.msra.mxu0 0.0
    %479 = vmatprep.subr.mxu0 0.0
    %480 = vmatpush2.msra.mxu0 0.0
    %481 = vmatprep.subr.mxu0 0.0
    %482 = vmatpush2.msra.mxu0 0.0
    %483 = vmatprep.subr.mxu0 0.0
    %484 = vmatpush2.msra.mxu0 0.0
    %485 = vmatprep.subr.mxu0 0.0
    %486 = vmatpush2.msra.mxu0 0.0
    %487 = vmatprep.subr.mxu0 0.0
    %488 = vmatpush2.msra.mxu0 0.0
    %489 = vmatprep.subr.mxu0 0.0
    %490 = vmatpush2.msra.mxu0 0.0
    %491 = vmatprep.subr.mxu0 0.0
    %492 = vmatpush2.msra.mxu0 0.0
    %493 = vmatprep.subr.mxu0 0.0
    %494 = vmatpush2.msra.mxu0 0.0
    %495 = vmatprep.subr.mxu0 0.0
    %496 = vmatpush2.msra.mxu0 0.0
    %497 = vmatprep.subr.mxu0 0.0
    %498 = vmatpush2.msra.mxu0 0.0
    %499 = vmatprep.subr.mxu0 0.0
    %500 = vmatpush2.msra.mxu0 0.0
    %501 = vmatprep.subr.mxu0 0.0
    %502 = vmatpush2.msra.mxu0 0.0
    %503 = vmatprep.subr.mxu0 0.0
    %504 = vmatpush2.msra.mxu0 0.0
    %505 = vmatprep.mubr.f32.mxu0 0.0
    %506 = vmatmul.mubr.f32.gmra.mxu0 %v350
    %v507 = vpop.f32.mrf.mxu0
    %v508 = vadd.f32 %v439, %v507
    %v509 = vpop.f32.mrf.mxu0
    %510 = vmatprep.mubr.f32.mxu0 0.0
    %511 = vmatmul.mubr.f32.gmra.mxu0 %v353
    %v512 = vpop.f32.mrf.mxu0
    %v513 = vadd.f32 %v439, %v512
    %v514 = vpop.f32.mrf.mxu0
    %515 = vdwg.mxu0
    %v516 = vld [vmem:[%s9] sm:$0xff]
    %v517 = vld [vmem:[%s9 + $0x8] sm:$0xff]
    %v518 = vld [vmem:[%s9 + $0x10] sm:$0xff]
    %v519 = vld [vmem:[%s9 + $0x18] sm:$0xff]
    %v520 = vld [vmem:[#allocation14] sm:$0x1]
    %v522 = vlaneseq
    %v523 = vshrl.u32 %v522, 7
    %v524 = vsub.s32 0, %v523
    %v525 = vrot.slane %v520, %v524
    %527 = vmatprep.subr.mxu0 0.0
    %528 = vmatpush1.msra.mxu0 0.0
    %529 = vmatprep.subr.mxu0 0.0
    %530 = vmatpush1.msra.mxu0 0.0
    %531 = vmatprep.subr.mxu0 0.0
    %532 = vmatpush1.msra.mxu0 0.0
    %533 = vmatprep.subr.mxu0 0.0
    %534 = vmatpush1.msra.mxu0 0.0
    %535 = vmatprep.subr.mxu0 0.0
    %536 = vmatpush1.msra.mxu0 0.0
    %537 = vmatprep.subr.mxu0 0.0
    %538 = vmatpush1.msra.mxu0 0.0
    %539 = vmatprep.subr.mxu0 0.0
    %540 = vmatpush1.msra.mxu0 0.0
    %541 = vmatprep.subr.mxu0 0.0
    %542 = vmatpush1.msra.mxu0 0.0
    %543 = vmatprep.subr.mxu0 0.0
    %544 = vmatpush1.msra.mxu0 0.0
    %545 = vmatprep.subr.mxu0 0.0
    %546 = vmatpush1.msra.mxu0 0.0
    %547 = vmatprep.subr.mxu0 0.0
    %548 = vmatpush1.msra.mxu0 0.0
    %549 = vmatprep.subr.mxu0 0.0
    %550 = vmatpush1.msra.mxu0 0.0
    %551 = vmatprep.subr.mxu0 0.0
    %552 = vmatpush1.msra.mxu0 %v519
    %553 = vmatprep.subr.mxu0 0.0
    %554 = vmatpush1.msra.mxu0 %v518
    %555 = vmatprep.subr.mxu0 0.0
    %556 = vmatpush1.msra.mxu0 %v517
    %557 = vmatprep.subr.mxu0 0.0
    %558 = vmatpush1.msra.mxu0 %v516
    %559 = vmatprep.subr.mxu0 0.0
    %560 = vmatpush2.msra.mxu0 0.0
    %561 = vmatprep.subr.mxu0 0.0
    %562 = vmatpush2.msra.mxu0 0.0
    %563 = vmatprep.subr.mxu0 0.0
    %564 = vmatpush2.msra.mxu0 0.0
    %565 = vmatprep.subr.mxu0 0.0
    %566 = vmatpush2.msra.mxu0 0.0
    %567 = vmatprep.subr.mxu0 0.0
    %568 = vmatpush2.msra.mxu0 0.0
    %569 = vmatprep.subr.mxu0 0.0
    %570 = vmatpush2.msra.mxu0 0.0
    %571 = vmatprep.subr.mxu0 0.0
    %572 = vmatpush2.msra.mxu0 0.0
    %573 = vmatprep.subr.mxu0 0.0
    %574 = vmatpush2.msra.mxu0 0.0
    %575 = vmatprep.subr.mxu0 0.0
    %576 = vmatpush2.msra.mxu0 0.0
    %577 = vmatprep.subr.mxu0 0.0
    %578 = vmatpush2.msra.mxu0 0.0
    %579 = vmatprep.subr.mxu0 0.0
    %580 = vmatpush2.msra.mxu0 0.0
    %581 = vmatprep.subr.mxu0 0.0
    %582 = vmatpush2.msra.mxu0 0.0
    %583 = vmatprep.subr.mxu0 0.0
    %584 = vmatpush2.msra.mxu0 0.0
    %585 = vmatprep.subr.mxu0 0.0
    %586 = vmatpush2.msra.mxu0 0.0
    %587 = vmatprep.subr.mxu0 0.0
    %588 = vmatpush2.msra.mxu0 0.0
    %589 = vmatprep.subr.mxu0 0.0
    %590 = vmatpush2.msra.mxu0 0.0
    %591 = vmatprep.mubr.f32.mxu0 0.0
    %592 = vmatmul.mubr.f32.gmra.mxu0 %v350
    %v593 = vpop.f32.mrf.mxu0
    %v594 = vadd.f32 %v525, %v593
    %v595 = vpop.f32.mrf.mxu0
    %596 = vmatprep.mubr.f32.mxu0 0.0
    %597 = vmatmul.mubr.f32.gmra.mxu0 %v353
    %v598 = vpop.f32.mrf.mxu0
    %v599 = vadd.f32 %v525, %v598
    %v600 = vpop.f32.mrf.mxu0
    %601 = vdwg.mxu0
    %v602 = vld [vmem:[#allocation7] sm:$0x1]
    %v604 = vlaneseq
    %v605 = vshrl.u32 %v604, 7
    %v606 = vsub.s32 0, %v605
    %v607 = vrot.slane %v602, %v606
    %v609 = vmul.f32 %v422, %v607
    %v610 = vmul.f32 %v427, %v607
    %v612 = vsel %vm292, %v609, 0
    %v615 = vsel %vm292, %v610, 0
    %v618 = vsel %vm292, %v508, 0
    %v621 = vsel %vm292, %v513, 0
    %623 = vmatprep.subr.mxu0 0.0
    %624 = vmatpush1.xpose.msra.mxu0 0.0
    %625 = vmatprep.subr.mxu0 0.0
    %626 = vmatpush1.xpose.msra.mxu0 0.0
    %627 = vmatprep.subr.mxu0 0.0
    %628 = vmatpush1.xpose.msra.mxu0 0.0
    %629 = vmatprep.subr.mxu0 0.0
    %630 = vmatpush1.xpose.msra.mxu0 0.0
    %631 = vmatprep.subr.mxu0 0.0
    %632 = vmatpush1.xpose.msra.mxu0 0.0
    %633 = vmatprep.subr.mxu0 0.0
    %634 = vmatpush1.xpose.msra.mxu0 0.0
    %635 = vmatprep.subr.mxu0 0.0
    %636 = vmatpush1.xpose.msra.mxu0 0.0
    %637 = vmatprep.subr.mxu0 0.0
    %638 = vmatpush1.xpose.msra.mxu0 0.0
    %639 = vmatprep.subr.mxu0 0.0
    %640 = vmatpush1.xpose.msra.mxu0 0.0
    %641 = vmatprep.subr.mxu0 0.0
    %642 = vmatpush1.xpose.msra.mxu0 0.0
    %643 = vmatprep.subr.mxu0 0.0
    %644 = vmatpush1.xpose.msra.mxu0 0.0
    %645 = vmatprep.subr.mxu0 0.0
    %646 = vmatpush1.xpose.msra.mxu0 0.0
    %647 = vmatprep.subr.mxu0 0.0
    %648 = vmatpush1.xpose.msra.mxu0 0.0
    %649 = vmatprep.subr.mxu0 0.0
    %650 = vmatpush1.xpose.msra.mxu0 0.0
    %651 = vmatprep.subr.mxu0 0.0
    %652 = vmatpush1.xpose.msra.mxu0 %v621
    %653 = vmatprep.subr.mxu0 0.0
    %654 = vmatpush1.xpose.msra.mxu0 %v618
    %655 = vmatprep.subr.mxu0 0.0
    %656 = vmatpush2.xpose.msra.mxu0 0.0
    %657 = vmatprep.subr.mxu0 0.0
    %658 = vmatpush2.xpose.msra.mxu0 0.0
    %659 = vmatprep.subr.mxu0 0.0
    %660 = vmatpush2.xpose.msra.mxu0 0.0
    %661 = vmatprep.subr.mxu0 0.0
    %662 = vmatpush2.xpose.msra.mxu0 0.0
    %663 = vmatprep.subr.mxu0 0.0
    %664 = vmatpush2.xpose.msra.mxu0 0.0
    %665 = vmatprep.subr.mxu0 0.0
    %666 = vmatpush2.xpose.msra.mxu0 0.0
    %667 = vmatprep.subr.mxu0 0.0
    %668 = vmatpush2.xpose.msra.mxu0 0.0
    %669 = vmatprep.subr.mxu0 0.0
    %670 = vmatpush2.xpose.msra.mxu0 0.0
    %671 = vmatprep.subr.mxu0 0.0
    %672 = vmatpush2.xpose.msra.mxu0 0.0
    %673 = vmatprep.subr.mxu0 0.0
    %674 = vmatpush2.xpose.msra.mxu0 0.0
    %675 = vmatprep.subr.mxu0 0.0
    %676 = vmatpush2.xpose.msra.mxu0 0.0
    %677 = vmatprep.subr.mxu0 0.0
    %678 = vmatpush2.xpose.msra.mxu0 0.0
    %679 = vmatprep.subr.mxu0 0.0
    %680 = vmatpush2.xpose.msra.mxu0 0.0
    %681 = vmatprep.subr.mxu0 0.0
    %682 = vmatpush2.xpose.msra.mxu0 0.0
    %683 = vmatprep.subr.mxu0 0.0
    %684 = vmatpush2.xpose.msra.mxu0 0.0
    %685 = vmatprep.subr.mxu0 0.0
    %686 = vmatpush2.xpose.msra.mxu0 0.0
    %687 = vmatprep.mubr.f32.mxu0 0.0
    %688 = vmatmul.mubr.f32.gmra.mxu0 %v612
    %v689 = vpop.f32.mrf.mxu0
    %v690 = vadd.f32 0.0, %v689
    %v691 = vpop.f32.mrf.mxu0
    %692 = vmatprep.mubr.f32.mxu0 0.0
    %693 = vmatmul.mubr.f32.gmra.mxu0 %v615
    %v694 = vpop.f32.mrf.mxu0
    %v695 = vadd.f32 0.0, %v694
    %v696 = vpop.f32.mrf.mxu0
    %697 = vdwg.mxu0
    %v698 = vmul.f32 %v690, 0.35355338
    %v699 = vmul.f32 %v695, 0.35355338
    %v700 = vadd.f32 %v698, %v336
    %v701 = vadd.f32 %v699, %v337
    %vm702 = vcmask 130048
    %v703 = vsel %vm702, %v700, -inf
    %704 = vmax.xlane.f32.xlu0 %v703
    %v705 = vpop.xlane.xlu0 %704
    %v706 = vsel %vm702, %v701, -inf
    %707 = vmax.xlane.f32.xlu0 %v706
    %v708 = vpop.xlane.xlu0 %707
    %v709 = vsub.f32 %v700, %v705
    %v710 = vsub.f32 %v701, %v708
    %v711 = vmul.f32 %v709, 1.442695
    %v712 = vpow.pop %v711
    %v713 = vmul.f32 %v710, 1.442695
    %v714 = vpow.pop %v713
    %v715 = vsel %vm702, %v712, 0.0
    %716 = vadd.xlane.f32.xlu0 %v715
    %v717 = vpop.xlane.xlu0 %716
    %v718 = vsel %vm702, %v714, 0.0
    %719 = vadd.xlane.f32.xlu0 %v718
    %v720 = vpop.xlane.xlu0 %719
    %v721 = vrcp.pop %v717
    %v722 = vrcp.pop %v720
    %v723 = vmul.f32 %v712, %v721
    %v724 = vmul.f32 %v714, %v722
    %v725 = vmul.f32 %v594, %v607
    %v726 = vmul.f32 %v599, %v607
    %s727 = scalar_lea.vmem [#allocation7], 1
    %v728 = vld [vmem:[%s727] sm:$0x1]
    %v730 = vlaneseq
    %v731 = vshrl.u32 %v730, 7
    %v732 = vsub.s32 0, %v731
    %v733 = vrot.slane %v728, %v732
    %v735 = vmul.f32 %v422, %v733
    %v736 = vmul.f32 %v427, %v733
    %v738 = vsel %vm292, %v735, 0
    %v741 = vsel %vm292, %v736, 0
    %743 = vmatprep.subr.mxu0 0.0
    %744 = vmatpush1.xpose.msra.mxu0 0.0
    %745 = vmatprep.subr.mxu0 0.0
    %746 = vmatpush1.xpose.msra.mxu0 0.0
    %747 = vmatprep.subr.mxu0 0.0
    %748 = vmatpush1.xpose.msra.mxu0 0.0
    %749 = vmatprep.subr.mxu0 0.0
    %750 = vmatpush1.xpose.msra.mxu0 0.0
    %751 = vmatprep.subr.mxu0 0.0
    %752 = vmatpush1.xpose.msra.mxu0 0.0
    %753 = vmatprep.subr.mxu0 0.0
    %754 = vmatpush1.xpose.msra.mxu0 0.0
    %755 = vmatprep.subr.mxu0 0.0
    %756 = vmatpush1.xpose.msra.mxu0 0.0
    %757 = vmatprep.subr.mxu0 0.0
    %758 = vmatpush1.xpose.msra.mxu0 0.0
    %759 = vmatprep.subr.mxu0 0.0
    %760 = vmatpush1.xpose.msra.mxu0 0.0
    %761 = vmatprep.subr.mxu0 0.0
    %762 = vmatpush1.xpose.msra.mxu0 0.0
    %763 = vmatprep.subr.mxu0 0.0
    %764 = vmatpush1.xpose.msra.mxu0 0.0
    %765 = vmatprep.subr.mxu0 0.0
    %766 = vmatpush1.xpose.msra.mxu0 0.0
    %767 = vmatprep.subr.mxu0 0.0
    %768 = vmatpush1.xpose.msra.mxu0 0.0
    %769 = vmatprep.subr.mxu0 0.0
    %770 = vmatpush1.xpose.msra.mxu0 0.0
    %771 = vmatprep.subr.mxu0 0.0
    %772 = vmatpush1.xpose.msra.mxu0 %v621
    %773 = vmatprep.subr.mxu0 0.0
    %774 = vmatpush1.xpose.msra.mxu0 %v618
    %775 = vmatprep.subr.mxu0 0.0
    %776 = vmatpush2.xpose.msra.mxu0 0.0
    %777 = vmatprep.subr.mxu0 0.0
    %778 = vmatpush2.xpose.msra.mxu0 0.0
    %779 = vmatprep.subr.mxu0 0.0
    %780 = vmatpush2.xpose.msra.mxu0 0.0
    %781 = vmatprep.subr.mxu0 0.0
    %782 = vmatpush2.xpose.msra.mxu0 0.0
    %783 = vmatprep.subr.mxu0 0.0
    %784 = vmatpush2.xpose.msra.mxu0 0.0
    %785 = vmatprep.subr.mxu0 0.0
    %786 = vmatpush2.xpose.msra.mxu0 0.0
    %787 = vmatprep.subr.mxu0 0.0
    %788 = vmatpush2.xpose.msra.mxu0 0.0
    %789 = vmatprep.subr.mxu0 0.0
    %790 = vmatpush2.xpose.msra.mxu0 0.0
    %791 = vmatprep.subr.mxu0 0.0
    %792 = vmatpush2.xpose.msra.mxu0 0.0
    %793 = vmatprep.subr.mxu0 0.0
    %794 = vmatpush2.xpose.msra.mxu0 0.0
    %795 = vmatprep.subr.mxu0 0.0
    %796 = vmatpush2.xpose.msra.mxu0 0.0
    %797 = vmatprep.subr.mxu0 0.0
    %798 = vmatpush2.xpose.msra.mxu0 0.0
    %799 = vmatprep.subr.mxu0 0.0
    %800 = vmatpush2.xpose.msra.mxu0 0.0
    %801 = vmatprep.subr.mxu0 0.0
    %802 = vmatpush2.xpose.msra.mxu0 0.0
    %803 = vmatprep.subr.mxu0 0.0
    %804 = vmatpush2.xpose.msra.mxu0 0.0
    %805 = vmatprep.subr.mxu0 0.0
    %806 = vmatpush2.xpose.msra.mxu0 0.0
    %807 = vmatprep.mubr.f32.mxu0 0.0
    %808 = vmatmul.mubr.f32.gmra.mxu0 %v738
    %v809 = vpop.f32.mrf.mxu0
    %v810 = vadd.f32 0.0, %v809
    %v811 = vpop.f32.mrf.mxu0
    %812 = vmatprep.mubr.f32.mxu0 0.0
    %813 = vmatmul.mubr.f32.gmra.mxu0 %v741
    %v814 = vpop.f32.mrf.mxu0
    %v815 = vadd.f32 0.0, %v814
    %v816 = vpop.f32.mrf.mxu0
    %817 = vdwg.mxu0
    %v818 = vmul.f32 %v810, 0.35355338
    %v819 = vmul.f32 %v815, 0.35355338
    %v820 = vadd.f32 %v818, %v336
    %v821 = vadd.f32 %v819, %v337
    %v822 = vsel %vm702, %v820, -inf
    %823 = vmax.xlane.f32.xlu0 %v822
    %v824 = vpop.xlane.xlu0 %823
    %v825 = vsel %vm702, %v821, -inf
    %826 = vmax.xlane.f32.xlu0 %v825
    %v827 = vpop.xlane.xlu0 %826
    %v828 = vsub.f32 %v820, %v824
    %v829 = vsub.f32 %v821, %v827
    %v830 = vmul.f32 %v828, 1.442695
    %v831 = vpow.pop %v830
    %v832 = vmul.f32 %v829, 1.442695
    %v833 = vpow.pop %v832
    %v834 = vsel %vm702, %v831, 0.0
    %835 = vadd.xlane.f32.xlu0 %v834
    %v836 = vpop.xlane.xlu0 %835
    %v837 = vsel %vm702, %v833, 0.0
    %838 = vadd.xlane.f32.xlu0 %v837
    %v839 = vpop.xlane.xlu0 %838
    %v840 = vrcp.pop %v836
    %v841 = vrcp.pop %v839
    %v842 = vmul.f32 %v831, %v840
    %v843 = vmul.f32 %v833, %v841
    %v844 = vmul.f32 %v594, %v733
    %v845 = vmul.f32 %v599, %v733
    %v847 = vsel %vm702, %v842, 0
    %v850 = vsel %vm702, %v843, 0
    %852 = vmatprep.subr.mxu0 0.0
    %853 = vmatpush1.msra.mxu0 0.0
    %854 = vmatprep.subr.mxu0 0.0
    %855 = vmatpush1.msra.mxu0 0.0
    %856 = vmatprep.subr.mxu0 0.0
    %857 = vmatpush1.msra.mxu0 0.0
    %858 = vmatprep.subr.mxu0 0.0
    %859 = vmatpush1.msra.mxu0 0.0
    %860 = vmatprep.subr.mxu0 0.0
    %861 = vmatpush1.msra.mxu0 0.0
    %862 = vmatprep.subr.mxu0 0.0
    %863 = vmatpush1.msra.mxu0 0.0
    %864 = vmatprep.subr.mxu0 0.0
    %865 = vmatpush1.msra.mxu0 0.0
    %866 = vmatprep.subr.mxu0 0.0
    %867 = vmatpush1.msra.mxu0 0.0
    %868 = vmatprep.subr.mxu0 0.0
    %869 = vmatpush1.msra.mxu0 0.0
    %870 = vmatprep.subr.mxu0 0.0
    %871 = vmatpush1.msra.mxu0 0.0
    %872 = vmatprep.subr.mxu0 0.0
    %873 = vmatpush1.msra.mxu0 0.0
    %874 = vmatprep.subr.mxu0 0.0
    %875 = vmatpush1.msra.mxu0 0.0
    %876 = vmatprep.subr.mxu0 0.0
    %877 = vmatpush1.msra.mxu0 0.0
    %878 = vmatprep.subr.mxu0 0.0
    %879 = vmatpush1.msra.mxu0 0.0
    %880 = vmatprep.subr.mxu0 0.0
    %881 = vmatpush1.msra.mxu0 %v845
    %882 = vmatprep.subr.mxu0 0.0
    %883 = vmatpush1.msra.mxu0 %v844
    %884 = vmatprep.subr.mxu0 0.0
    %885 = vmatpush2.msra.mxu0 0.0
    %886 = vmatprep.subr.mxu0 0.0
    %887 = vmatpush2.msra.mxu0 0.0
    %888 = vmatprep.subr.mxu0 0.0
    %889 = vmatpush2.msra.mxu0 0.0
    %890 = vmatprep.subr.mxu0 0.0
    %891 = vmatpush2.msra.mxu0 0.0
    %892 = vmatprep.subr.mxu0 0.0
    %893 = vmatpush2.msra.mxu0 0.0
    %894 = vmatprep.subr.mxu0 0.0
    %895 = vmatpush2.msra.mxu0 0.0
    %896 = vmatprep.subr.mxu0 0.0
    %897 = vmatpush2.msra.mxu0 0.0
    %898 = vmatprep.subr.mxu0 0.0
    %899 = vmatpush2.msra.mxu0 0.0
    %900 = vmatprep.subr.mxu0 0.0
    %901 = vmatpush2.msra.mxu0 0.0
    %902 = vmatprep.subr.mxu0 0.0
    %903 = vmatpush2.msra.mxu0 0.0
    %904 = vmatprep.subr.mxu0 0.0
    %905 = vmatpush2.msra.mxu0 0.0
    %906 = vmatprep.subr.mxu0 0.0
    %907 = vmatpush2.msra.mxu0 0.0
    %908 = vmatprep.subr.mxu0 0.0
    %909 = vmatpush2.msra.mxu0 0.0
    %910 = vmatprep.subr.mxu0 0.0
    %911 = vmatpush2.msra.mxu0 0.0
    %912 = vmatprep.subr.mxu0 0.0
    %913 = vmatpush2.msra.mxu0 0.0
    %914 = vmatprep.subr.mxu0 0.0
    %915 = vmatpush2.msra.mxu0 0.0
    %916 = vmatprep.mubr.f32.mxu0 0.0
    %917 = vmatmul.mubr.f32.gmra.mxu0 %v847
    %v918 = vpop.f32.mrf.mxu0
    %v919 = vadd.f32 0.0, %v918
    %v920 = vpop.f32.mrf.mxu0
    %921 = vmatprep.mubr.f32.mxu0 0.0
    %922 = vmatmul.mubr.f32.gmra.mxu0 %v850
    %v923 = vpop.f32.mrf.mxu0
    %v924 = vadd.f32 0.0, %v923
    %v925 = vpop.f32.mrf.mxu0
    %926 = vdwg.mxu0
    %v928 = vsel %vm702, %v723, 0
    %v931 = vsel %vm702, %v724, 0
    %933 = vmatprep.subr.mxu0 0.0
    %934 = vmatpush1.msra.mxu0 0.0
    %935 = vmatprep.subr.mxu0 0.0
    %936 = vmatpush1.msra.mxu0 0.0
    %937 = vmatprep.subr.mxu0 0.0
    %938 = vmatpush1.msra.mxu0 0.0
    %939 = vmatprep.subr.mxu0 0.0
    %940 = vmatpush1.msra.mxu0 0.0
    %941 = vmatprep.subr.mxu0 0.0
    %942 = vmatpush1.msra.mxu0 0.0
    %943 = vmatprep.subr.mxu0 0.0
    %944 = vmatpush1.msra.mxu0 0.0
    %945 = vmatprep.subr.mxu0 0.0
    %946 = vmatpush1.msra.mxu0 0.0
    %947 = vmatprep.subr.mxu0 0.0
    %948 = vmatpush1.msra.mxu0 0.0
    %949 = vmatprep.subr.mxu0 0.0
    %950 = vmatpush1.msra.mxu0 0.0
    %951 = vmatprep.subr.mxu0 0.0
    %952 = vmatpush1.msra.mxu0 0.0
    %953 = vmatprep.subr.mxu0 0.0
    %954 = vmatpush1.msra.mxu0 0.0
    %955 = vmatprep.subr.mxu0 0.0
    %956 = vmatpush1.msra.mxu0 0.0
    %957 = vmatprep.subr.mxu0 0.0
    %958 = vmatpush1.msra.mxu0 0.0
    %959 = vmatprep.subr.mxu0 0.0
    %960 = vmatpush1.msra.mxu0 0.0
    %961 = vmatprep.subr.mxu0 0.0
    %962 = vmatpush1.msra.mxu0 %v726
    %963 = vmatprep.subr.mxu0 0.0
    %964 = vmatpush1.msra.mxu0 %v725
    %965 = vmatprep.subr.mxu0 0.0
    %966 = vmatpush2.msra.mxu0 0.0
    %967 = vmatprep.subr.mxu0 0.0
    %968 = vmatpush2.msra.mxu0 0.0
    %969 = vmatprep.subr.mxu0 0.0
    %970 = vmatpush2.msra.mxu0 0.0
    %971 = vmatprep.subr.mxu0 0.0
    %972 = vmatpush2.msra.mxu0 0.0
    %973 = vmatprep.subr.mxu0 0.0
    %974 = vmatpush2.msra.mxu0 0.0
    %975 = vmatprep.subr.mxu0 0.0
    %976 = vmatpush2.msra.mxu0 0.0
    %977 = vmatprep.subr.mxu0 0.0
    %978 = vmatpush2.msra.mxu0 0.0
    %979 = vmatprep.subr.mxu0 0.0
    %980 = vmatpush2.msra.mxu0 0.0
    %981 = vmatprep.subr.mxu0 0.0
    %982 = vmatpush2.msra.mxu0 0.0
    %983 = vmatprep.subr.mxu0 0.0
    %984 = vmatpush2.msra.mxu0 0.0
    %985 = vmatprep.subr.mxu0 0.0
    %986 = vmatpush2.msra.mxu0 0.0
    %987 = vmatprep.subr.mxu0 0.0
    %988 = vmatpush2.msra.mxu0 0.0
    %989 = vmatprep.subr.mxu0 0.0
    %990 = vmatpush2.msra.mxu0 0.0
    %991 = vmatprep.subr.mxu0 0.0
    %992 = vmatpush2.msra.mxu0 0.0
    %993 = vmatprep.subr.mxu0 0.0
    %994 = vmatpush2.msra.mxu0 0.0
    %995 = vmatprep.subr.mxu0 0.0
    %996 = vmatpush2.msra.mxu0 0.0
    %997 = vmatprep.mubr.f32.mxu0 0.0
    %998 = vmatmul.mubr.f32.gmra.mxu0 %v928
    %v999 = vpop.f32.mrf.mxu0
    %v1000 = vadd.f32 %v919, %v999
    %v1001 = vpop.f32.mrf.mxu0
    %1002 = vmatprep.mubr.f32.mxu0 0.0
    %1003 = vmatmul.mubr.f32.gmra.mxu0 %v931
    %v1004 = vpop.f32.mrf.mxu0
    %v1005 = vadd.f32 %v924, %v1004
    %v1006 = vpop.f32.mrf.mxu0
    %1007 = vdwg.mxu0
    %s1008 = scalar_lea.vmem [#allocation7], 2
    %v1009 = vld [vmem:[%s1008] sm:$0x1]
    %v1011 = vlaneseq
    %v1012 = vshrl.u32 %v1011, 7
    %v1013 = vsub.s32 0, %v1012
    %v1014 = vrot.slane %v1009, %v1013
    %v1016 = vmul.f32 %v422, %v1014
    %v1017 = vmul.f32 %v427, %v1014
    %v1019 = vsel %vm292, %v1016, 0
    %v1022 = vsel %vm292, %v1017, 0
    %1024 = vmatprep.subr.mxu0 0.0
    %1025 = vmatpush1.xpose.msra.mxu0 0.0
    %1026 = vmatprep.subr.mxu0 0.0
    %1027 = vmatpush1.xpose.msra.mxu0 0.0
    %1028 = vmatprep.subr.mxu0 0.0
    %1029 = vmatpush1.xpose.msra.mxu0 0.0
    %1030 = vmatprep.subr.mxu0 0.0
    %1031 = vmatpush1.xpose.msra.mxu0 0.0
    %1032 = vmatprep.subr.mxu0 0.0
    %1033 = vmatpush1.xpose.msra.mxu0 0.0
    %1034 = vmatprep.subr.mxu0 0.0
    %1035 = vmatpush1.xpose.msra.mxu0 0.0
    %1036 = vmatprep.subr.mxu0 0.0
    %1037 = vmatpush1.xpose.msra.mxu0 0.0
    %1038 = vmatprep.subr.mxu0 0.0
    %1039 = vmatpush1.xpose.msra.mxu0 0.0
    %1040 = vmatprep.subr.mxu0 0.0
    %1041 = vmatpush1.xpose.msra.mxu0 0.0
    %1042 = vmatprep.subr.mxu0 0.0
    %1043 = vmatpush1.xpose.msra.mxu0 0.0
    %1044 = vmatprep.subr.mxu0 0.0
    %1045 = vmatpush1.xpose.msra.mxu0 0.0
    %1046 = vmatprep.subr.mxu0 0.0
    %1047 = vmatpush1.xpose.msra.mxu0 0.0
    %1048 = vmatprep.subr.mxu0 0.0
    %1049 = vmatpush1.xpose.msra.mxu0 0.0
    %1050 = vmatprep.subr.mxu0 0.0
    %1051 = vmatpush1.xpose.msra.mxu0 0.0
    %1052 = vmatprep.subr.mxu0 0.0
    %1053 = vmatpush1.xpose.msra.mxu0 %v621
    %1054 = vmatprep.subr.mxu0 0.0
    %1055 = vmatpush1.xpose.msra.mxu0 %v618
    %1056 = vmatprep.subr.mxu0 0.0
    %1057 = vmatpush2.xpose.msra.mxu0 0.0
    %1058 = vmatprep.subr.mxu0 0.0
    %1059 = vmatpush2.xpose.msra.mxu0 0.0
    %1060 = vmatprep.subr.mxu0 0.0
    %1061 = vmatpush2.xpose.msra.mxu0 0.0
    %1062 = vmatprep.subr.mxu0 0.0
    %1063 = vmatpush2.xpose.msra.mxu0 0.0
    %1064 = vmatprep.subr.mxu0 0.0
    %1065 = vmatpush2.xpose.msra.mxu0 0.0
    %1066 = vmatprep.subr.mxu0 0.0
    %1067 = vmatpush2.xpose.msra.mxu0 0.0
    %1068 = vmatprep.subr.mxu0 0.0
    %1069 = vmatpush2.xpose.msra.mxu0 0.0
    %1070 = vmatprep.subr.mxu0 0.0
    %1071 = vmatpush2.xpose.msra.mxu0 0.0
    %1072 = vmatprep.subr.mxu0 0.0
    %1073 = vmatpush2.xpose.msra.mxu0 0.0
    %1074 = vmatprep.subr.mxu0 0.0
    %1075 = vmatpush2.xpose.msra.mxu0 0.0
    %1076 = vmatprep.subr.mxu0 0.0
    %1077 = vmatpush2.xpose.msra.mxu0 0.0
    %1078 = vmatprep.subr.mxu0 0.0
    %1079 = vmatpush2.xpose.msra.mxu0 0.0
    %1080 = vmatprep.subr.mxu0 0.0
    %1081 = vmatpush2.xpose.msra.mxu0 0.0
    %1082 = vmatprep.subr.mxu0 0.0
    %1083 = vmatpush2.xpose.msra.mxu0 0.0
    %1084 = vmatprep.subr.mxu0 0.0
    %1085 = vmatpush2.xpose.msra.mxu0 0.0
    %1086 = vmatprep.subr.mxu0 0.0
    %1087 = vmatpush2.xpose.msra.mxu0 0.0
    %1088 = vmatprep.mubr.f32.mxu0 0.0
    %1089 = vmatmul.mubr.f32.gmra.mxu0 %v1019
    %v1090 = vpop.f32.mrf.mxu0
    %v1091 = vadd.f32 0.0, %v1090
    %v1092 = vpop.f32.mrf.mxu0
    %1093 = vmatprep.mubr.f32.mxu0 0.0
    %1094 = vmatmul.mubr.f32.gmra.mxu0 %v1022
    %v1095 = vpop.f32.mrf.mxu0
    %v1096 = vadd.f32 0.0, %v1095
    %v1097 = vpop.f32.mrf.mxu0
    %1098 = vdwg.mxu0
    %v1099 = vmul.f32 %v1091, 0.35355338
    %v1100 = vmul.f32 %v1096, 0.35355338
    %v1101 = vadd.f32 %v1099, %v336
    %v1102 = vadd.f32 %v1100, %v337
    %v1103 = vsel %vm702, %v1101, -inf
    %1104 = vmax.xlane.f32.xlu0 %v1103
    %v1105 = vpop.xlane.xlu0 %1104
    %v1106 = vsel %vm702, %v1102, -inf
    %1107 = vmax.xlane.f32.xlu0 %v1106
    %v1108 = vpop.xlane.xlu0 %1107
    %v1109 = vsub.f32 %v1101, %v1105
    %v1110 = vsub.f32 %v1102, %v1108
    %v1111 = vmul.f32 %v1109, 1.442695
    %v1112 = vpow.pop %v1111
    %v1113 = vmul.f32 %v1110, 1.442695
    %v1114 = vpow.pop %v1113
    %v1115 = vsel %vm702, %v1112, 0.0
    %1116 = vadd.xlane.f32.xlu0 %v1115
    %v1117 = vpop.xlane.xlu0 %1116
    %v1118 = vsel %vm702, %v1114, 0.0
    %1119 = vadd.xlane.f32.xlu0 %v1118
    %v1120 = vpop.xlane.xlu0 %1119
    %v1121 = vrcp.pop %v1117
    %v1122 = vrcp.pop %v1120
    %v1123 = vmul.f32 %v1112, %v1121
    %v1124 = vmul.f32 %v1114, %v1122
    %v1125 = vmul.f32 %v594, %v1014
    %v1126 = vmul.f32 %v599, %v1014
    %v1128 = vsel %vm702, %v1123, 0
    %v1131 = vsel %vm702, %v1124, 0
    %1133 = vmatprep.subr.mxu0 0.0
    %1134 = vmatpush1.msra.mxu0 0.0
    %1135 = vmatprep.subr.mxu0 0.0
    %1136 = vmatpush1.msra.mxu0 0.0
    %1137 = vmatprep.subr.mxu0 0.0
    %1138 = vmatpush1.msra.mxu0 0.0
    %1139 = vmatprep.subr.mxu0 0.0
    %1140 = vmatpush1.msra.mxu0 0.0
    %1141 = vmatprep.subr.mxu0 0.0
    %1142 = vmatpush1.msra.mxu0 0.0
    %1143 = vmatprep.subr.mxu0 0.0
    %1144 = vmatpush1.msra.mxu0 0.0
    %1145 = vmatprep.subr.mxu0 0.0
    %1146 = vmatpush1.msra.mxu0 0.0
    %1147 = vmatprep.subr.mxu0 0.0
    %1148 = vmatpush1.msra.mxu0 0.0
    %1149 = vmatprep.subr.mxu0 0.0
    %1150 = vmatpush1.msra.mxu0 0.0
    %1151 = vmatprep.subr.mxu0 0.0
    %1152 = vmatpush1.msra.mxu0 0.0
    %1153 = vmatprep.subr.mxu0 0.0
    %1154 = vmatpush1.msra.mxu0 0.0
    %1155 = vmatprep.subr.mxu0 0.0
    %1156 = vmatpush1.msra.mxu0 0.0
    %1157 = vmatprep.subr.mxu0 0.0
    %1158 = vmatpush1.msra.mxu0 0.0
    %1159 = vmatprep.subr.mxu0 0.0
    %1160 = vmatpush1.msra.mxu0 0.0
    %1161 = vmatprep.subr.mxu0 0.0
    %1162 = vmatpush1.msra.mxu0 %v1126
    %1163 = vmatprep.subr.mxu0 0.0
    %1164 = vmatpush1.msra.mxu0 %v1125
    %1165 = vmatprep.subr.mxu0 0.0
    %1166 = vmatpush2.msra.mxu0 0.0
    %1167 = vmatprep.subr.mxu0 0.0
    %1168 = vmatpush2.msra.mxu0 0.0
    %1169 = vmatprep.subr.mxu0 0.0
    %1170 = vmatpush2.msra.mxu0 0.0
    %1171 = vmatprep.subr.mxu0 0.0
    %1172 = vmatpush2.msra.mxu0 0.0
    %1173 = vmatprep.subr.mxu0 0.0
    %1174 = vmatpush2.msra.mxu0 0.0
    %1175 = vmatprep.subr.mxu0 0.0
    %1176 = vmatpush2.msra.mxu0 0.0
    %1177 = vmatprep.subr.mxu0 0.0
    %1178 = vmatpush2.msra.mxu0 0.0
    %1179 = vmatprep.subr.mxu0 0.0
    %1180 = vmatpush2.msra.mxu0 0.0
    %1181 = vmatprep.subr.mxu0 0.0
    %1182 = vmatpush2.msra.mxu0 0.0
    %1183 = vmatprep.subr.mxu0 0.0
    %1184 = vmatpush2.msra.mxu0 0.0
    %1185 = vmatprep.subr.mxu0 0.0
    %1186 = vmatpush2.msra.mxu0 0.0
    %1187 = vmatprep.subr.mxu0 0.0
    %1188 = vmatpush2.msra.mxu0 0.0
    %1189 = vmatprep.subr.mxu0 0.0
    %1190 = vmatpush2.msra.mxu0 0.0
    %1191 = vmatprep.subr.mxu0 0.0
    %1192 = vmatpush2.msra.mxu0 0.0
    %1193 = vmatprep.subr.mxu0 0.0
    %1194 = vmatpush2.msra.mxu0 0.0
    %1195 = vmatprep.subr.mxu0 0.0
    %1196 = vmatpush2.msra.mxu0 0.0
    %1197 = vmatprep.mubr.f32.mxu0 0.0
    %1198 = vmatmul.mubr.f32.gmra.mxu0 %v1128
    %v1199 = vpop.f32.mrf.mxu0
    %v1200 = vadd.f32 0.0, %v1199
    %v1201 = vpop.f32.mrf.mxu0
    %1202 = vmatprep.mubr.f32.mxu0 0.0
    %1203 = vmatmul.mubr.f32.gmra.mxu0 %v1131
    %v1204 = vpop.f32.mrf.mxu0
    %v1205 = vadd.f32 0.0, %v1204
    %v1206 = vpop.f32.mrf.mxu0
    %1207 = vdwg.mxu0
    %v1208 = vadd.f32 %v1000, %v1200
    %v1209 = vadd.f32 %v1005, %v1205
    %s1210 = scalar_lea.vmem [#allocation7], 3
    %v1211 = vld [vmem:[%s1210] sm:$0x1]
    %v1213 = vlaneseq
    %v1214 = vshrl.u32 %v1213, 7
    %v1215 = vsub.s32 0, %v1214
    %v1216 = vrot.slane %v1211, %v1215
    %v1218 = vmul.f32 %v422, %v1216
    %v1219 = vmul.f32 %v427, %v1216
    %v1221 = vsel %vm292, %v1218, 0
    %v1224 = vsel %vm292, %v1219, 0
    %1226 = vmatprep.subr.mxu0 0.0
    %1227 = vmatpush1.xpose.msra.mxu0 0.0
    %1228 = vmatprep.subr.mxu0 0.0
    %1229 = vmatpush1.xpose.msra.mxu0 0.0
    %1230 = vmatprep.subr.mxu0 0.0
    %1231 = vmatpush1.xpose.msra.mxu0 0.0
    %1232 = vmatprep.subr.mxu0 0.0
    %1233 = vmatpush1.xpose.msra.mxu0 0.0
    %1234 = vmatprep.subr.mxu0 0.0
    %1235 = vmatpush1.xpose.msra.mxu0 0.0
    %1236 = vmatprep.subr.mxu0 0.0
    %1237 = vmatpush1.xpose.msra.mxu0 0.0
    %1238 = vmatprep.subr.mxu0 0.0
    %1239 = vmatpush1.xpose.msra.mxu0 0.0
    %1240 = vmatprep.subr.mxu0 0.0
    %1241 = vmatpush1.xpose.msra.mxu0 0.0
    %1242 = vmatprep.subr.mxu0 0.0
    %1243 = vmatpush1.xpose.msra.mxu0 0.0
    %1244 = vmatprep.subr.mxu0 0.0
    %1245 = vmatpush1.xpose.msra.mxu0 0.0
    %1246 = vmatprep.subr.mxu0 0.0
    %1247 = vmatpush1.xpose.msra.mxu0 0.0
    %1248 = vmatprep.subr.mxu0 0.0
    %1249 = vmatpush1.xpose.msra.mxu0 0.0
    %1250 = vmatprep.subr.mxu0 0.0
    %1251 = vmatpush1.xpose.msra.mxu0 0.0
    %1252 = vmatprep.subr.mxu0 0.0
    %1253 = vmatpush1.xpose.msra.mxu0 0.0
    %1254 = vmatprep.subr.mxu0 0.0
    %1255 = vmatpush1.xpose.msra.mxu0 %v621
    %1256 = vmatprep.subr.mxu0 0.0
    %1257 = vmatpush1.xpose.msra.mxu0 %v618
    %1258 = vmatprep.subr.mxu0 0.0
    %1259 = vmatpush2.xpose.msra.mxu0 0.0
    %1260 = vmatprep.subr.mxu0 0.0
    %1261 = vmatpush2.xpose.msra.mxu0 0.0
    %1262 = vmatprep.subr.mxu0 0.0
    %1263 = vmatpush2.xpose.msra.mxu0 0.0
    %1264 = vmatprep.subr.mxu0 0.0
    %1265 = vmatpush2.xpose.msra.mxu0 0.0
    %1266 = vmatprep.subr.mxu0 0.0
    %1267 = vmatpush2.xpose.msra.mxu0 0.0
    %1268 = vmatprep.subr.mxu0 0.0
    %1269 = vmatpush2.xpose.msra.mxu0 0.0
    %1270 = vmatprep.subr.mxu0 0.0
    %1271 = vmatpush2.xpose.msra.mxu0 0.0
    %1272 = vmatprep.subr.mxu0 0.0
    %1273 = vmatpush2.xpose.msra.mxu0 0.0
    %1274 = vmatprep.subr.mxu0 0.0
    %1275 = vmatpush2.xpose.msra.mxu0 0.0
    %1276 = vmatprep.subr.mxu0 0.0
    %1277 = vmatpush2.xpose.msra.mxu0 0.0
    %1278 = vmatprep.subr.mxu0 0.0
    %1279 = vmatpush2.xpose.msra.mxu0 0.0
    %1280 = vmatprep.subr.mxu0 0.0
    %1281 = vmatpush2.xpose.msra.mxu0 0.0
    %1282 = vmatprep.subr.mxu0 0.0
    %1283 = vmatpush2.xpose.msra.mxu0 0.0
    %1284 = vmatprep.subr.mxu0 0.0
    %1285 = vmatpush2.xpose.msra.mxu0 0.0
    %1286 = vmatprep.subr.mxu0 0.0
    %1287 = vmatpush2.xpose.msra.mxu0 0.0
    %1288 = vmatprep.subr.mxu0 0.0
    %1289 = vmatpush2.xpose.msra.mxu0 0.0
    %1290 = vmatprep.mubr.f32.mxu0 0.0
    %1291 = vmatmul.mubr.f32.gmra.mxu0 %v1221
    %v1292 = vpop.f32.mrf.mxu0
    %v1293 = vadd.f32 0.0, %v1292
    %v1294 = vpop.f32.mrf.mxu0
    %1295 = vmatprep.mubr.f32.mxu0 0.0
    %1296 = vmatmul.mubr.f32.gmra.mxu0 %v1224
    %v1297 = vpop.f32.mrf.mxu0
    %v1298 = vadd.f32 0.0, %v1297
    %v1299 = vpop.f32.mrf.mxu0
    %1300 = vdwg.mxu0
    %v1301 = vmul.f32 %v1293, 0.35355338
    %v1302 = vmul.f32 %v1298, 0.35355338
    %v1303 = vadd.f32 %v1301, %v336
    %v1304 = vadd.f32 %v1302, %v337
    %v1305 = vsel %vm702, %v1303, -inf
    %1306 = vmax.xlane.f32.xlu0 %v1305
    %v1307 = vpop.xlane.xlu0 %1306
    %v1308 = vsel %vm702, %v1304, -inf
    %1309 = vmax.xlane.f32.xlu0 %v1308
    %v1310 = vpop.xlane.xlu0 %1309
    %v1311 = vsub.f32 %v1303, %v1307
    %v1312 = vsub.f32 %v1304, %v1310
    %v1313 = vmul.f32 %v1311, 1.442695
    %v1314 = vpow.pop %v1313
    %v1315 = vmul.f32 %v1312, 1.442695
    %v1316 = vpow.pop %v1315
    %v1317 = vsel %vm702, %v1314, 0.0
    %1318 = vadd.xlane.f32.xlu0 %v1317
    %v1319 = vpop.xlane.xlu0 %1318
    %v1320 = vsel %vm702, %v1316, 0.0
    %1321 = vadd.xlane.f32.xlu0 %v1320
    %v1322 = vpop.xlane.xlu0 %1321
    %v1323 = vrcp.pop %v1319
    %v1324 = vrcp.pop %v1322
    %v1325 = vmul.f32 %v1314, %v1323
    %v1326 = vmul.f32 %v1316, %v1324
    %v1327 = vmul.f32 %v594, %v1216
    %v1328 = vmul.f32 %v599, %v1216
    %v1330 = vsel %vm702, %v1325, 0
    %v1333 = vsel %vm702, %v1326, 0
    %1335 = vmatprep.subr.mxu0 0.0
    %1336 = vmatpush1.msra.mxu0 0.0
    %1337 = vmatprep.subr.mxu0 0.0
    %1338 = vmatpush1.msra.mxu0 0.0
    %1339 = vmatprep.subr.mxu0 0.0
    %1340 = vmatpush1.msra.mxu0 0.0
    %1341 = vmatprep.subr.mxu0 0.0
    %1342 = vmatpush1.msra.mxu0 0.0
    %1343 = vmatprep.subr.mxu0 0.0
    %1344 = vmatpush1.msra.mxu0 0.0
    %1345 = vmatprep.subr.mxu0 0.0
    %1346 = vmatpush1.msra.mxu0 0.0
    %1347 = vmatprep.subr.mxu0 0.0
    %1348 = vmatpush1.msra.mxu0 0.0
    %1349 = vmatprep.subr.mxu0 0.0
    %1350 = vmatpush1.msra.mxu0 0.0
    %1351 = vmatprep.subr.mxu0 0.0
    %1352 = vmatpush1.msra.mxu0 0.0
    %1353 = vmatprep.subr.mxu0 0.0
    %1354 = vmatpush1.msra.mxu0 0.0
    %1355 = vmatprep.subr.mxu0 0.0
    %1356 = vmatpush1.msra.mxu0 0.0
    %1357 = vmatprep.subr.mxu0 0.0
    %1358 = vmatpush1.msra.mxu0 0.0
    %1359 = vmatprep.subr.mxu0 0.0
    %1360 = vmatpush1.msra.mxu0 0.0
    %1361 = vmatprep.subr.mxu0 0.0
    %1362 = vmatpush1.msra.mxu0 0.0
    %1363 = vmatprep.subr.mxu0 0.0
    %1364 = vmatpush1.msra.mxu0 %v1328
    %1365 = vmatprep.subr.mxu0 0.0
    %1366 = vmatpush1.msra.mxu0 %v1327
    %1367 = vmatprep.subr.mxu0 0.0
    %1368 = vmatpush2.msra.mxu0 0.0
    %1369 = vmatprep.subr.mxu0 0.0
    %1370 = vmatpush2.msra.mxu0 0.0
    %1371 = vmatprep.subr.mxu0 0.0
    %1372 = vmatpush2.msra.mxu0 0.0
    %1373 = vmatprep.subr.mxu0 0.0
    %1374 = vmatpush2.msra.mxu0 0.0
    %1375 = vmatprep.subr.mxu0 0.0
    %1376 = vmatpush2.msra.mxu0 0.0
    %1377 = vmatprep.subr.mxu0 0.0
    %1378 = vmatpush2.msra.mxu0 0.0
    %1379 = vmatprep.subr.mxu0 0.0
    %1380 = vmatpush2.msra.mxu0 0.0
    %1381 = vmatprep.subr.mxu0 0.0
    %1382 = vmatpush2.msra.mxu0 0.0
    %1383 = vmatprep.subr.mxu0 0.0
    %1384 = vmatpush2.msra.mxu0 0.0
    %1385 = vmatprep.subr.mxu0 0.0
    %1386 = vmatpush2.msra.mxu0 0.0
    %1387 = vmatprep.subr.mxu0 0.0
    %1388 = vmatpush2.msra.mxu0 0.0
    %1389 = vmatprep.subr.mxu0 0.0
    %1390 = vmatpush2.msra.mxu0 0.0
    %1391 = vmatprep.subr.mxu0 0.0
    %1392 = vmatpush2.msra.mxu0 0.0
    %1393 = vmatprep.subr.mxu0 0.0
    %1394 = vmatpush2.msra.mxu0 0.0
    %1395 = vmatprep.subr.mxu0 0.0
    %1396 = vmatpush2.msra.mxu0 0.0
    %1397 = vmatprep.subr.mxu0 0.0
    %1398 = vmatpush2.msra.mxu0 0.0
    %1399 = vmatprep.mubr.f32.mxu0 0.0
    %1400 = vmatmul.mubr.f32.gmra.mxu0 %v1330
    %v1401 = vpop.f32.mrf.mxu0
    %v1402 = vadd.f32 0.0, %v1401
    %v1403 = vpop.f32.mrf.mxu0
    %1404 = vmatprep.mubr.f32.mxu0 0.0
    %1405 = vmatmul.mubr.f32.gmra.mxu0 %v1333
    %v1406 = vpop.f32.mrf.mxu0
    %v1407 = vadd.f32 0.0, %v1406
    %v1408 = vpop.f32.mrf.mxu0
    %1409 = vdwg.mxu0
    %v1410 = vadd.f32 %v1208, %v1402
    %v1411 = vadd.f32 %v1209, %v1407
    %v1412 = vld [vmem:[#allocation16] sm:$0xff]
    %v1413 = vld [vmem:[#allocation16 + $0x8] sm:$0xff]
    %v1414 = vld [vmem:[#allocation16 + $0x10] sm:$0xff]
    %v1415 = vld [vmem:[#allocation16 + $0x18] sm:$0xff]
    %v1416 = vld [vmem:[#allocation17] sm:$0x1]
    %v1418 = vlaneseq
    %v1419 = vshrl.u32 %v1418, 7
    %v1420 = vsub.s32 0, %v1419
    %v1421 = vrot.slane %v1416, %v1420
    %v1424 = vsel %vm292, %v1410, 0
    %v1427 = vsel %vm292, %v1411, 0
    %1429 = vmatprep.subr.mxu0 0.0
    %1430 = vmatpush1.msra.mxu0 0.0
    %1431 = vmatprep.subr.mxu0 0.0
    %1432 = vmatpush1.msra.mxu0 0.0
    %1433 = vmatprep.subr.mxu0 0.0
    %1434 = vmatpush1.msra.mxu0 0.0
    %1435 = vmatprep.subr.mxu0 0.0
    %1436 = vmatpush1.msra.mxu0 0.0
    %1437 = vmatprep.subr.mxu0 0.0
    %1438 = vmatpush1.msra.mxu0 0.0
    %1439 = vmatprep.subr.mxu0 0.0
    %1440 = vmatpush1.msra.mxu0 0.0
    %1441 = vmatprep.subr.mxu0 0.0
    %1442 = vmatpush1.msra.mxu0 0.0
    %1443 = vmatprep.subr.mxu0 0.0
    %1444 = vmatpush1.msra.mxu0 0.0
    %1445 = vmatprep.subr.mxu0 0.0
    %1446 = vmatpush1.msra.mxu0 0.0
    %1447 = vmatprep.subr.mxu0 0.0
    %1448 = vmatpush1.msra.mxu0 0.0
    %1449 = vmatprep.subr.mxu0 0.0
    %1450 = vmatpush1.msra.mxu0 0.0
    %1451 = vmatprep.subr.mxu0 0.0
    %1452 = vmatpush1.msra.mxu0 0.0
    %1453 = vmatprep.subr.mxu0 0.0
    %1454 = vmatpush1.msra.mxu0 %v1415
    %1455 = vmatprep.subr.mxu0 0.0
    %1456 = vmatpush1.msra.mxu0 %v1414
    %1457 = vmatprep.subr.mxu0 0.0
    %1458 = vmatpush1.msra.mxu0 %v1413
    %1459 = vmatprep.subr.mxu0 0.0
    %1460 = vmatpush1.msra.mxu0 %v1412
    %1461 = vmatprep.subr.mxu0 0.0
    %1462 = vmatpush2.msra.mxu0 0.0
    %1463 = vmatprep.subr.mxu0 0.0
    %1464 = vmatpush2.msra.mxu0 0.0
    %1465 = vmatprep.subr.mxu0 0.0
    %1466 = vmatpush2.msra.mxu0 0.0
    %1467 = vmatprep.subr.mxu0 0.0
    %1468 = vmatpush2.msra.mxu0 0.0
    %1469 = vmatprep.subr.mxu0 0.0
    %1470 = vmatpush2.msra.mxu0 0.0
    %1471 = vmatprep.subr.mxu0 0.0
    %1472 = vmatpush2.msra.mxu0 0.0
    %1473 = vmatprep.subr.mxu0 0.0
    %1474 = vmatpush2.msra.mxu0 0.0
    %1475 = vmatprep.subr.mxu0 0.0
    %1476 = vmatpush2.msra.mxu0 0.0
    %1477 = vmatprep.subr.mxu0 0.0
    %1478 = vmatpush2.msra.mxu0 0.0
    %1479 = vmatprep.subr.mxu0 0.0
    %1480 = vmatpush2.msra.mxu0 0.0
    %1481 = vmatprep.subr.mxu0 0.0
    %1482 = vmatpush2.msra.mxu0 0.0
    %1483 = vmatprep.subr.mxu0 0.0
    %1484 = vmatpush2.msra.mxu0 0.0
    %1485 = vmatprep.subr.mxu0 0.0
    %1486 = vmatpush2.msra.mxu0 0.0
    %1487 = vmatprep.subr.mxu0 0.0
    %1488 = vmatpush2.msra.mxu0 0.0
    %1489 = vmatprep.subr.mxu0 0.0
    %1490 = vmatpush2.msra.mxu0 0.0
    %1491 = vmatprep.subr.mxu0 0.0
    %1492 = vmatpush2.msra.mxu0 0.0
    %1493 = vmatprep.mubr.f32.mxu0 0.0
    %1494 = vmatmul.mubr.f32.gmra.mxu0 %v1424
    %v1495 = vpop.f32.mrf.mxu0
    %v1496 = vadd.f32 %v1421, %v1495
    %v1497 = vpop.f32.mrf.mxu0
    %1498 = vmatprep.mubr.f32.mxu0 0.0
    %1499 = vmatmul.mubr.f32.gmra.mxu0 %v1427
    %v1500 = vpop.f32.mrf.mxu0
    %v1501 = vadd.f32 %v1421, %v1500
    %v1502 = vpop.f32.mrf.mxu0
    %1503 = vdwg.mxu0
    %v1504 = vadd.f32 %v334, %v1496
    %v1505 = vadd.f32 %v335, %v1501
    %v1506 = vld [vmem:[#allocation19] sm:$0x1]
    %v1507 = vld [vmem:[#allocation20] sm:$0x1]
    %v1508 = vsel %vm292, %v1504, 0.0
    %1509 = vadd.xlane.f32.xlu0 %v1508
    %v1510 = vpop.xlane.xlu0 %1509
    %v1511 = vsel %vm292, %v1505, 0.0
    %1512 = vadd.xlane.f32.xlu0 %v1511
    %v1513 = vpop.xlane.xlu0 %1512
    %v1514 = vmul.f32 %v1510, %v299
    %v1515 = vmul.f32 %v1513, %v299
    %v1516 = vsub.f32 %v1504, %v1514
    %v1517 = vsub.f32 %v1505, %v1515
    %v1518 = vmul.f32 %v1516, %v1516
    %v1519 = vmul.f32 %v1517, %v1517
    %v1520 = vsel %vm292, %v1518, 0.0
    %1521 = vadd.xlane.f32.xlu0 %v1520
    %v1522 = vpop.xlane.xlu0 %1521
    %v1523 = vsel %vm292, %v1519, 0.0
    %1524 = vadd.xlane.f32.xlu0 %v1523
    %v1525 = vpop.xlane.xlu0 %1524
    %v1526 = vmul.f32 %v1522, %v299
    %v1527 = vmul.f32 %v1525, %v299
    %v1528 = vadd.f32 %v1526, 1e-12
    %v1529 = vadd.f32 %v1527, 1e-12
    %v1530 = vrsqrt.pop %v1528
    %v1531 = vrsqrt.pop %v1529
    %v1532 = vmul.f32 %v1516, %v1530
    %v1533 = vmul.f32 %v1517, %v1531
    %v1535 = vlaneseq
    %v1536 = vshrl.u32 %v1535, 7
    %v1537 = vsub.s32 0, %v1536
    %v1538 = vrot.slane %v1506, %v1537
    %v1540 = vmul.f32 %v1532, %v1538
    %v1541 = vmul.f32 %v1533, %v1538
    %v1543 = vlaneseq
    %v1544 = vshrl.u32 %v1543, 7
    %v1545 = vsub.s32 0, %v1544
    %v1546 = vrot.slane %v1507, %v1545
    %v1548 = vadd.f32 %v1540, %v1546
    %v1549 = vadd.f32 %v1541, %v1546
    %v1550 = vld [vmem:[#allocation22] sm:$0xff]
    %v1551 = vld [vmem:[#allocation22 + $0x8] sm:$0xff]
    %v1552 = vld [vmem:[#allocation22 + $0x10] sm:$0xff]
    %v1553 = vld [vmem:[#allocation22 + $0x18] sm:$0xff]
    %v1554 = vld [vmem:[#allocation23] sm:$0x1]
    %v1556 = vlaneseq
    %v1557 = vshrl.u32 %v1556, 7
    %v1558 = vsub.s32 0, %v1557
    %v1559 = vrot.slane %v1554, %v1558
    %v1562 = vsel %vm292, %v1548, 0
    %v1565 = vsel %vm292, %v1549, 0
    %1567 = vmatprep.subr.mxu0 0.0
    %1568 = vmatpush1.msra.mxu0 0.0
    %1569 = vmatprep.subr.mxu0 0.0
    %1570 = vmatpush1.msra.mxu0 0.0
    %1571 = vmatprep.subr.mxu0 0.0
    %1572 = vmatpush1.msra.mxu0 0.0
    %1573 = vmatprep.subr.mxu0 0.0
    %1574 = vmatpush1.msra.mxu0 0.0
    %1575 = vmatprep.subr.mxu0 0.0
    %1576 = vmatpush1.msra.mxu0 0.0
    %1577 = vmatprep.subr.mxu0 0.0
    %1578 = vmatpush1.msra.mxu0 0.0
    %1579 = vmatprep.subr.mxu0 0.0
    %1580 = vmatpush1.msra.mxu0 0.0
    %1581 = vmatprep.subr.mxu0 0.0
    %1582 = vmatpush1.msra.mxu0 0.0
    %1583 = vmatprep.subr.mxu0 0.0
    %1584 = vmatpush1.msra.mxu0 0.0
    %1585 = vmatprep.subr.mxu0 0.0
    %1586 = vmatpush1.msra.mxu0 0.0
    %1587 = vmatprep.subr.mxu0 0.0
    %1588 = vmatpush1.msra.mxu0 0.0
    %1589 = vmatprep.subr.mxu0 0.0
    %1590 = vmatpush1.msra.mxu0 0.0
    %1591 = vmatprep.subr.mxu0 0.0
    %1592 = vmatpush1.msra.mxu0 %v1553
    %1593 = vmatprep.subr.mxu0 0.0
    %1594 = vmatpush1.msra.mxu0 %v1552
    %1595 = vmatprep.subr.mxu0 0.0
    %1596 = vmatpush1.msra.mxu0 %v1551
    %1597 = vmatprep.subr.mxu0 0.0
    %1598 = vmatpush1.msra.mxu0 %v1550
    %1599 = vmatprep.subr.mxu0 0.0
    %1600 = vmatpush2.msra.mxu0 0.0
    %1601 = vmatprep.subr.mxu0 0.0
    %1602 = vmatpush2.msra.mxu0 0.0
    %1603 = vmatprep.subr.mxu0 0.0
    %1604 = vmatpush2.msra.mxu0 0.0
    %1605 = vmatprep.subr.mxu0 0.0
    %1606 = vmatpush2.msra.mxu0 0.0
    %1607 = vmatprep.subr.mxu0 0.0
    %1608 = vmatpush2.msra.mxu0 0.0
    %1609 = vmatprep.subr.mxu0 0.0
    %1610 = vmatpush2.msra.mxu0 0.0
    %1611 = vmatprep.subr.mxu0 0.0
    %1612 = vmatpush2.msra.mxu0 0.0
    %1613 = vmatprep.subr.mxu0 0.0
    %1614 = vmatpush2.msra.mxu0 0.0
    %1615 = vmatprep.subr.mxu0 0.0
    %1616 = vmatpush2.msra.mxu0 0.0
    %1617 = vmatprep.subr.mxu0 0.0
    %1618 = vmatpush2.msra.mxu0 0.0
    %1619 = vmatprep.subr.mxu0 0.0
    %1620 = vmatpush2.msra.mxu0 0.0
    %1621 = vmatprep.subr.mxu0 0.0
    %1622 = vmatpush2.msra.mxu0 0.0
    %1623 = vmatprep.subr.mxu0 0.0
    %1624 = vmatpush2.msra.mxu0 0.0
    %1625 = vmatprep.subr.mxu0 0.0
    %1626 = vmatpush2.msra.mxu0 0.0
    %1627 = vmatprep.subr.mxu0 0.0
    %1628 = vmatpush2.msra.mxu0 0.0
    %1629 = vmatprep.subr.mxu0 0.0
    %1630 = vmatpush2.msra.mxu0 0.0
    %1631 = vmatprep.mubr.f32.mxu0 0.0
    %1632 = vmatmul.mubr.f32.gmra.mxu0 %v1562
    %v1633 = vpop.f32.mrf.mxu0
    %v1634 = vadd.f32 %v1559, %v1633
    %v1635 = vpop.f32.mrf.mxu0
    %1636 = vmatprep.mubr.f32.mxu0 0.0
    %1637 = vmatmul.mubr.f32.gmra.mxu0 %v1565
    %v1638 = vpop.f32.mrf.mxu0
    %v1639 = vadd.f32 %v1559, %v1638
    %v1640 = vpop.f32.mrf.mxu0
    %1641 = vdwg.mxu0
    %v1642 = vmul.f32 %v1634, 0.5
    %v1643 = vmul.f32 %v1639, 0.5
    %v1644 = vmul.f32 %v1634, 0.044715
    %v1645 = vmul.f32 %v1639, 0.044715
    %v1646 = vmul.f32 %v1644, %v1634
    %v1647 = vmul.f32 %v1645, %v1639
    %v1648 = vmul.f32 %v1646, %v1634
    %v1649 = vmul.f32 %v1647, %v1639
    %v1650 = vadd.f32 %v1634, %v1648
    %v1651 = vadd.f32 %v1639, %v1649
    %v1652 = vmul.f32 %v1650, 0.7978846
    %v1653 = vmul.f32 %v1651, 0.7978846
    %v1654 = vtanh.pop %v1652
    %v1655 = vtanh.pop %v1653
    %v1656 = vadd.f32 %v1654, 1.0
    %v1657 = vadd.f32 %v1655, 1.0
    %v1658 = vmul.f32 %v1642, %v1656
    %v1659 = vmul.f32 %v1643, %v1657
    %v1660 = vld [vmem:[%s17] sm:$0xff]
    %v1661 = vld [vmem:[%s17 + $0x8] sm:$0xff]
    %v1662 = vld [vmem:[%s17 + $0x10] sm:$0xff]
    %v1663 = vld [vmem:[%s17 + $0x18] sm:$0xff]
    %v1664 = vld [vmem:[%s17 + $0x20] sm:$0xff]
    %v1665 = vld [vmem:[%s17 + $0x28] sm:$0xff]
    %v1666 = vld [vmem:[%s17 + $0x30] sm:$0xff]
    %v1667 = vld [vmem:[%s17 + $0x38] sm:$0xff]
    %v1668 = vld [vmem:[#allocation25] sm:$0x1]
    %v1670 = vlaneseq
    %v1671 = vshrl.u32 %v1670, 7
    %v1672 = vsub.s32 0, %v1671
    %v1673 = vrot.slane %v1668, %v1672
    %vm1675 = vcmask 523264
    %v1677 = vsel %vm1675, %v1658, 0
    %v1680 = vsel %vm1675, %v1659, 0
    %1682 = vmatprep.subr.mxu0 0.0
    %1683 = vmatpush1.msra.mxu0 0.0
    %1684 = vmatprep.subr.mxu0 0.0
    %1685 = vmatpush1.msra.mxu0 0.0
    %1686 = vmatprep.subr.mxu0 0.0
    %1687 = vmatpush1.msra.mxu0 0.0
    %1688 = vmatprep.subr.mxu0 0.0
    %1689 = vmatpush1.msra.mxu0 0.0
    %1690 = vmatprep.subr.mxu0 0.0
    %1691 = vmatpush1.msra.mxu0 0.0
    %1692 = vmatprep.subr.mxu0 0.0
    %1693 = vmatpush1.msra.mxu0 0.0
    %1694 = vmatprep.subr.mxu0 0.0
    %1695 = vmatpush1.msra.mxu0 0.0
    %1696 = vmatprep.subr.mxu0 0.0
    %1697 = vmatpush1.msra.mxu0 0.0
    %1698 = vmatprep.subr.mxu0 0.0
    %1699 = vmatpush1.msra.mxu0 %v1667
    %1700 = vmatprep.subr.mxu0 0.0
    %1701 = vmatpush1.msra.mxu0 %v1666
    %1702 = vmatprep.subr.mxu0 0.0
    %1703 = vmatpush1.msra.mxu0 %v1665
    %1704 = vmatprep.subr.mxu0 0.0
    %1705 = vmatpush1.msra.mxu0 %v1664
    %1706 = vmatprep.subr.mxu0 0.0
    %1707 = vmatpush1.msra.mxu0 %v1663
    %1708 = vmatprep.subr.mxu0 0.0
    %1709 = vmatpush1.msra.mxu0 %v1662
    %1710 = vmatprep.subr.mxu0 0.0
    %1711 = vmatpush1.msra.mxu0 %v1661
    %1712 = vmatprep.subr.mxu0 0.0
    %1713 = vmatpush1.msra.mxu0 %v1660
    %1714 = vmatprep.subr.mxu0 0.0
    %1715 = vmatpush2.msra.mxu0 0.0
    %1716 = vmatprep.subr.mxu0 0.0
    %1717 = vmatpush2.msra.mxu0 0.0
    %1718 = vmatprep.subr.mxu0 0.0
    %1719 = vmatpush2.msra.mxu0 0.0
    %1720 = vmatprep.subr.mxu0 0.0
    %1721 = vmatpush2.msra.mxu0 0.0
    %1722 = vmatprep.subr.mxu0 0.0
    %1723 = vmatpush2.msra.mxu0 0.0
    %1724 = vmatprep.subr.mxu0 0.0
    %1725 = vmatpush2.msra.mxu0 0.0
    %1726 = vmatprep.subr.mxu0 0.0
    %1727 = vmatpush2.msra.mxu0 0.0
    %1728 = vmatprep.subr.mxu0 0.0
    %1729 = vmatpush2.msra.mxu0 0.0
    %1730 = vmatprep.subr.mxu0 0.0
    %1731 = vmatpush2.msra.mxu0 0.0
    %1732 = vmatprep.subr.mxu0 0.0
    %1733 = vmatpush2.msra.mxu0 0.0
    %1734 = vmatprep.subr.mxu0 0.0
    %1735 = vmatpush2.msra.mxu0 0.0
    %1736 = vmatprep.subr.mxu0 0.0
    %1737 = vmatpush2.msra.mxu0 0.0
    %1738 = vmatprep.subr.mxu0 0.0
    %1739 = vmatpush2.msra.mxu0 0.0
    %1740 = vmatprep.subr.mxu0 0.0
    %1741 = vmatpush2.msra.mxu0 0.0
    %1742 = vmatprep.subr.mxu0 0.0
    %1743 = vmatpush2.msra.mxu0 0.0
    %1744 = vmatprep.subr.mxu0 0.0
    %1745 = vmatpush2.msra.mxu0 0.0
    %1746 = vmatprep.mubr.f32.mxu0 0.0
    %1747 = vmatmul.mubr.f32.gmra.mxu0 %v1677
    %v1748 = vpop.f32.mrf.mxu0
    %v1749 = vadd.f32 %v1673, %v1748
    %v1750 = vpop.f32.mrf.mxu0
    %1751 = vmatprep.mubr.f32.mxu0 0.0
    %1752 = vmatmul.mubr.f32.gmra.mxu0 %v1680
    %v1753 = vpop.f32.mrf.mxu0
    %v1754 = vadd.f32 %v1673, %v1753
    %v1755 = vpop.f32.mrf.mxu0
    %1756 = vdwg.mxu0
    %v1757 = vadd.f32 %v1548, %v1749
    %v1758 = vadd.f32 %v1549, %v1754
    %v1759 = vld [vmem:[#allocation26] sm:$0x1]
    %v1760 = vld [vmem:[%s20] sm:$0x1]
    %v1761 = vsel %vm292, %v1757, 0.0
    %1762 = vadd.xlane.f32.xlu0 %v1761
    %v1763 = vpop.xlane.xlu0 %1762
    %v1764 = vsel %vm292, %v1758, 0.0
    %1765 = vadd.xlane.f32.xlu0 %v1764
    %v1766 = vpop.xlane.xlu0 %1765
    %v1767 = vmul.f32 %v1763, %v299
    %v1768 = vmul.f32 %v1766, %v299
    %v1769 = vsub.f32 %v1757, %v1767
    %v1770 = vsub.f32 %v1758, %v1768
    %v1771 = vmul.f32 %v1769, %v1769
    %v1772 = vmul.f32 %v1770, %v1770
    %v1773 = vsel %vm292, %v1771, 0.0
    %1774 = vadd.xlane.f32.xlu0 %v1773
    %v1775 = vpop.xlane.xlu0 %1774
    %v1776 = vsel %vm292, %v1772, 0.0
    %1777 = vadd.xlane.f32.xlu0 %v1776
    %v1778 = vpop.xlane.xlu0 %1777
    %v1779 = vmul.f32 %v1775, %v299
    %v1780 = vmul.f32 %v1778, %v299
    %v1781 = vadd.f32 %v1779, 1e-12
    %v1782 = vadd.f32 %v1780, 1e-12
    %v1783 = vrsqrt.pop %v1781
    %v1784 = vrsqrt.pop %v1782
    %v1785 = vmul.f32 %v1769, %v1783
    %v1786 = vmul.f32 %v1770, %v1784
    %v1788 = vlaneseq
    %v1789 = vshrl.u32 %v1788, 7
    %v1790 = vsub.s32 0, %v1789
    %v1791 = vrot.slane %v1759, %v1790
    %v1793 = vmul.f32 %v1785, %v1791
    %v1794 = vmul.f32 %v1786, %v1791
    %v1796 = vlaneseq
    %v1797 = vshrl.u32 %v1796, 7
    %v1798 = vsub.s32 0, %v1797
    %v1799 = vrot.slane %v1760, %v1798
    %v1801 = vadd.f32 %v1793, %v1799
    %v1802 = vadd.f32 %v1794, %v1799
    %s1803 = scalar_lea.vmem %s5, 32
    %v1804 = vld [vmem:[%s1803] sm:$0xff]
    %v1805 = vld [vmem:[%s1803 + $0x8] sm:$0xff]
    %v1806 = vld [vmem:[%s1803 + $0x10] sm:$0xff]
    %v1807 = vld [vmem:[%s1803 + $0x18] sm:$0xff]
    %s1808 = scalar_lea.vmem [#allocation11], 1
    %v1809 = vld [vmem:[%s1808] sm:$0x1]
    %v1811 = vlaneseq
    %v1812 = vshrl.u32 %v1811, 7
    %v1813 = vsub.s32 0, %v1812
    %v1814 = vrot.slane %v1809, %v1813
    %v1817 = vsel %vm292, %v1801, 0
    %v1820 = vsel %vm292, %v1802, 0
    %1822 = vmatprep.subr.mxu0 0.0
    %1823 = vmatpush1.msra.mxu0 0.0
    %1824 = vmatprep.subr.mxu0 0.0
    %1825 = vmatpush1.msra.mxu0 0.0
    %1826 = vmatprep.subr.mxu0 0.0
    %1827 = vmatpush1.msra.mxu0 0.0
    %1828 = vmatprep.subr.mxu0 0.0
    %1829 = vmatpush1.msra.mxu0 0.0
    %1830 = vmatprep.subr.mxu0 0.0
    %1831 = vmatpush1.msra.mxu0 0.0
    %1832 = vmatprep.subr.mxu0 0.0
    %1833 = vmatpush1.msra.mxu0 0.0
    %1834 = vmatprep.subr.mxu0 0.0
    %1835 = vmatpush1.msra.mxu0 0.0
    %1836 = vmatprep.subr.mxu0 0.0
    %1837 = vmatpush1.msra.mxu0 0.0
    %1838 = vmatprep.subr.mxu0 0.0
    %1839 = vmatpush1.msra.mxu0 0.0
    %1840 = vmatprep.subr.mxu0 0.0
    %1841 = vmatpush1.msra.mxu0 0.0
    %1842 = vmatprep.subr.mxu0 0.0
    %1843 = vmatpush1.msra.mxu0 0.0
    %1844 = vmatprep.subr.mxu0 0.0
    %1845 = vmatpush1.msra.mxu0 0.0
    %1846 = vmatprep.subr.mxu0 0.0
    %1847 = vmatpush1.msra.mxu0 %v1807
    %1848 = vmatprep.subr.mxu0 0.0
    %1849 = vmatpush1.msra.mxu0 %v1806
    %1850 = vmatprep.subr.mxu0 0.0
    %1851 = vmatpush1.msra.mxu0 %v1805
    %1852 = vmatprep.subr.mxu0 0.0
    %1853 = vmatpush1.msra.mxu0 %v1804
    %1854 = vmatprep.subr.mxu0 0.0
    %1855 = vmatpush2.msra.mxu0 0.0
    %1856 = vmatprep.subr.mxu0 0.0
    %1857 = vmatpush2.msra.mxu0 0.0
    %1858 = vmatprep.subr.mxu0 0.0
    %1859 = vmatpush2.msra.mxu0 0.0
    %1860 = vmatprep.subr.mxu0 0.0
    %1861 = vmatpush2.msra.mxu0 0.0
    %1862 = vmatprep.subr.mxu0 0.0
    %1863 = vmatpush2.msra.mxu0 0.0
    %1864 = vmatprep.subr.mxu0 0.0
    %1865 = vmatpush2.msra.mxu0 0.0
    %1866 = vmatprep.subr.mxu0 0.0
    %1867 = vmatpush2.msra.mxu0 0.0
    %1868 = vmatprep.subr.mxu0 0.0
    %1869 = vmatpush2.msra.mxu0 0.0
    %1870 = vmatprep.subr.mxu0 0.0
    %1871 = vmatpush2.msra.mxu0 0.0
    %1872 = vmatprep.subr.mxu0 0.0
    %1873 = vmatpush2.msra.mxu0 0.0
    %1874 = vmatprep.subr.mxu0 0.0
    %1875 = vmatpush2.msra.mxu0 0.0
    %1876 = vmatprep.subr.mxu0 0.0
    %1877 = vmatpush2.msra.mxu0 0.0
    %1878 = vmatprep.subr.mxu0 0.0
    %1879 = vmatpush2.msra.mxu0 0.0
    %1880 = vmatprep.subr.mxu0 0.0
    %1881 = vmatpush2.msra.mxu0 0.0
    %1882 = vmatprep.subr.mxu0 0.0
    %1883 = vmatpush2.msra.mxu0 0.0
    %1884 = vmatprep.subr.mxu0 0.0
    %1885 = vmatpush2.msra.mxu0 0.0
    %1886 = vmatprep.mubr.f32.mxu0 0.0
    %1887 = vmatmul.mubr.f32.gmra.mxu0 %v1817
    %v1888 = vpop.f32.mrf.mxu0
    %v1889 = vadd.f32 %v1814, %v1888
    %v1890 = vpop.f32.mrf.mxu0
    %1891 = vmatprep.mubr.f32.mxu0 0.0
    %1892 = vmatmul.mubr.f32.gmra.mxu0 %v1820
    %v1893 = vpop.f32.mrf.mxu0
    %v1894 = vadd.f32 %v1814, %v1893
    %v1895 = vpop.f32.mrf.mxu0
    %1896 = vdwg.mxu0
    %s1897 = scalar_lea.vmem %s7, 32
    %v1898 = vld [vmem:[%s1897] sm:$0xff]
    %v1899 = vld [vmem:[%s1897 + $0x8] sm:$0xff]
    %v1900 = vld [vmem:[%s1897 + $0x10] sm:$0xff]
    %v1901 = vld [vmem:[%s1897 + $0x18] sm:$0xff]
    %s1902 = scalar_lea.vmem [#allocation13], 1
    %v1903 = vld [vmem:[%s1902] sm:$0x1]
    %v1905 = vlaneseq
    %v1906 = vshrl.u32 %v1905, 7
    %v1907 = vsub.s32 0, %v1906
    %v1908 = vrot.slane %v1903, %v1907
    %1910 = vmatprep.subr.mxu0 0.0
    %1911 = vmatpush1.msra.mxu0 0.0
    %1912 = vmatprep.subr.mxu0 0.0
    %1913 = vmatpush1.msra.mxu0 0.0
    %1914 = vmatprep.subr.mxu0 0.0
    %1915 = vmatpush1.msra.mxu0 0.0
    %1916 = vmatprep.subr.mxu0 0.0
    %1917 = vmatpush1.msra.mxu0 0.0
    %1918 = vmatprep.subr.mxu0 0.0
    %1919 = vmatpush1.msra.mxu0 0.0
    %1920 = vmatprep.subr.mxu0 0.0
    %1921 = vmatpush1.msra.mxu0 0.0
    %1922 = vmatprep.subr.mxu0 0.0
    %1923 = vmatpush1.msra.mxu0 0.0
    %1924 = vmatprep.subr.mxu0 0.0
    %1925 = vmatpush1.msra.mxu0 0.0
    %1926 = vmatprep.subr.mxu0 0.0
    %1927 = vmatpush1.msra.mxu0 0.0
    %1928 = vmatprep.subr.mxu0 0.0
    %1929 = vmatpush1.msra.mxu0 0.0
    %1930 = vmatprep.subr.mxu0 0.0
    %1931 = vmatpush1.msra.mxu0 0.0
    %1932 = vmatprep.subr.mxu0 0.0
    %1933 = vmatpush1.msra.mxu0 0.0
    %1934 = vmatprep.subr.mxu0 0.0
    %1935 = vmatpush1.msra.mxu0 %v1901
    %1936 = vmatprep.subr.mxu0 0.0
    %1937 = vmatpush1.msra.mxu0 %v1900
    %1938 = vmatprep.subr.mxu0 0.0
    %1939 = vmatpush1.msra.mxu0 %v1899
    %1940 = vmatprep.subr.mxu0 0.0
    %1941 = vmatpush1.msra.mxu0 %v1898
    %1942 = vmatprep.subr.mxu0 0.0
    %1943 = vmatpush2.msra.mxu0 0.0
    %1944 = vmatprep.subr.mxu0 0.0
    %1945 = vmatpush2.msra.mxu0 0.0
    %1946 = vmatprep.subr.mxu0 0.0
    %1947 = vmatpush2.msra.mxu0 0.0
    %1948 = vmatprep.subr.mxu0 0.0
    %1949 = vmatpush2.msra.mxu0 0.0
    %1950 = vmatprep.subr.mxu0 0.0
    %1951 = vmatpush2.msra.mxu0 0.0
    %1952 = vmatprep.subr.mxu0 0.0
    %1953 = vmatpush2.msra.mxu0 0.0
    %1954 = vmatprep.subr.mxu0 0.0
    %1955 = vmatpush2.msra.mxu0 0.0
    %1956 = vmatprep.subr.mxu0 0.0
    %1957 = vmatpush2.msra.mxu0 0.0
    %1958 = vmatprep.subr.mxu0 0.0
    %1959 = vmatpush2.msra.mxu0 0.0
    %1960 = vmatprep.subr.mxu0 0.0
    %1961 = vmatpush2.msra.mxu0 0.0
    %1962 = vmatprep.subr.mxu0 0.0
    %1963 = vmatpush2.msra.mxu0 0.0
    %1964 = vmatprep.subr.mxu0 0.0
    %1965 = vmatpush2.msra.mxu0 0.0
    %1966 = vmatprep.subr.mxu0 0.0
    %1967 = vmatpush2.msra.mxu0 0.0
    %1968 = vmatprep.subr.mxu0 0.0
    %1969 = vmatpush2.msra.mxu0 0.0
    %1970 = vmatprep.subr.mxu0 0.0
    %1971 = vmatpush2.msra.mxu0 0.0
    %1972 = vmatprep.subr.mxu0 0.0
    %1973 = vmatpush2.msra.mxu0 0.0
    %1974 = vmatprep.mubr.f32.mxu0 0.0
    %1975 = vmatmul.mubr.f32.gmra.mxu0 %v1817
    %v1976 = vpop.f32.mrf.mxu0
    %v1977 = vadd.f32 %v1908, %v1976
    %v1978 = vpop.f32.mrf.mxu0
    %1979 = vmatprep.mubr.f32.mxu0 0.0
    %1980 = vmatmul.mubr.f32.gmra.mxu0 %v1820
    %v1981 = vpop.f32.mrf.mxu0
    %v1982 = vadd.f32 %v1908, %v1981
    %v1983 = vpop.f32.mrf.mxu0
    %1984 = vdwg.mxu0
    %s1985 = scalar_lea.vmem %s9, 32
    %v1986 = vld [vmem:[%s1985] sm:$0xff]
    %v1987 = vld [vmem:[%s1985 + $0x8] sm:$0xff]
    %v1988 = vld [vmem:[%s1985 + $0x10] sm:$0xff]
    %v1989 = vld [vmem:[%s1985 + $0x18] sm:$0xff]
    %s1990 = scalar_lea.vmem [#allocation14], 1
    %v1991 = vld [vmem:[%s1990] sm:$0x1]
    %v1993 = vlaneseq
    %v1994 = vshrl.u32 %v1993, 7
    %v1995 = vsub.s32 0, %v1994
    %v1996 = vrot.slane %v1991, %v1995
    %1998 = vmatprep.subr.mxu0 0.0
    %1999 = vmatpush1.msra.mxu0 0.0
    %2000 = vmatprep.subr.mxu0 0.0
    %2001 = vmatpush1.msra.mxu0 0.0
    %2002 = vmatprep.subr.mxu0 0.0
    %2003 = vmatpush1.msra.mxu0 0.0
    %2004 = vmatprep.subr.mxu0 0.0
    %2005 = vmatpush1.msra.mxu0 0.0
    %2006 = vmatprep.subr.mxu0 0.0
    %2007 = vmatpush1.msra.mxu0 0.0
    %2008 = vmatprep.subr.mxu0 0.0
    %2009 = vmatpush1.msra.mxu0 0.0
    %2010 = vmatprep.subr.mxu0 0.0
    %2011 = vmatpush1.msra.mxu0 0.0
    %2012 = vmatprep.subr.mxu0 0.0
    %2013 = vmatpush1.msra.mxu0 0.0
    %2014 = vmatprep.subr.mxu0 0.0
    %2015 = vmatpush1.msra.mxu0 0.0
    %2016 = vmatprep.subr.mxu0 0.0
    %2017 = vmatpush1.msra.mxu0 0.0
    %2018 = vmatprep.subr.mxu0 0.0
    %2019 = vmatpush1.msra.mxu0 0.0
    %2020 = vmatprep.subr.mxu0 0.0
    %2021 = vmatpush1.msra.mxu0 0.0
    %2022 = vmatprep.subr.mxu0 0.0
    %2023 = vmatpush1.msra.mxu0 %v1989
    %2024 = vmatprep.subr.mxu0 0.0
    %2025 = vmatpush1.msra.mxu0 %v1988
    %2026 = vmatprep.subr.mxu0 0.0
    %2027 = vmatpush1.msra.mxu0 %v1987
    %2028 = vmatprep.subr.mxu0 0.0
    %2029 = vmatpush1.msra.mxu0 %v1986
    %2030 = vmatprep.subr.mxu0 0.0
    %2031 = vmatpush2.msra.mxu0 0.0
    %2032 = vmatprep.subr.mxu0 0.0
    %2033 = vmatpush2.msra.mxu0 0.0
    %2034 = vmatprep.subr.mxu0 0.0
    %2035 = vmatpush2.msra.mxu0 0.0
    %2036 = vmatprep.subr.mxu0 0.0
    %2037 = vmatpush2.msra.mxu0 0.0
    %2038 = vmatprep.subr.mxu0 0.0
    %2039 = vmatpush2.msra.mxu0 0.0
    %2040 = vmatprep.subr.mxu0 0.0
    %2041 = vmatpush2.msra.mxu0 0.0
    %2042 = vmatprep.subr.mxu0 0.0
    %2043 = vmatpush2.msra.mxu0 0.0
    %2044 = vmatprep.subr.mxu0 0.0
    %2045 = vmatpush2.msra.mxu0 0.0
    %2046 = vmatprep.subr.mxu0 0.0
    %2047 = vmatpush2.msra.mxu0 0.0
    %2048 = vmatprep.subr.mxu0 0.0
    %2049 = vmatpush2.msra.mxu0 0.0
    %2050 = vmatprep.subr.mxu0 0.0
    %2051 = vmatpush2.msra.mxu0 0.0
    %2052 = vmatprep.subr.mxu0 0.0
    %2053 = vmatpush2.msra.mxu0 0.0
    %2054 = vmatprep.subr.mxu0 0.0
    %2055 = vmatpush2.msra.mxu0 0.0
    %2056 = vmatprep.subr.mxu0 0.0
    %2057 = vmatpush2.msra.mxu0 0.0
    %2058 = vmatprep.subr.mxu0 0.0
    %2059 = vmatpush2.msra.mxu0 0.0
    %2060 = vmatprep.subr.mxu0 0.0
    %2061 = vmatpush2.msra.mxu0 0.0
    %2062 = vmatprep.mubr.f32.mxu0 0.0
    %2063 = vmatmul.mubr.f32.gmra.mxu0 %v1817
    %v2064 = vpop.f32.mrf.mxu0
    %v2065 = vadd.f32 %v1996, %v2064
    %v2066 = vpop.f32.mrf.mxu0
    %2067 = vmatprep.mubr.f32.mxu0 0.0
    %2068 = vmatmul.mubr.f32.gmra.mxu0 %v1820
    %v2069 = vpop.f32.mrf.mxu0
    %v2070 = vadd.f32 %v1996, %v2069
    %v2071 = vpop.f32.mrf.mxu0
    %2072 = vdwg.mxu0
    %v2073 = vmul.f32 %v1889, %v607
    %v2074 = vmul.f32 %v1894, %v607
    %v2076 = vsel %vm292, %v2073, 0
    %v2079 = vsel %vm292, %v2074, 0
    %v2082 = vsel %vm292, %v1977, 0
    %v2085 = vsel %vm292, %v1982, 0
    %2087 = vmatprep.subr.mxu0 0.0
    %2088 = vmatpush1.xpose.msra.mxu0 0.0
    %2089 = vmatprep.subr.mxu0 0.0
    %2090 = vmatpush1.xpose.msra.mxu0 0.0
    %2091 = vmatprep.subr.mxu0 0.0
    %2092 = vmatpush1.xpose.msra.mxu0 0.0
    %2093 = vmatprep.subr.mxu0 0.0
    %2094 = vmatpush1.xpose.msra.mxu0 0.0
    %2095 = vmatprep.subr.mxu0 0.0
    %2096 = vmatpush1.xpose.msra.mxu0 0.0
    %2097 = vmatprep.subr.mxu0 0.0
    %2098 = vmatpush1.xpose.msra.mxu0 0.0
    %2099 = vmatprep.subr.mxu0 0.0
    %2100 = vmatpush1.xpose.msra.mxu0 0.0
    %2101 = vmatprep.subr.mxu0 0.0
    %2102 = vmatpush1.xpose.msra.mxu0 0.0
    %2103 = vmatprep.subr.mxu0 0.0
    %2104 = vmatpush1.xpose.msra.mxu0 0.0
    %2105 = vmatprep.subr.mxu0 0.0
    %2106 = vmatpush1.xpose.msra.mxu0 0.0
    %2107 = vmatprep.subr.mxu0 0.0
    %2108 = vmatpush1.xpose.msra.mxu0 0.0
    %2109 = vmatprep.subr.mxu0 0.0
    %2110 = vmatpush1.xpose.msra.mxu0 0.0
    %2111 = vmatprep.subr.mxu0 0.0
    %2112 = vmatpush1.xpose.msra.mxu0 0.0
    %2113 = vmatprep.subr.mxu0 0.0
    %2114 = vmatpush1.xpose.msra.mxu0 0.0
    %2115 = vmatprep.subr.mxu0 0.0
    %2116 = vmatpush1.xpose.msra.mxu0 %v2085
    %2117 = vmatprep.subr.mxu0 0.0
    %2118 = vmatpush1.xpose.msra.mxu0 %v2082
    %2119 = vmatprep.subr.mxu0 0.0
    %2120 = vmatpush2.xpose.msra.mxu0 0.0
    %2121 = vmatprep.subr.mxu0 0.0
    %2122 = vmatpush2.xpose.msra.mxu0 0.0
    %2123 = vmatprep.subr.mxu0 0.0
    %2124 = vmatpush2.xpose.msra.mxu0 0.0
    %2125 = vmatprep.subr.mxu0 0.0
    %2126 = vmatpush2.xpose.msra.mxu0 0.0
    %2127 = vmatprep.subr.mxu0 0.0
    %2128 = vmatpush2.xpose.msra.mxu0 0.0
    %2129 = vmatprep.subr.mxu0 0.0
    %2130 = vmatpush2.xpose.msra.mxu0 0.0
    %2131 = vmatprep.subr.mxu0 0.0
    %2132 = vmatpush2.xpose.msra.mxu0 0.0
    %2133 = vmatprep.subr.mxu0 0.0
    %2134 = vmatpush2.xpose.msra.mxu0 0.0
    %2135 = vmatprep.subr.mxu0 0.0
    %2136 = vmatpush2.xpose.msra.mxu0 0.0
    %2137 = vmatprep.subr.mxu0 0.0
    %2138 = vmatpush2.xpose.msra.mxu0 0.0
    %2139 = vmatprep.subr.mxu0 0.0
    %2140 = vmatpush2.xpose.msra.mxu0 0.0
    %2141 = vmatprep.subr.mxu0 0.0
    %2142 = vmatpush2.xpose.msra.mxu0 0.0
    %2143 = vmatprep.subr.mxu0 0.0
    %2144 = vmatpush2.xpose.msra.mxu0 0.0
    %2145 = vmatprep.subr.mxu0 0.0
    %2146 = vmatpush2.xpose.msra.mxu0 0.0
    %2147 = vmatprep.subr.mxu0 0.0
    %2148 = vmatpush2.xpose.msra.mxu0 0.0
    %2149 = vmatprep.subr.mxu0 0.0
    %2150 = vmatpush2.xpose.msra.mxu0 0.0
    %2151 = vmatprep.mubr.f32.mxu0 0.0
    %2152 = vmatmul.mubr.f32.gmra.mxu0 %v2076
    %v2153 = vpop.f32.mrf.mxu0
    %v2154 = vadd.f32 0.0, %v2153
    %v2155 = vpop.f32.mrf.mxu0
    %2156 = vmatprep.mubr.f32.mxu0 0.0
    %2157 = vmatmul.mubr.f32.gmra.mxu0 %v2079
    %v2158 = vpop.f32.mrf.mxu0
    %v2159 = vadd.f32 0.0, %v2158
    %v2160 = vpop.f32.mrf.mxu0
    %2161 = vdwg.mxu0
    %v2162 = vmul.f32 %v2154, 0.35355338
    %v2163 = vmul.f32 %v2159, 0.35355338
    %v2164 = vadd.f32 %v2162, %v336
    %v2165 = vadd.f32 %v2163, %v337
    %v2166 = vsel %vm702, %v2164, -inf
    %2167 = vmax.xlane.f32.xlu0 %v2166
    %v2168 = vpop.xlane.xlu0 %2167
    %v2169 = vsel %vm702, %v2165, -inf
    %2170 = vmax.xlane.f32.xlu0 %v2169
    %v2171 = vpop.xlane.xlu0 %2170
    %v2172 = vsub.f32 %v2164, %v2168
    %v2173 = vsub.f32 %v2165, %v2171
    %v2174 = vmul.f32 %v2172, 1.442695
    %v2175 = vpow.pop %v2174
    %v2176 = vmul.f32 %v2173, 1.442695
    %v2177 = vpow.pop %v2176
    %v2178 = vsel %vm702, %v2175, 0.0
    %2179 = vadd.xlane.f32.xlu0 %v2178
    %v2180 = vpop.xlane.xlu0 %2179
    %v2181 = vsel %vm702, %v2177, 0.0
    %2182 = vadd.xlane.f32.xlu0 %v2181
    %v2183 = vpop.xlane.xlu0 %2182
    %v2184 = vrcp.pop %v2180
    %v2185 = vrcp.pop %v2183
    %v2186 = vmul.f32 %v2175, %v2184
    %v2187 = vmul.f32 %v2177, %v2185
    %v2188 = vmul.f32 %v2065, %v607
    %v2189 = vmul.f32 %v2070, %v607
    %v2190 = vmul.f32 %v1889, %v733
    %v2191 = vmul.f32 %v1894, %v733
    %v2193 = vsel %vm292, %v2190, 0
    %v2196 = vsel %vm292, %v2191, 0
    %2198 = vmatprep.subr.mxu0 0.0
    %2199 = vmatpush1.xpose.msra.mxu0 0.0
    %2200 = vmatprep.subr.mxu0 0.0
    %2201 = vmatpush1.xpose.msra.mxu0 0.0
    %2202 = vmatprep.subr.mxu0 0.0
    %2203 = vmatpush1.xpose.msra.mxu0 0.0
    %2204 = vmatprep.subr.mxu0 0.0
    %2205 = vmatpush1.xpose.msra.mxu0 0.0
    %2206 = vmatprep.subr.mxu0 0.0
    %2207 = vmatpush1.xpose.msra.mxu0 0.0
    %2208 = vmatprep.subr.mxu0 0.0
    %2209 = vmatpush1.xpose.msra.mxu0 0.0
    %2210 = vmatprep.subr.mxu0 0.0
    %2211 = vmatpush1.xpose.msra.mxu0 0.0
    %2212 = vmatprep.subr.mxu0 0.0
    %2213 = vmatpush1.xpose.msra.mxu0 0.0
    %2214 = vmatprep.subr.mxu0 0.0
    %2215 = vmatpush1.xpose.msra.mxu0 0.0
    %2216 = vmatprep.subr.mxu0 0.0
    %2217 = vmatpush1.xpose.msra.mxu0 0.0
    %2218 = vmatprep.subr.mxu0 0.0
    %2219 = vmatpush1.xpose.msra.mxu0 0.0
    %2220 = vmatprep.subr.mxu0 0.0
    %2221 = vmatpush1.xpose.msra.mxu0 0.0
    %2222 = vmatprep.subr.mxu0 0.0
    %2223 = vmatpush1.xpose.msra.mxu0 0.0
    %2224 = vmatprep.subr.mxu0 0.0
    %2225 = vmatpush1.xpose.msra.mxu0 0.0
    %2226 = vmatprep.subr.mxu0 0.0
    %2227 = vmatpush1.xpose.msra.mxu0 %v2085
    %2228 = vmatprep.subr.mxu0 0.0
    %2229 = vmatpush1.xpose.msra.mxu0 %v2082
    %2230 = vmatprep.subr.mxu0 0.0
    %2231 = vmatpush2.xpose.msra.mxu0 0.0
    %2232 = vmatprep.subr.mxu0 0.0
    %2233 = vmatpush2.xpose.msra.mxu0 0.0
    %2234 = vmatprep.subr.mxu0 0.0
    %2235 = vmatpush2.xpose.msra.mxu0 0.0
    %2236 = vmatprep.subr.mxu0 0.0
    %2237 = vmatpush2.xpose.msra.mxu0 0.0
    %2238 = vmatprep.subr.mxu0 0.0
    %2239 = vmatpush2.xpose.msra.mxu0 0.0
    %2240 = vmatprep.subr.mxu0 0.0
    %2241 = vmatpush2.xpose.msra.mxu0 0.0
    %2242 = vmatprep.subr.mxu0 0.0
    %2243 = vmatpush2.xpose.msra.mxu0 0.0
    %2244 = vmatprep.subr.mxu0 0.0
    %2245 = vmatpush2.xpose.msra.mxu0 0.0
    %2246 = vmatprep.subr.mxu0 0.0
    %2247 = vmatpush2.xpose.msra.mxu0 0.0
    %2248 = vmatprep.subr.mxu0 0.0
    %2249 = vmatpush2.xpose.msra.mxu0 0.0
    %2250 = vmatprep.subr.mxu0 0.0
    %2251 = vmatpush2.xpose.msra.mxu0 0.0
    %2252 = vmatprep.subr.mxu0 0.0
    %2253 = vmatpush2.xpose.msra.mxu0 0.0
    %2254 = vmatprep.subr.mxu0 0.0
    %2255 = vmatpush2.xpose.msra.mxu0 0.0
    %2256 = vmatprep.subr.mxu0 0.0
    %2257 = vmatpush2.xpose.msra.mxu0 0.0
    %2258 = vmatprep.subr.mxu0 0.0
    %2259 = vmatpush2.xpose.msra.mxu0 0.0
    %2260 = vmatprep.subr.mxu0 0.0
    %2261 = vmatpush2.xpose.msra.mxu0 0.0
    %2262 = vmatprep.mubr.f32.mxu0 0.0
    %2263 = vmatmul.mubr.f32.gmra.mxu0 %v2193
    %v2264 = vpop.f32.mrf.mxu0
    %v2265 = vadd.f32 0.0, %v2264
    %v2266 = vpop.f32.mrf.mxu0
    %2267 = vmatprep.mubr.f32.mxu0 0.0
    %2268 = vmatmul.mubr.f32.gmra.mxu0 %v2196
    %v2269 = vpop.f32.mrf.mxu0
    %v2270 = vadd.f32 0.0, %v2269
    %v2271 = vpop.f32.mrf.mxu0
    %2272 = vdwg.mxu0
    %v2273 = vmul.f32 %v2265, 0.35355338
    %v2274 = vmul.f32 %v2270, 0.35355338
    %v2275 = vadd.f32 %v2273, %v336
    %v2276 = vadd.f32 %v2274, %v337
    %v2277 = vsel %vm702, %v2275, -inf
    %2278 = vmax.xlane.f32.xlu0 %v2277
    %v2279 = vpop.xlane.xlu0 %2278
    %v2280 = vsel %vm702, %v2276, -inf
    %2281 = vmax.xlane.f32.xlu0 %v2280
    %v2282 = vpop.xlane.xlu0 %2281
    %v2283 = vsub.f32 %v2275, %v2279
    %v2284 = vsub.f32 %v2276, %v2282
    %v2285 = vmul.f32 %v2283, 1.442695
    %v2286 = vpow.pop %v2285
    %v2287 = vmul.f32 %v2284, 1.442695
    %v2288 = vpow.pop %v2287
    %v2289 = vsel %vm702, %v2286, 0.0
    %2290 = vadd.xlane.f32.xlu0 %v2289
    %v2291 = vpop.xlane.xlu0 %2290
    %v2292 = vsel %vm702, %v2288, 0.0
    %2293 = vadd.xlane.f32.xlu0 %v2292
    %v2294 = vpop.xlane.xlu0 %2293
    %v2295 = vrcp.pop %v2291
    %v2296 = vrcp.pop %v2294
    %v2297 = vmul.f32 %v2286, %v2295
    %v2298 = vmul.f32 %v2288, %v2296
    %v2299 = vmul.f32 %v2065, %v733
    %v2300 = vmul.f32 %v2070, %v733
    %v2302 = vsel %vm702, %v2297, 0
    %v2305 = vsel %vm702, %v2298, 0
    %2307 = vmatprep.subr.mxu0 0.0
    %2308 = vmatpush1.msra.mxu0 0.0
    %2309 = vmatprep.subr.mxu0 0.0
    %2310 = vmatpush1.msra.mxu0 0.0
    %2311 = vmatprep.subr.mxu0 0.0
    %2312 = vmatpush1.msra.mxu0 0.0
    %2313 = vmatprep.subr.mxu0 0.0
    %2314 = vmatpush1.msra.mxu0 0.0
    %2315 = vmatprep.subr.mxu0 0.0
    %2316 = vmatpush1.msra.mxu0 0.0
    %2317 = vmatprep.subr.mxu0 0.0
    %2318 = vmatpush1.msra.mxu0 0.0
    %2319 = vmatprep.subr.mxu0 0.0
    %2320 = vmatpush1.msra.mxu0 0.0
    %2321 = vmatprep.subr.mxu0 0.0
    %2322 = vmatpush1.msra.mxu0 0.0
    %2323 = vmatprep.subr.mxu0 0.0
    %2324 = vmatpush1.msra.mxu0 0.0
    %2325 = vmatprep.subr.mxu0 0.0
    %2326 = vmatpush1.msra.mxu0 0.0
    %2327 = vmatprep.subr.mxu0 0.0
    %2328 = vmatpush1.msra.mxu0 0.0
    %2329 = vmatprep.subr.mxu0 0.0
    %2330 = vmatpush1.msra.mxu0 0.0
    %2331 = vmatprep.subr.mxu0 0.0
    %2332 = vmatpush1.msra.mxu0 0.0
    %2333 = vmatprep.subr.mxu0 0.0
    %2334 = vmatpush1.msra.mxu0 0.0
    %2335 = vmatprep.subr.mxu0 0.0
    %2336 = vmatpush1.msra.mxu0 %v2300
    %2337 = vmatprep.subr.mxu0 0.0
    %2338 = vmatpush1.msra.mxu0 %v2299
    %2339 = vmatprep.subr.mxu0 0.0
    %2340 = vmatpush2.msra.mxu0 0.0
    %2341 = vmatprep.subr.mxu0 0.0
    %2342 = vmatpush2.msra.mxu0 0.0
    %2343 = vmatprep.subr.mxu0 0.0
    %2344 = vmatpush2.msra.mxu0 0.0
    %2345 = vmatprep.subr.mxu0 0.0
    %2346 = vmatpush2.msra.mxu0 0.0
    %2347 = vmatprep.subr.mxu0 0.0
    %2348 = vmatpush2.msra.mxu0 0.0
    %2349 = vmatprep.subr.mxu0 0.0
    %2350 = vmatpush2.msra.mxu0 0.0
    %2351 = vmatprep.subr.mxu0 0.0
    %2352 = vmatpush2.msra.mxu0 0.0
    %2353 = vmatprep.subr.mxu0 0.0
    %2354 = vmatpush2.msra.mxu0 0.0
    %2355 = vmatprep.subr.mxu0 0.0
    %2356 = vmatpush2.msra.mxu0 0.0
    %2357 = vmatprep.subr.mxu0 0.0
    %2358 = vmatpush2.msra.mxu0 0.0
    %2359 = vmatprep.subr.mxu0 0.0
    %2360 = vmatpush2.msra.mxu0 0.0
    %2361 = vmatprep.subr.mxu0 0.0
    %2362 = vmatpush2.msra.mxu0 0.0
    %2363 = vmatprep.subr.mxu0 0.0
    %2364 = vmatpush2.msra.mxu0 0.0
    %2365 = vmatprep.subr.mxu0 0.0
    %2366 = vmatpush2.msra.mxu0 0.0
    %2367 = vmatprep.subr.mxu0 0.0
    %2368 = vmatpush2.msra.mxu0 0.0
    %2369 = vmatprep.subr.mxu0 0.0
    %2370 = vmatpush2.msra.mxu0 0.0
    %2371 = vmatprep.mubr.f32.mxu0 0.0
    %2372 = vmatmul.mubr.f32.gmra.mxu0 %v2302
    %v2373 = vpop.f32.mrf.mxu0
    %v2374 = vadd.f32 0.0, %v2373
    %v2375 = vpop.f32.mrf.mxu0
    %2376 = vmatprep.mubr.f32.mxu0 0.0
    %2377 = vmatmul.mubr.f32.gmra.mxu0 %v2305
    %v2378 = vpop.f32.mrf.mxu0
    %v2379 = vadd.f32 0.0, %v2378
    %v2380 = vpop.f32.mrf.mxu0
    %2381 = vdwg.mxu0
    %v2383 = vsel %vm702, %v2186, 0
    %v2386 = vsel %vm702, %v2187, 0
    %2388 = vmatprep.subr.mxu0 0.0
    %2389 = vmatpush1.msra.mxu0 0.0
    %2390 = vmatprep.subr.mxu0 0.0
    %2391 = vmatpush1.msra.mxu0 0.0
    %2392 = vmatprep.subr.mxu0 0.0
    %2393 = vmatpush1.msra.mxu0 0.0
    %2394 = vmatprep.subr.mxu0 0.0
    %2395 = vmatpush1.msra.mxu0 0.0
    %2396 = vmatprep.subr.mxu0 0.0
    %2397 = vmatpush1.msra.mxu0 0.0
    %2398 = vmatprep.subr.mxu0 0.0
    %2399 = vmatpush1.msra.mxu0 0.0
    %2400 = vmatprep.subr.mxu0 0.0
    %2401 = vmatpush1.msra.mxu0 0.0
    %2402 = vmatprep.subr.mxu0 0.0
    %2403 = vmatpush1.msra.mxu0 0.0
    %2404 = vmatprep.subr.mxu0 0.0
    %2405 = vmatpush1.msra.mxu0 0.0
    %2406 = vmatprep.subr.mxu0 0.0
    %2407 = vmatpush1.msra.mxu0 0.0
    %2408 = vmatprep.subr.mxu0 0.0
    %2409 = vmatpush1.msra.mxu0 0.0
    %2410 = vmatprep.subr.mxu0 0.0
    %2411 = vmatpush1.msra.mxu0 0.0
    %2412 = vmatprep.subr.mxu0 0.0
    %2413 = vmatpush1.msra.mxu0 0.0
    %2414 = vmatprep.subr.mxu0 0.0
    %2415 = vmatpush1.msra.mxu0 0.0
    %2416 = vmatprep.subr.mxu0 0.0
    %2417 = vmatpush1.msra.mxu0 %v2189
    %2418 = vmatprep.subr.mxu0 0.0
    %2419 = vmatpush1.msra.mxu0 %v2188
    %2420 = vmatprep.subr.mxu0 0.0
    %2421 = vmatpush2.msra.mxu0 0.0
    %2422 = vmatprep.subr.mxu0 0.0
    %2423 = vmatpush2.msra.mxu0 0.0
    %2424 = vmatprep.subr.mxu0 0.0
    %2425 = vmatpush2.msra.mxu0 0.0
    %2426 = vmatprep.subr.mxu0 0.0
    %2427 = vmatpush2.msra.mxu0 0.0
    %2428 = vmatprep.subr.mxu0 0.0
    %2429 = vmatpush2.msra.mxu0 0.0
    %2430 = vmatprep.subr.mxu0 0.0
    %2431 = vmatpush2.msra.mxu0 0.0
    %2432 = vmatprep.subr.mxu0 0.0
    %2433 = vmatpush2.msra.mxu0 0.0
    %2434 = vmatprep.subr.mxu0 0.0
    %2435 = vmatpush2.msra.mxu0 0.0
    %2436 = vmatprep.subr.mxu0 0.0
    %2437 = vmatpush2.msra.mxu0 0.0
    %2438 = vmatprep.subr.mxu0 0.0
    %2439 = vmatpush2.msra.mxu0 0.0
    %2440 = vmatprep.subr.mxu0 0.0
    %2441 = vmatpush2.msra.mxu0 0.0
    %2442 = vmatprep.subr.mxu0 0.0
    %2443 = vmatpush2.msra.mxu0 0.0
    %2444 = vmatprep.subr.mxu0 0.0
    %2445 = vmatpush2.msra.mxu0 0.0
    %2446 = vmatprep.subr.mxu0 0.0
    %2447 = vmatpush2.msra.mxu0 0.0
    %2448 = vmatprep.subr.mxu0 0.0
    %2449 = vmatpush2.msra.mxu0 0.0
    %2450 = vmatprep.subr.mxu0 0.0
    %2451 = vmatpush2.msra.mxu0 0.0
    %2452 = vmatprep.mubr.f32.mxu0 0.0
    %2453 = vmatmul.mubr.f32.gmra.mxu0 %v2383
    %v2454 = vpop.f32.mrf.mxu0
    %v2455 = vadd.f32 %v2374, %v2454
    %v2456 = vpop.f32.mrf.mxu0
    %2457 = vmatprep.mubr.f32.mxu0 0.0
    %2458 = vmatmul.mubr.f32.gmra.mxu0 %v2386
    %v2459 = vpop.f32.mrf.mxu0
    %v2460 = vadd.f32 %v2379, %v2459
    %v2461 = vpop.f32.mrf.mxu0
    %2462 = vdwg.mxu0
    %v2463 = vmul.f32 %v1889, %v1014
    %v2464 = vmul.f32 %v1894, %v1014
    %v2466 = vsel %vm292, %v2463, 0
    %v2469 = vsel %vm292, %v2464, 0
    %2471 = vmatprep.subr.mxu0 0.0
    %2472 = vmatpush1.xpose.msra.mxu0 0.0
    %2473 = vmatprep.subr.mxu0 0.0
    %2474 = vmatpush1.xpose.msra.mxu0 0.0
    %2475 = vmatprep.subr.mxu0 0.0
    %2476 = vmatpush1.xpose.msra.mxu0 0.0
    %2477 = vmatprep.subr.mxu0 0.0
    %2478 = vmatpush1.xpose.msra.mxu0 0.0
    %2479 = vmatprep.subr.mxu0 0.0
    %2480 = vmatpush1.xpose.msra.mxu0 0.0
    %2481 = vmatprep.subr.mxu0 0.0
    %2482 = vmatpush1.xpose.msra.mxu0 0.0
    %2483 = vmatprep.subr.mxu0 0.0
    %2484 = vmatpush1.xpose.msra.mxu0 0.0
    %2485 = vmatprep.subr.mxu0 0.0
    %2486 = vmatpush1.xpose.msra.mxu0 0.0
    %2487 = vmatprep.subr.mxu0 0.0
    %2488 = vmatpush1.xpose.msra.mxu0 0.0
    %2489 = vmatprep.subr.mxu0 0.0
    %2490 = vmatpush1.xpose.msra.mxu0 0.0
    %2491 = vmatprep.subr.mxu0 0.0
    %2492 = vmatpush1.xpose.msra.mxu0 0.0
    %2493 = vmatprep.subr.mxu0 0.0
    %2494 = vmatpush1.xpose.msra.mxu0 0.0
    %2495 = vmatprep.subr.mxu0 0.0
    %2496 = vmatpush1.xpose.msra.mxu0 0.0
    %2497 = vmatprep.subr.mxu0 0.0
    %2498 = vmatpush1.xpose.msra.mxu0 0.0
    %2499 = vmatprep.subr.mxu0 0.0
    %2500 = vmatpush1.xpose.msra.mxu0 %v2085
    %2501 = vmatprep.subr.mxu0 0.0
    %2502 = vmatpush1.xpose.msra.mxu0 %v2082
    %2503 = vmatprep.subr.mxu0 0.0
    %2504 = vmatpush2.xpose.msra.mxu0 0.0
    %2505 = vmatprep.subr.mxu0 0.0
    %2506 = vmatpush2.xpose.msra.mxu0 0.0
    %2507 = vmatprep.subr.mxu0 0.0
    %2508 = vmatpush2.xpose.msra.mxu0 0.0
    %2509 = vmatprep.subr.mxu0 0.0
    %2510 = vmatpush2.xpose.msra.mxu0 0.0
    %2511 = vmatprep.subr.mxu0 0.0
    %2512 = vmatpush2.xpose.msra.mxu0 0.0
    %2513 = vmatprep.subr.mxu0 0.0
    %2514 = vmatpush2.xpose.msra.mxu0 0.0
    %2515 = vmatprep.subr.mxu0 0.0
    %2516 = vmatpush2.xpose.msra.mxu0 0.0
    %2517 = vmatprep.subr.mxu0 0.0
    %2518 = vmatpush2.xpose.msra.mxu0 0.0
    %2519 = vmatprep.subr.mxu0 0.0
    %2520 = vmatpush2.xpose.msra.mxu0 0.0
    %2521 = vmatprep.subr.mxu0 0.0
    %2522 = vmatpush2.xpose.msra.mxu0 0.0
    %2523 = vmatprep.subr.mxu0 0.0
    %2524 = vmatpush2.xpose.msra.mxu0 0.0
    %2525 = vmatprep.subr.mxu0 0.0
    %2526 = vmatpush2.xpose.msra.mxu0 0.0
    %2527 = vmatprep.subr.mxu0 0.0
    %2528 = vmatpush2.xpose.msra.mxu0 0.0
    %2529 = vmatprep.subr.mxu0 0.0
    %2530 = vmatpush2.xpose.msra.mxu0 0.0
    %2531 = vmatprep.subr.mxu0 0.0
    %2532 = vmatpush2.xpose.msra.mxu0 0.0
    %2533 = vmatprep.subr.mxu0 0.0
    %2534 = vmatpush2.xpose.msra.mxu0 0.0
    %2535 = vmatprep.mubr.f32.mxu0 0.0
    %2536 = vmatmul.mubr.f32.gmra.mxu0 %v2466
    %v2537 = vpop.f32.mrf.mxu0
    %v2538 = vadd.f32 0.0, %v2537
    %v2539 = vpop.f32.mrf.mxu0
    %2540 = vmatprep.mubr.f32.mxu0 0.0
    %2541 = vmatmul.mubr.f32.gmra.mxu0 %v2469
    %v2542 = vpop.f32.mrf.mxu0
    %v2543 = vadd.f32 0.0, %v2542
    %v2544 = vpop.f32.mrf.mxu0
    %2545 = vdwg.mxu0
    %v2546 = vmul.f32 %v2538, 0.35355338
    %v2547 = vmul.f32 %v2543, 0.35355338
    %v2548 = vadd.f32 %v2546, %v336
    %v2549 = vadd.f32 %v2547, %v337
    %v2550 = vsel %vm702, %v2548, -inf
    %2551 = vmax.xlane.f32.xlu0 %v2550
    %v2552 = vpop.xlane.xlu0 %2551
    %v2553 = vsel %vm702, %v2549, -inf
    %2554 = vmax.xlane.f32.xlu0 %v2553
    %v2555 = vpop.xlane.xlu0 %2554
    %v2556 = vsub.f32 %v2548, %v2552
    %v2557 = vsub.f32 %v2549, %v2555
    %v2558 = vmul.f32 %v2556, 1.442695
    %v2559 = vpow.pop %v2558
    %v2560 = vmul.f32 %v2557, 1.442695
    %v2561 = vpow.pop %v2560
    %v2562 = vsel %vm702, %v2559, 0.0
    %2563 = vadd.xlane.f32.xlu0 %v2562
    %v2564 = vpop.xlane.xlu0 %2563
    %v2565 = vsel %vm702, %v2561, 0.0
    %2566 = vadd.xlane.f32.xlu0 %v2565
    %v2567 = vpop.xlane.xlu0 %2566
    %v2568 = vrcp.pop %v2564
    %v2569 = vrcp.pop %v2567
    %v2570 = vmul.f32 %v2559, %v2568
    %v2571 = vmul.f32 %v2561, %v2569
    %v2572 = vmul.f32 %v2065, %v1014
    %v2573 = vmul.f32 %v2070, %v1014
    %v2575 = vsel %vm702, %v2570, 0
    %v2578 = vsel %vm702, %v2571, 0
    %2580 = vmatprep.subr.mxu0 0.0
    %2581 = vmatpush1.msra.mxu0 0.0
    %2582 = vmatprep.subr.mxu0 0.0
    %2583 = vmatpush1.msra.mxu0 0.0
    %2584 = vmatprep.subr.mxu0 0.0
    %2585 = vmatpush1.msra.mxu0 0.0
    %2586 = vmatprep.subr.mxu0 0.0
    %2587 = vmatpush1.msra.mxu0 0.0
    %2588 = vmatprep.subr.mxu0 0.0
    %2589 = vmatpush1.msra.mxu0 0.0
    %2590 = vmatprep.subr.mxu0 0.0
    %2591 = vmatpush1.msra.mxu0 0.0
    %2592 = vmatprep.subr.mxu0 0.0
    %2593 = vmatpush1.msra.mxu0 0.0
    %2594 = vmatprep.subr.mxu0 0.0
    %2595 = vmatpush1.msra.mxu0 0.0
    %2596 = vmatprep.subr.mxu0 0.0
    %2597 = vmatpush1.msra.mxu0 0.0
    %2598 = vmatprep.subr.mxu0 0.0
    %2599 = vmatpush1.msra.mxu0 0.0
    %2600 = vmatprep.subr.mxu0 0.0
    %2601 = vmatpush1.msra.mxu0 0.0
    %2602 = vmatprep.subr.mxu0 0.0
    %2603 = vmatpush1.msra.mxu0 0.0
    %2604 = vmatprep.subr.mxu0 0.0
    %2605 = vmatpush1.msra.mxu0 0.0
    %2606 = vmatprep.subr.mxu0 0.0
    %2607 = vmatpush1.msra.mxu0 0.0
    %2608 = vmatprep.subr.mxu0 0.0
    %2609 = vmatpush1.msra.mxu0 %v2573
    %2610 = vmatprep.subr.mxu0 0.0
    %2611 = vmatpush1.msra.mxu0 %v2572
    %2612 = vmatprep.subr.mxu0 0.0
    %2613 = vmatpush2.msra.mxu0 0.0
    %2614 = vmatprep.subr.mxu0 0.0
    %2615 = vmatpush2.msra.mxu0 0.0
    %2616 = vmatprep.subr.mxu0 0.0
    %2617 = vmatpush2.msra.mxu0 0.0
    %2618 = vmatprep.subr.mxu0 0.0
    %2619 = vmatpush2.msra.mxu0 0.0
    %2620 = vmatprep.subr.mxu0 0.0
    %2621 = vmatpush2.msra.mxu0 0.0
    %2622 = vmatprep.subr.mxu0 0.0
    %2623 = vmatpush2.msra.mxu0 0.0
    %2624 = vmatprep.subr.mxu0 0.0
    %2625 = vmatpush2.msra.mxu0 0.0
    %2626 = vmatprep.subr.mxu0 0.0
    %2627 = vmatpush2.msra.mxu0 0.0
    %2628 = vmatprep.subr.mxu0 0.0
    %2629 = vmatpush2.msra.mxu0 0.0
    %2630 = vmatprep.subr.mxu0 0.0
    %2631 = vmatpush2.msra.mxu0 0.0
    %2632 = vmatprep.subr.mxu0 0.0
    %2633 = vmatpush2.msra.mxu0 0.0
    %2634 = vmatprep.subr.mxu0 0.0
    %2635 = vmatpush2.msra.mxu0 0.0
    %2636 = vmatprep.subr.mxu0 0.0
    %2637 = vmatpush2.msra.mxu0 0.0
    %2638 = vmatprep.subr.mxu0 0.0
    %2639 = vmatpush2.msra.mxu0 0.0
    %2640 = vmatprep.subr.mxu0 0.0
    %2641 = vmatpush2.msra.mxu0 0.0
    %2642 = vmatprep.subr.mxu0 0.0
    %2643 = vmatpush2.msra.mxu0 0.0
    %2644 = vmatprep.mubr.f32.mxu0 0.0
    %2645 = vmatmul.mubr.f32.gmra.mxu0 %v2575
    %v2646 = vpop.f32.mrf.mxu0
    %v2647 = vadd.f32 0.0, %v2646
    %v2648 = vpop.f32.mrf.mxu0
    %2649 = vmatprep.mubr.f32.mxu0 0.0
    %2650 = vmatmul.mubr.f32.gmra.mxu0 %v2578
    %v2651 = vpop.f32.mrf.mxu0
    %v2652 = vadd.f32 0.0, %v2651
    %v2653 = vpop.f32.mrf.mxu0
    %2654 = vdwg.mxu0
    %v2655 = vadd.f32 %v2455, %v2647
    %v2656 = vadd.f32 %v2460, %v2652
    %v2657 = vmul.f32 %v1889, %v1216
    %v2658 = vmul.f32 %v1894, %v1216
    %v2660 = vsel %vm292, %v2657, 0
    %v2663 = vsel %vm292, %v2658, 0
    %2665 = vmatprep.subr.mxu0 0.0
    %2666 = vmatpush1.xpose.msra.mxu0 0.0
    %2667 = vmatprep.subr.mxu0 0.0
    %2668 = vmatpush1.xpose.msra.mxu0 0.0
    %2669 = vmatprep.subr.mxu0 0.0
    %2670 = vmatpush1.xpose.msra.mxu0 0.0
    %2671 = vmatprep.subr.mxu0 0.0
    %2672 = vmatpush1.xpose.msra.mxu0 0.0
    %2673 = vmatprep.subr.mxu0 0.0
    %2674 = vmatpush1.xpose.msra.mxu0 0.0
    %2675 = vmatprep.subr.mxu0 0.0
    %2676 = vmatpush1.xpose.msra.mxu0 0.0
    %2677 = vmatprep.subr.mxu0 0.0
    %2678 = vmatpush1.xpose.msra.mxu0 0.0
    %2679 = vmatprep.subr.mxu0 0.0
    %2680 = vmatpush1.xpose.msra.mxu0 0.0
    %2681 = vmatprep.subr.mxu0 0.0
    %2682 = vmatpush1.xpose.msra.mxu0 0.0
    %2683 = vmatprep.subr.mxu0 0.0
    %2684 = vmatpush1.xpose.msra.mxu0 0.0
    %2685 = vmatprep.subr.mxu0 0.0
    %2686 = vmatpush1.xpose.msra.mxu0 0.0
    %2687 = vmatprep.subr.mxu0 0.0
    %2688 = vmatpush1.xpose.msra.mxu0 0.0
    %2689 = vmatprep.subr.mxu0 0.0
    %2690 = vmatpush1.xpose.msra.mxu0 0.0
    %2691 = vmatprep.subr.mxu0 0.0
    %2692 = vmatpush1.xpose.msra.mxu0 0.0
    %2693 = vmatprep.subr.mxu0 0.0
    %2694 = vmatpush1.xpose.msra.mxu0 %v2085
    %2695 = vmatprep.subr.mxu0 0.0
    %2696 = vmatpush1.xpose.msra.mxu0 %v2082
    %2697 = vmatprep.subr.mxu0 0.0
    %2698 = vmatpush2.xpose.msra.mxu0 0.0
    %2699 = vmatprep.subr.mxu0 0.0
    %2700 = vmatpush2.xpose.msra.mxu0 0.0
    %2701 = vmatprep.subr.mxu0 0.0
    %2702 = vmatpush2.xpose.msra.mxu0 0.0
    %2703 = vmatprep.subr.mxu0 0.0
    %2704 = vmatpush2.xpose.msra.mxu0 0.0
    %2705 = vmatprep.subr.mxu0 0.0
    %2706 = vmatpush2.xpose.msra.mxu0 0.0
    %2707 = vmatprep.subr.mxu0 0.0
    %2708 = vmatpush2.xpose.msra.mxu0 0.0
    %2709 = vmatprep.subr.mxu0 0.0
    %2710 = vmatpush2.xpose.msra.mxu0 0.0
    %2711 = vmatprep.subr.mxu0 0.0
    %2712 = vmatpush2.xpose.msra.mxu0 0.0
    %2713 = vmatprep.subr.mxu0 0.0
    %2714 = vmatpush2.xpose.msra.mxu0 0.0
    %2715 = vmatprep.subr.mxu0 0.0
    %2716 = vmatpush2.xpose.msra.mxu0 0.0
    %2717 = vmatprep.subr.mxu0 0.0
    %2718 = vmatpush2.xpose.msra.mxu0 0.0
    %2719 = vmatprep.subr.mxu0 0.0
    %2720 = vmatpush2.xpose.msra.mxu0 0.0
    %2721 = vmatprep.subr.mxu0 0.0
    %2722 = vmatpush2.xpose.msra.mxu0 0.0
    %2723 = vmatprep.subr.mxu0 0.0
    %2724 = vmatpush2.xpose.msra.mxu0 0.0
    %2725 = vmatprep.subr.mxu0 0.0
    %2726 = vmatpush2.xpose.msra.mxu0 0.0
    %2727 = vmatprep.subr.mxu0 0.0
    %2728 = vmatpush2.xpose.msra.mxu0 0.0
    %2729 = vmatprep.mubr.f32.mxu0 0.0
    %2730 = vmatmul.mubr.f32.gmra.mxu0 %v2660
    %v2731 = vpop.f32.mrf.mxu0
    %v2732 = vadd.f32 0.0, %v2731
    %v2733 = vpop.f32.mrf.mxu0
    %2734 = vmatprep.mubr.f32.mxu0 0.0
    %2735 = vmatmul.mubr.f32.gmra.mxu0 %v2663
    %v2736 = vpop.f32.mrf.mxu0
    %v2737 = vadd.f32 0.0, %v2736
    %v2738 = vpop.f32.mrf.mxu0
    %2739 = vdwg.mxu0
    %v2740 = vmul.f32 %v2732, 0.35355338
    %v2741 = vmul.f32 %v2737, 0.35355338
    %v2742 = vadd.f32 %v2740, %v336
    %v2743 = vadd.f32 %v2741, %v337
    %v2744 = vsel %vm702, %v2742, -inf
    %2745 = vmax.xlane.f32.xlu0 %v2744
    %v2746 = vpop.xlane.xlu0 %2745
    %v2747 = vsel %vm702, %v2743, -inf
    %2748 = vmax.xlane.f32.xlu0 %v2747
    %v2749 = vpop.xlane.xlu0 %2748
    %v2750 = vsub.f32 %v2742, %v2746
    %v2751 = vsub.f32 %v2743, %v2749
    %v2752 = vmul.f32 %v2750, 1.442695
    %v2753 = vpow.pop %v2752
    %v2754 = vmul.f32 %v2751, 1.442695
    %v2755 = vpow.pop %v2754
    %v2756 = vsel %vm702, %v2753, 0.0
    %2757 = vadd.xlane.f32.xlu0 %v2756
    %v2758 = vpop.xlane.xlu0 %2757
    %v2759 = vsel %vm702, %v2755, 0.0
    %2760 = vadd.xlane.f32.xlu0 %v2759
    %v2761 = vpop.xlane.xlu0 %2760
    %v2762 = vrcp.pop %v2758
    %v2763 = vrcp.pop %v2761
    %v2764 = vmul.f32 %v2753, %v2762
    %v2765 = vmul.f32 %v2755, %v2763
    %v2766 = vmul.f32 %v2065, %v1216
    %v2767 = vmul.f32 %v2070, %v1216
    %v2769 = vsel %vm702, %v2764, 0
    %v2772 = vsel %vm702, %v2765, 0
    %2774 = vmatprep.subr.mxu0 0.0
    %2775 = vmatpush1.msra.mxu0 0.0
    %2776 = vmatprep.subr.mxu0 0.0
    %2777 = vmatpush1.msra.mxu0 0.0
    %2778 = vmatprep.subr.mxu0 0.0
    %2779 = vmatpush1.msra.mxu0 0.0
    %2780 = vmatprep.subr.mxu0 0.0
    %2781 = vmatpush1.msra.mxu0 0.0
    %2782 = vmatprep.subr.mxu0 0.0
    %2783 = vmatpush1.msra.mxu0 0.0
    %2784 = vmatprep.subr.mxu0 0.0
    %2785 = vmatpush1.msra.mxu0 0.0
    %2786 = vmatprep.subr.mxu0 0.0
    %2787 = vmatpush1.msra.mxu0 0.0
    %2788 = vmatprep.subr.mxu0 0.0
    %2789 = vmatpush1.msra.mxu0 0.0
    %2790 = vmatprep.subr.mxu0 0.0
    %2791 = vmatpush1.msra.mxu0 0.0
    %2792 = vmatprep.subr.mxu0 0.0
    %2793 = vmatpush1.msra.mxu0 0.0
    %2794 = vmatprep.subr.mxu0 0.0
    %2795 = vmatpush1.msra.mxu0 0.0
    %2796 = vmatprep.subr.mxu0 0.0
    %2797 = vmatpush1.msra.mxu0 0.0
    %2798 = vmatprep.subr.mxu0 0.0
    %2799 = vmatpush1.msra.mxu0 0.0
    %2800 = vmatprep.subr.mxu0 0.0
    %2801 = vmatpush1.msra.mxu0 0.0
    %2802 = vmatprep.subr.mxu0 0.0
    %2803 = vmatpush1.msra.mxu0 %v2767
    %2804 = vmatprep.subr.mxu0 0.0
    %2805 = vmatpush1.msra.mxu0 %v2766
    %2806 = vmatprep.subr.mxu0 0.0
    %2807 = vmatpush2.msra.mxu0 0.0
    %2808 = vmatprep.subr.mxu0 0.0
    %2809 = vmatpush2.msra.mxu0 0.0
    %2810 = vmatprep.subr.mxu0 0.0
    %2811 = vmatpush2.msra.mxu0 0.0
    %2812 = vmatprep.subr.mxu0 0.0
    %2813 = vmatpush2.msra.mxu0 0.0
    %2814 = vmatprep.subr.mxu0 0.0
    %2815 = vmatpush2.msra.mxu0 0.0
    %2816 = vmatprep.subr.mxu0 0.0
    %2817 = vmatpush2.msra.mxu0 0.0
    %2818 = vmatprep.subr.mxu0 0.0
    %2819 = vmatpush2.msra.mxu0 0.0
    %2820 = vmatprep.subr.mxu0 0.0
    %2821 = vmatpush2.msra.mxu0 0.0
    %2822 = vmatprep.subr.mxu0 0.0
    %2823 = vmatpush2.msra.mxu0 0.0
    %2824 = vmatprep.subr.mxu0 0.0
    %2825 = vmatpush2.msra.mxu0 0.0
    %2826 = vmatprep.subr.mxu0 0.0
    %2827 = vmatpush2.msra.mxu0 0.0
    %2828 = vmatprep.subr.mxu0 0.0
    %2829 = vmatpush2.msra.mxu0 0.0
    %2830 = vmatprep.subr.mxu0 0.0
    %2831 = vmatpush2.msra.mxu0 0.0
    %2832 = vmatprep.subr.mxu0 0.0
    %2833 = vmatpush2.msra.mxu0 0.0
    %2834 = vmatprep.subr.mxu0 0.0
    %2835 = vmatpush2.msra.mxu0 0.0
    %2836 = vmatprep.subr.mxu0 0.0
    %2837 = vmatpush2.msra.mxu0 0.0
    %2838 = vmatprep.mubr.f32.mxu0 0.0
    %2839 = vmatmul.mubr.f32.gmra.mxu0 %v2769
    %v2840 = vpop.f32.mrf.mxu0
    %v2841 = vadd.f32 0.0, %v2840
    %v2842 = vpop.f32.mrf.mxu0
    %2843 = vmatprep.mubr.f32.mxu0 0.0
    %2844 = vmatmul.mubr.f32.gmra.mxu0 %v2772
    %v2845 = vpop.f32.mrf.mxu0
    %v2846 = vadd.f32 0.0, %v2845
    %v2847 = vpop.f32.mrf.mxu0
    %2848 = vdwg.mxu0
    %v2849 = vadd.f32 %v2655, %v2841
    %v2850 = vadd.f32 %v2656, %v2846
    %s2851 = scalar_lea.vmem [#allocation16], 32
    %v2852 = vld [vmem:[%s2851] sm:$0xff]
    %v2853 = vld [vmem:[%s2851 + $0x8] sm:$0xff]
    %v2854 = vld [vmem:[%s2851 + $0x10] sm:$0xff]
    %v2855 = vld [vmem:[%s2851 + $0x18] sm:$0xff]
    %s2856 = scalar_lea.vmem [#allocation17], 1
    %v2857 = vld [vmem:[%s2856] sm:$0x1]
    %v2859 = vlaneseq
    %v2860 = vshrl.u32 %v2859, 7
    %v2861 = vsub.s32 0, %v2860
    %v2862 = vrot.slane %v2857, %v2861
    %v2865 = vsel %vm292, %v2849, 0
    %v2868 = vsel %vm292, %v2850, 0
    %2870 = vmatprep.subr.mxu0 0.0
    %2871 = vmatpush1.msra.mxu0 0.0
    %2872 = vmatprep.subr.mxu0 0.0
    %2873 = vmatpush1.msra.mxu0 0.0
    %2874 = vmatprep.subr.mxu0 0.0
    %2875 = vmatpush1.msra.mxu0 0.0
    %2876 = vmatprep.subr.mxu0 0.0
    %2877 = vmatpush1.msra.mxu0 0.0
    %2878 = vmatprep.subr.mxu0 0.0
    %2879 = vmatpush1.msra.mxu0 0.0
    %2880 = vmatprep.subr.mxu0 0.0
    %2881 = vmatpush1.msra.mxu0 0.0
    %2882 = vmatprep.subr.mxu0 0.0
    %2883 = vmatpush1.msra.mxu0 0.0
    %2884 = vmatprep.subr.mxu0 0.0
    %2885 = vmatpush1.msra.mxu0 0.0
    %2886 = vmatprep.subr.mxu0 0.0
    %2887 = vmatpush1.msra.mxu0 0.0
    %2888 = vmatprep.subr.mxu0 0.0
    %2889 = vmatpush1.msra.mxu0 0.0
    %2890 = vmatprep.subr.mxu0 0.0
    %2891 = vmatpush1.msra.mxu0 0.0
    %2892 = vmatprep.subr.mxu0 0.0
    %2893 = vmatpush1.msra.mxu0 0.0
    %2894 = vmatprep.subr.mxu0 0.0
    %2895 = vmatpush1.msra.mxu0 %v2855
    %2896 = vmatprep.subr.mxu0 0.0
    %2897 = vmatpush1.msra.mxu0 %v2854
    %2898 = vmatprep.subr.mxu0 0.0
    %2899 = vmatpush1.msra.mxu0 %v2853
    %2900 = vmatprep.subr.mxu0 0.0
    %2901 = vmatpush1.msra.mxu0 %v2852
    %2902 = vmatprep.subr.mxu0 0.0
    %2903 = vmatpush2.msra.mxu0 0.0
    %2904 = vmatprep.subr.mxu0 0.0
    %2905 = vmatpush2.msra.mxu0 0.0
    %2906 = vmatprep.subr.mxu0 0.0
    %2907 = vmatpush2.msra.mxu0 0.0
    %2908 = vmatprep.subr.mxu0 0.0
    %2909 = vmatpush2.msra.mxu0 0.0
    %2910 = vmatprep.subr.mxu0 0.0
    %2911 = vmatpush2.msra.mxu0 0.0
    %2912 = vmatprep.subr.mxu0 0.0
    %2913 = vmatpush2.msra.mxu0 0.0
    %2914 = vmatprep.subr.mxu0 0.0
    %2915 = vmatpush2.msra.mxu0 0.0
    %2916 = vmatprep.subr.mxu0 0.0
    %2917 = vmatpush2.msra.mxu0 0.0
    %2918 = vmatprep.subr.mxu0 0.0
    %2919 = vmatpush2.msra.mxu0 0.0
    %2920 = vmatprep.subr.mxu0 0.0
    %2921 = vmatpush2.msra.mxu0 0.0
    %2922 = vmatprep.subr.mxu0 0.0
    %2923 = vmatpush2.msra.mxu0 0.0
    %2924 = vmatprep.subr.mxu0 0.0
    %2925 = vmatpush2.msra.mxu0 0.0
    %2926 = vmatprep.subr.mxu0 0.0
    %2927 = vmatpush2.msra.mxu0 0.0
    %2928 = vmatprep.subr.mxu0 0.0
    %2929 = vmatpush2.msra.mxu0 0.0
    %2930 = vmatprep.subr.mxu0 0.0
    %2931 = vmatpush2.msra.mxu0 0.0
    %2932 = vmatprep.subr.mxu0 0.0
    %2933 = vmatpush2.msra.mxu0 0.0
    %2934 = vmatprep.mubr.f32.mxu0 0.0
    %2935 = vmatmul.mubr.f32.gmra.mxu0 %v2865
    %v2936 = vpop.f32.mrf.mxu0
    %v2937 = vadd.f32 %v2862, %v2936
    %v2938 = vpop.f32.mrf.mxu0
    %2939 = vmatprep.mubr.f32.mxu0 0.0
    %2940 = vmatmul.mubr.f32.gmra.mxu0 %v2868
    %v2941 = vpop.f32.mrf.mxu0
    %v2942 = vadd.f32 %v2862, %v2941
    %v2943 = vpop.f32.mrf.mxu0
    %2944 = vdwg.mxu0
    %v2945 = vadd.f32 %v1801, %v2937
    %v2946 = vadd.f32 %v1802, %v2942
    %s2947 = scalar_lea.vmem [#allocation19], 1
    %v2948 = vld [vmem:[%s2947] sm:$0x1]
    %s2949 = scalar_lea.vmem [#allocation20], 1
    %v2950 = vld [vmem:[%s2949] sm:$0x1]
    %v2951 = vsel %vm292, %v2945, 0.0
    %2952 = vadd.xlane.f32.xlu0 %v2951
    %v2953 = vpop.xlane.xlu0 %2952
    %v2954 = vsel %vm292, %v2946, 0.0
    %2955 = vadd.xlane.f32.xlu0 %v2954
    %v2956 = vpop.xlane.xlu0 %2955
    %v2957 = vmul.f32 %v2953, %v299
    %v2958 = vmul.f32 %v2956, %v299
    %v2959 = vsub.f32 %v2945, %v2957
    %v2960 = vsub.f32 %v2946, %v2958
    %v2961 = vmul.f32 %v2959, %v2959
    %v2962 = vmul.f32 %v2960, %v2960
    %v2963 = vsel %vm292, %v2961, 0.0
    %2964 = vadd.xlane.f32.xlu0 %v2963
    %v2965 = vpop.xlane.xlu0 %2964
    %v2966 = vsel %vm292, %v2962, 0.0
    %2967 = vadd.xlane.f32.xlu0 %v2966
    %v2968 = vpop.xlane.xlu0 %2967
    %v2969 = vmul.f32 %v2965, %v299
    %v2970 = vmul.f32 %v2968, %v299
    %v2971 = vadd.f32 %v2969, 1e-12
    %v2972 = vadd.f32 %v2970, 1e-12
    %v2973 = vrsqrt.pop %v2971
    %v2974 = vrsqrt.pop %v2972
    %v2975 = vmul.f32 %v2959, %v2973
    %v2976 = vmul.f32 %v2960, %v2974
    %v2978 = vlaneseq
    %v2979 = vshrl.u32 %v2978, 7
    %v2980 = vsub.s32 0, %v2979
    %v2981 = vrot.slane %v2948, %v2980
    %v2983 = vmul.f32 %v2975, %v2981
    %v2984 = vmul.f32 %v2976, %v2981
    %v2986 = vlaneseq
    %v2987 = vshrl.u32 %v2986, 7
    %v2988 = vsub.s32 0, %v2987
    %v2989 = vrot.slane %v2950, %v2988
    %v2991 = vadd.f32 %v2983, %v2989
    %v2992 = vadd.f32 %v2984, %v2989
    %s2993 = scalar_lea.vmem [#allocation22], 32
    %v2994 = vld [vmem:[%s2993] sm:$0xff]
    %v2995 = vld [vmem:[%s2993 + $0x8] sm:$0xff]
    %v2996 = vld [vmem:[%s2993 + $0x10] sm:$0xff]
    %v2997 = vld [vmem:[%s2993 + $0x18] sm:$0xff]
    %s2998 = scalar_lea.vmem [#allocation23], 1
    %v2999 = vld [vmem:[%s2998] sm:$0x1]
    %v3001 = vlaneseq
    %v3002 = vshrl.u32 %v3001, 7
    %v3003 = vsub.s32 0, %v3002
    %v3004 = vrot.slane %v2999, %v3003
    %v3007 = vsel %vm292, %v2991, 0
    %v3010 = vsel %vm292, %v2992, 0
    %3012 = vmatprep.subr.mxu0 0.0
    %3013 = vmatpush1.msra.mxu0 0.0
    %3014 = vmatprep.subr.mxu0 0.0
    %3015 = vmatpush1.msra.mxu0 0.0
    %3016 = vmatprep.subr.mxu0 0.0
    %3017 = vmatpush1.msra.mxu0 0.0
    %3018 = vmatprep.subr.mxu0 0.0
    %3019 = vmatpush1.msra.mxu0 0.0
    %3020 = vmatprep.subr.mxu0 0.0
    %3021 = vmatpush1.msra.mxu0 0.0
    %3022 = vmatprep.subr.mxu0 0.0
    %3023 = vmatpush1.msra.mxu0 0.0
    %3024 = vmatprep.subr.mxu0 0.0
    %3025 = vmatpush1.msra.mxu0 0.0
    %3026 = vmatprep.subr.mxu0 0.0
    %3027 = vmatpush1.msra.mxu0 0.0
    %3028 = vmatprep.subr.mxu0 0.0
    %3029 = vmatpush1.msra.mxu0 0.0
    %3030 = vmatprep.subr.mxu0 0.0
    %3031 = vmatpush1.msra.mxu0 0.0
    %3032 = vmatprep.subr.mxu0 0.0
    %3033 = vmatpush1.msra.mxu0 0.0
    %3034 = vmatprep.subr.mxu0 0.0
    %3035 = vmatpush1.msra.mxu0 0.0
    %3036 = vmatprep.subr.mxu0 0.0
    %3037 = vmatpush1.msra.mxu0 %v2997
    %3038 = vmatprep.subr.mxu0 0.0
    %3039 = vmatpush1.msra.mxu0 %v2996
    %3040 = vmatprep.subr.mxu0 0.0
    %3041 = vmatpush1.msra.mxu0 %v2995
    %3042 = vmatprep.subr.mxu0 0.0
    %3043 = vmatpush1.msra.mxu0 %v2994
    %3044 = vmatprep.subr.mxu0 0.0
    %3045 = vmatpush2.msra.mxu0 0.0
    %3046 = vmatprep.subr.mxu0 0.0
    %3047 = vmatpush2.msra.mxu0 0.0
    %3048 = vmatprep.subr.mxu0 0.0
    %3049 = vmatpush2.msra.mxu0 0.0
    %3050 = vmatprep.subr.mxu0 0.0
    %3051 = vmatpush2.msra.mxu0 0.0
    %3052 = vmatprep.subr.mxu0 0.0
    %3053 = vmatpush2.msra.mxu0 0.0
    %3054 = vmatprep.subr.mxu0 0.0
    %3055 = vmatpush2.msra.mxu0 0.0
    %3056 = vmatprep.subr.mxu0 0.0
    %3057 = vmatpush2.msra.mxu0 0.0
    %3058 = vmatprep.subr.mxu0 0.0
    %3059 = vmatpush2.msra.mxu0 0.0
    %3060 = vmatprep.subr.mxu0 0.0
    %3061 = vmatpush2.msra.mxu0 0.0
    %3062 = vmatprep.subr.mxu0 0.0
    %3063 = vmatpush2.msra.mxu0 0.0
    %3064 = vmatprep.subr.mxu0 0.0
    %3065 = vmatpush2.msra.mxu0 0.0
    %3066 = vmatprep.subr.mxu0 0.0
    %3067 = vmatpush2.msra.mxu0 0.0
    %3068 = vmatprep.subr.mxu0 0.0
    %3069 = vmatpush2.msra.mxu0 0.0
    %3070 = vmatprep.subr.mxu0 0.0
    %3071 = vmatpush2.msra.mxu0 0.0
    %3072 = vmatprep.subr.mxu0 0.0
    %3073 = vmatpush2.msra.mxu0 0.0
    %3074 = vmatprep.subr.mxu0 0.0
    %3075 = vmatpush2.msra.mxu0 0.0
    %3076 = vmatprep.mubr.f32.mxu0 0.0
    %3077 = vmatmul.mubr.f32.gmra.mxu0 %v3007
    %v3078 = vpop.f32.mrf.mxu0
    %v3079 = vadd.f32 %v3004, %v3078
    %v3080 = vpop.f32.mrf.mxu0
    %3081 = vmatprep.mubr.f32.mxu0 0.0
    %3082 = vmatmul.mubr.f32.gmra.mxu0 %v3010
    %v3083 = vpop.f32.mrf.mxu0
    %v3084 = vadd.f32 %v3004, %v3083
    %v3085 = vpop.f32.mrf.mxu0
    %3086 = vdwg.mxu0
    %v3087 = vmul.f32 %v3079, 0.5
    %v3088 = vmul.f32 %v3084, 0.5
    %v3089 = vmul.f32 %v3079, 0.044715
    %v3090 = vmul.f32 %v3084, 0.044715
    %v3091 = vmul.f32 %v3089, %v3079
    %v3092 = vmul.f32 %v3090, %v3084
    %v3093 = vmul.f32 %v3091, %v3079
    %v3094 = vmul.f32 %v3092, %v3084
    %v3095 = vadd.f32 %v3079, %v3093
    %v3096 = vadd.f32 %v3084, %v3094
    %v3097 = vmul.f32 %v3095, 0.7978846
    %v3098 = vmul.f32 %v3096, 0.7978846
    %v3099 = vtanh.pop %v3097
    %v3100 = vtanh.pop %v3098
    %v3101 = vadd.f32 %v3099, 1.0
    %v3102 = vadd.f32 %v3100, 1.0
    %v3103 = vmul.f32 %v3087, %v3101
    %v3104 = vmul.f32 %v3088, %v3102
    %s3105 = scalar_lea.vmem %s17, 64
    %v3106 = vld [vmem:[%s3105] sm:$0xff]
    %v3107 = vld [vmem:[%s3105 + $0x8] sm:$0xff]
    %v3108 = vld [vmem:[%s3105 + $0x10] sm:$0xff]
    %v3109 = vld [vmem:[%s3105 + $0x18] sm:$0xff]
    %v3110 = vld [vmem:[%s3105 + $0x20] sm:$0xff]
    %v3111 = vld [vmem:[%s3105 + $0x28] sm:$0xff]
    %v3112 = vld [vmem:[%s3105 + $0x30] sm:$0xff]
    %v3113 = vld [vmem:[%s3105 + $0x38] sm:$0xff]
    %s3114 = scalar_lea.vmem [#allocation25], 1
    %v3115 = vld [vmem:[%s3114] sm:$0x1]
    %v3117 = vlaneseq
    %v3118 = vshrl.u32 %v3117, 7
    %v3119 = vsub.s32 0, %v3118
    %v3120 = vrot.slane %v3115, %v3119
    %v3123 = vsel %vm1675, %v3103, 0
    %v3126 = vsel %vm1675, %v3104, 0
    %3128 = vmatprep.subr.mxu0 0.0
    %3129 = vmatpush1.msra.mxu0 0.0
    %3130 = vmatprep.subr.mxu0 0.0
    %3131 = vmatpush1.msra.mxu0 0.0
    %3132 = vmatprep.subr.mxu0 0.0
    %3133 = vmatpush1.msra.mxu0 0.0
    %3134 = vmatprep.subr.mxu0 0.0
    %3135 = vmatpush1.msra.mxu0 0.0
    %3136 = vmatprep.subr.mxu0 0.0
    %3137 = vmatpush1.msra.mxu0 0.0
    %3138 = vmatprep.subr.mxu0 0.0
    %3139 = vmatpush1.msra.mxu0 0.0
    %3140 = vmatprep.subr.mxu0 0.0
    %3141 = vmatpush1.msra.mxu0 0.0
    %3142 = vmatprep.subr.mxu0 0.0
    %3143 = vmatpush1.msra.mxu0 0.0
    %3144 = vmatprep.subr.mxu0 0.0
    %3145 = vmatpush1.msra.mxu0 %v3113
    %3146 = vmatprep.subr.mxu0 0.0
    %3147 = vmatpush1.msra.mxu0 %v3112
    %3148 = vmatprep.subr.mxu0 0.0
    %3149 = vmatpush1.msra.mxu0 %v3111
    %3150 = vmatprep.subr.mxu0 0.0
    %3151 = vmatpush1.msra.mxu0 %v3110
    %3152 = vmatprep.subr.mxu0 0.0
    %3153 = vmatpush1.msra.mxu0 %v3109
    %3154 = vmatprep.subr.mxu0 0.0
    %3155 = vmatpush1.msra.mxu0 %v3108
    %3156 = vmatprep.subr.mxu0 0.0
    %3157 = vmatpush1.msra.mxu0 %v3107
    %3158 = vmatprep.subr.mxu0 0.0
    %3159 = vmatpush1.msra.mxu0 %v3106
    %3160 = vmatprep.subr.mxu0 0.0
    %3161 = vmatpush2.msra.mxu0 0.0
    %3162 = vmatprep.subr.mxu0 0.0
    %3163 = vmatpush2.msra.mxu0 0.0
    %3164 = vmatprep.subr.mxu0 0.0
    %3165 = vmatpush2.msra.mxu0 0.0
    %3166 = vmatprep.subr.mxu0 0.0
    %3167 = vmatpush2.msra.mxu0 0.0
    %3168 = vmatprep.subr.mxu0 0.0
    %3169 = vmatpush2.msra.mxu0 0.0
    %3170 = vmatprep.subr.mxu0 0.0
    %3171 = vmatpush2.msra.mxu0 0.0
    %3172 = vmatprep.subr.mxu0 0.0
    %3173 = vmatpush2.msra.mxu0 0.0
    %3174 = vmatprep.subr.mxu0 0.0
    %3175 = vmatpush2.msra.mxu0 0.0
    %3176 = vmatprep.subr.mxu0 0.0
    %3177 = vmatpush2.msra.mxu0 0.0
    %3178 = vmatprep.subr.mxu0 0.0
    %3179 = vmatpush2.msra.mxu0 0.0
    %3180 = vmatprep.subr.mxu0 0.0
    %3181 = vmatpush2.msra.mxu0 0.0
    %3182 = vmatprep.subr.mxu0 0.0
    %3183 = vmatpush2.msra.mxu0 0.0
    %3184 = vmatprep.subr.mxu0 0.0
    %3185 = vmatpush2.msra.mxu0 0.0
    %3186 = vmatprep.subr.mxu0 0.0
    %3187 = vmatpush2.msra.mxu0 0.0
    %3188 = vmatprep.subr.mxu0 0.0
    %3189 = vmatpush2.msra.mxu0 0.0
    %3190 = vmatprep.subr.mxu0 0.0
    %3191 = vmatpush2.msra.mxu0 0.0
    %3192 = vmatprep.mubr.f32.mxu0 0.0
    %3193 = vmatmul.mubr.f32.gmra.mxu0 %v3123
    %v3194 = vpop.f32.mrf.mxu0
    %v3195 = vadd.f32 %v3120, %v3194
    %v3196 = vpop.f32.mrf.mxu0
    %3197 = vmatprep.mubr.f32.mxu0 0.0
    %3198 = vmatmul.mubr.f32.gmra.mxu0 %v3126
    %v3199 = vpop.f32.mrf.mxu0
    %v3200 = vadd.f32 %v3120, %v3199
    %v3201 = vpop.f32.mrf.mxu0
    %3202 = vdwg.mxu0
    %v3203 = vadd.f32 %v2991, %v3195
    %v3204 = vadd.f32 %v2992, %v3200
    %s3205 = scalar_lea.vmem [#allocation26], 1
    %v3206 = vld [vmem:[%s3205] sm:$0x1]
    %s3207 = scalar_lea.vmem %s20, 1
    %v3208 = vld [vmem:[%s3207] sm:$0x1]
    %v3209 = vsel %vm292, %v3203, 0.0
    %3210 = vadd.xlane.f32.xlu0 %v3209
    %v3211 = vpop.xlane.xlu0 %3210
    %v3212 = vsel %vm292, %v3204, 0.0
    %3213 = vadd.xlane.f32.xlu0 %v3212
    %v3214 = vpop.xlane.xlu0 %3213
    %v3215 = vmul.f32 %v3211, %v299
    %v3216 = vmul.f32 %v3214, %v299
    %v3217 = vsub.f32 %v3203, %v3215
    %v3218 = vsub.f32 %v3204, %v3216
    %v3219 = vmul.f32 %v3217, %v3217
    %v3220 = vmul.f32 %v3218, %v3218
    %v3221 = vsel %vm292, %v3219, 0.0
    %3222 = vadd.xlane.f32.xlu0 %v3221
    %v3223 = vpop.xlane.xlu0 %3222
    %v3224 = vsel %vm292, %v3220, 0.0
    %3225 = vadd.xlane.f32.xlu0 %v3224
    %v3226 = vpop.xlane.xlu0 %3225
    %v3227 = vmul.f32 %v3223, %v299
    %v3228 = vmul.f32 %v3226, %v299
    %v3229 = vadd.f32 %v3227, 1e-12
    %v3230 = vadd.f32 %v3228, 1e-12
    %v3231 = vrsqrt.pop %v3229
    %v3232 = vrsqrt.pop %v3230
    %v3233 = vmul.f32 %v3217, %v3231
    %v3234 = vmul.f32 %v3218, %v3232
    %v3236 = vlaneseq
    %v3237 = vshrl.u32 %v3236, 7
    %v3238 = vsub.s32 0, %v3237
    %v3239 = vrot.slane %v3206, %v3238
    %v3241 = vmul.f32 %v3233, %v3239
    %v3242 = vmul.f32 %v3234, %v3239
    %v3244 = vlaneseq
    %v3245 = vshrl.u32 %v3244, 7
    %v3246 = vsub.s32 0, %v3245
    %v3247 = vrot.slane %v3208, %v3246
    %v3249 = vadd.f32 %v3241, %v3247
    %v3250 = vadd.f32 %v3242, %v3247
    %v3251 = vld [vmem:[%s21] sm:$0xff]
    %v3252 = vld [vmem:[%s21 + $0x8] sm:$0xff]
    %v3253 = vld [vmem:[%s21 + $0x10] sm:$0xff]
    %v3254 = vld [vmem:[%s21 + $0x18] sm:$0xff]
    %v3255 = vld [vmem:[%s22] sm:$0x1]
    %v3257 = vsel %vm292, %v3249, 0
    %3259 = vmatprep.subr.mxu0 0.0
    %3260 = vmatpush1.msra.mxu0 0.0
    %3261 = vmatprep.subr.mxu0 0.0
    %3262 = vmatpush1.msra.mxu0 0.0
    %3263 = vmatprep.subr.mxu0 0.0
    %3264 = vmatpush1.msra.mxu0 0.0
    %3265 = vmatprep.subr.mxu0 0.0
    %3266 = vmatpush1.msra.mxu0 0.0
    %3267 = vmatprep.subr.mxu0 0.0
    %3268 = vmatpush1.msra.mxu0 0.0
    %3269 = vmatprep.subr.mxu0 0.0
    %3270 = vmatpush1.msra.mxu0 0.0
    %3271 = vmatprep.subr.mxu0 0.0
    %3272 = vmatpush1.msra.mxu0 0.0
    %3273 = vmatprep.subr.mxu0 0.0
    %3274 = vmatpush1.msra.mxu0 0.0
    %3275 = vmatprep.subr.mxu0 0.0
    %3276 = vmatpush1.msra.mxu0 0.0
    %3277 = vmatprep.subr.mxu0 0.0
    %3278 = vmatpush1.msra.mxu0 0.0
    %3279 = vmatprep.subr.mxu0 0.0
    %3280 = vmatpush1.msra.mxu0 0.0
    %3281 = vmatprep.subr.mxu0 0.0
    %3282 = vmatpush1.msra.mxu0 0.0
    %3283 = vmatprep.subr.mxu0 0.0
    %3284 = vmatpush1.msra.mxu0 %v3254
    %3285 = vmatprep.subr.mxu0 0.0
    %3286 = vmatpush1.msra.mxu0 %v3253
    %3287 = vmatprep.subr.mxu0 0.0
    %3288 = vmatpush1.msra.mxu0 %v3252
    %3289 = vmatprep.subr.mxu0 0.0
    %3290 = vmatpush1.msra.mxu0 %v3251
    %3291 = vmatprep.subr.mxu0 0.0
    %3292 = vmatpush2.msra.mxu0 0.0
    %3293 = vmatprep.subr.mxu0 0.0
    %3294 = vmatpush2.msra.mxu0 0.0
    %3295 = vmatprep.subr.mxu0 0.0
    %3296 = vmatpush2.msra.mxu0 0.0
    %3297 = vmatprep.subr.mxu0 0.0
    %3298 = vmatpush2.msra.mxu0 0.0
    %3299 = vmatprep.subr.mxu0 0.0
    %3300 = vmatpush2.msra.mxu0 0.0
    %3301 = vmatprep.subr.mxu0 0.0
    %3302 = vmatpush2.msra.mxu0 0.0
    %3303 = vmatprep.subr.mxu0 0.0
    %3304 = vmatpush2.msra.mxu0 0.0
    %3305 = vmatprep.subr.mxu0 0.0
    %3306 = vmatpush2.msra.mxu0 0.0
    %3307 = vmatprep.subr.mxu0 0.0
    %3308 = vmatpush2.msra.mxu0 0.0
    %3309 = vmatprep.subr.mxu0 0.0
    %3310 = vmatpush2.msra.mxu0 0.0
    %3311 = vmatprep.subr.mxu0 0.0
    %3312 = vmatpush2.msra.mxu0 0.0
    %3313 = vmatprep.subr.mxu0 0.0
    %3314 = vmatpush2.msra.mxu0 0.0
    %3315 = vmatprep.subr.mxu0 0.0
    %3316 = vmatpush2.msra.mxu0 0.0
    %3317 = vmatprep.subr.mxu0 0.0
    %3318 = vmatpush2.msra.mxu0 0.0
    %3319 = vmatprep.subr.mxu0 0.0
    %3320 = vmatpush2.msra.mxu0 0.0
    %3321 = vmatprep.subr.mxu0 0.0
    %3322 = vmatpush2.msra.mxu0 0.0
    %3323 = vmatprep.mubr.f32.mxu0 0.0
    %3324 = vmatmul.mubr.f32.gmra.mxu0 %v3257
    %v3325 = vpop.f32.mrf.mxu0
    %v3326 = vadd.f32 %v3255, %v3325
    %v3327 = vpop.f32.mrf.mxu0
    %3328 = vdwg.mxu0
    %v3329 = vtanh.pop %v3326
    %vm3330 = vcmask 253952
    %3331 = vst.msk [vmem:[#allocation28] sm:$0x1] %vm3330, %v3329
    %v3333 = vsel %vm292, %v3250, 0
    %3335 = vmatprep.subr.mxu0 0.0
    %3336 = vmatpush1.msra.mxu0 0.0
    %3337 = vmatprep.subr.mxu0 0.0
    %3338 = vmatpush1.msra.mxu0 0.0
    %3339 = vmatprep.subr.mxu0 0.0
    %3340 = vmatpush1.msra.mxu0 0.0
    %3341 = vmatprep.subr.mxu0 0.0
    %3342 = vmatpush1.msra.mxu0 0.0
    %3343 = vmatprep.subr.mxu0 0.0
    %3344 = vmatpush1.msra.mxu0 0.0
    %3345 = vmatprep.subr.mxu0 0.0
    %3346 = vmatpush1.msra.mxu0 0.0
    %3347 = vmatprep.subr.mxu0 0.0
    %3348 = vmatpush1.msra.mxu0 0.0
    %3349 = vmatprep.subr.mxu0 0.0
    %3350 = vmatpush1.msra.mxu0 0.0
    %3351 = vmatprep.subr.mxu0 0.0
    %3352 = vmatpush1.msra.mxu0 0.0
    %3353 = vmatprep.subr.mxu0 0.0
    %3354 = vmatpush1.msra.mxu0 0.0
    %3355 = vmatprep.subr.mxu0 0.0
    %3356 = vmatpush1.msra.mxu0 0.0
    %3357 = vmatprep.subr.mxu0 0.0
    %3358 = vmatpush1.msra.mxu0 0.0
    %3359 = vmatprep.subr.mxu0 0.0
    %3360 = vmatpush1.msra.mxu0 %v3254
    %3361 = vmatprep.subr.mxu0 0.0
    %3362 = vmatpush1.msra.mxu0 %v3253
    %3363 = vmatprep.subr.mxu0 0.0
    %3364 = vmatpush1.msra.mxu0 %v3252
    %3365 = vmatprep.subr.mxu0 0.0
    %3366 = vmatpush1.msra.mxu0 %v3251
    %3367 = vmatprep.subr.mxu0 0.0
    %3368 = vmatpush2.msra.mxu0 0.0
    %3369 = vmatprep.subr.mxu0 0.0
    %3370 = vmatpush2.msra.mxu0 0.0
    %3371 = vmatprep.subr.mxu0 0.0
    %3372 = vmatpush2.msra.mxu0 0.0
    %3373 = vmatprep.subr.mxu0 0.0
    %3374 = vmatpush2.msra.mxu0 0.0
    %3375 = vmatprep.subr.mxu0 0.0
    %3376 = vmatpush2.msra.mxu0 0.0
    %3377 = vmatprep.subr.mxu0 0.0
    %3378 = vmatpush2.msra.mxu0 0.0
    %3379 = vmatprep.subr.mxu0 0.0
    %3380 = vmatpush2.msra.mxu0 0.0
    %3381 = vmatprep.subr.mxu0 0.0
    %3382 = vmatpush2.msra.mxu0 0.0
    %3383 = vmatprep.subr.mxu0 0.0
    %3384 = vmatpush2.msra.mxu0 0.0
    %3385 = vmatprep.subr.mxu0 0.0
    %3386 = vmatpush2.msra.mxu0 0.0
    %3387 = vmatprep.subr.mxu0 0.0
    %3388 = vmatpush2.msra.mxu0 0.0
    %3389 = vmatprep.subr.mxu0 0.0
    %3390 = vmatpush2.msra.mxu0 0.0
    %3391 = vmatprep.subr.mxu0 0.0
    %3392 = vmatpush2.msra.mxu0 0.0
    %3393 = vmatprep.subr.mxu0 0.0
    %3394 = vmatpush2.msra.mxu0 0.0
    %3395 = vmatprep.subr.mxu0 0.0
    %3396 = vmatpush2.msra.mxu0 0.0
    %3397 = vmatprep.subr.mxu0 0.0
    %3398 = vmatpush2.msra.mxu0 0.0
    %3399 = vmatprep.mubr.f32.mxu0 0.0
    %3400 = vmatmul.mubr.f32.gmra.mxu0 %v3333
    %v3401 = vpop.f32.mrf.mxu0
    %v3402 = vadd.f32 %v3255, %v3401
    %v3403 = vpop.f32.mrf.mxu0
    %3404 = vdwg.mxu0
    %v3405 = vtanh.pop %v3402
    %3406 = vst.msk [vmem:[#allocation28 + $0x1] sm:$0x1] %vm3330, %v3405
    // Predicated region
    $region158: #{tpu_custom_call.1} parent=1 // pred_check
      _
    $region159: #{tpu_custom_call.1} parent=1 // pred_check_branch
      %3408 = sbr.rel (0) target = $region161
    $region160: #{tpu_custom_call.1} parent=1 // pred_region
      %s3410 = ssub.s32 32, 32
      %3411 = vsyncadd [#allocation4], %s3410
      %s3413 = sshll.u32 [#allocation28], 4
      %s3414 = int_to_ptr.vmem [resolvable:$true] %s3413
      %3416 = dma.vmem_to_hbm [thread:$0]  %s3414, 32, %s23, [#allocation4]
    $region161: #{tpu_custom_call.1} parent=1 // pred_fallthru
      _
    // Predicated region
    $region162: #{tpu_custom_call.1} parent=1 // pred_check
      _
    $region163: #{tpu_custom_call.1} parent=1 // pred_check_branch
      %3418 = sbr.rel (0) target = $region165
    $region164: #{tpu_custom_call.1} parent=1 // pred_region
      %3419 = dma.done [#allocation4], 32
    $region165: #{tpu_custom_call.1} parent=1 // pred_fallthru
      _
    %3420 = vsyncpa [#allocation3], 1
    %3421 = vsyncpa [#allocation6], 1
    %3422 = vsyncpa [#allocation9], 1
    %3423 = vsyncpa [#allocation12], 1
    %3424 = vsyncpa [#allocation15], 1
    %3425 = vsyncpa [#allocation18], 1
    %3426 = vsyncpa [#allocation21], 1
    %3427 = vsyncpa [#allocation24], 1
    %3428 = vsyncpa [#allocation27], 1
    %3429 = vsyncpa [#allocation4], 1

</llo_original>
